<compile_context>
chip_gen: v7x
topology: tpu7x:2x2x1
jax: 0.10.0
libtpu: 0.0.40
codegen_flags: <defaults>
</compile_context>

<pallas_src>
import functools

import numpy as np
import jax
import jax.numpy as jnp
from jax import lax
from jax.experimental import pallas as pl
from jax.experimental.pallas import tpu as pltpu


# ----------------------------- fused Pallas kernel ---------------------------

def _fused_forward_kernel(vec_ref, cols1_ref,
                          m1w_ref, m1b_ref, m2w_ref, m2b_ref,
                          c1w_ref, c1b_ref,
                          g2_ref, c2w_ref, c2b_ref,
                          f1w_ref, f1b_ref,
                          f2wa_ref, f2wb_ref, f2b_ref,
                          o_ref):
    f32 = jnp.float32
    B = vec_ref.shape[0]
    n1 = cols1_ref.shape[0] // B       # H1*W1  (conv1 output positions / image)
    n2 = f1w_ref.shape[0]              # H2*W2  (conv2 output positions / image)
    c2out = c2w_ref.shape[2]           # 64
    hdim = m1w_ref.shape[1]

    # ---- mlp1: Linear -> ReLU -> Linear (whole batch) ----
    h = jnp.dot(vec_ref[...], m1w_ref[...], preferred_element_type=f32) + m1b_ref[...]
    h = jnp.maximum(h, 0.0)
    state_feat = (jnp.dot(h, m2w_ref[...], preferred_element_type=f32)
                  + m2b_ref[...])                              # [B, hdim]

    # ---- conv1 (3x3, s2, p1, Cin=1) as im2col matmul + bias + ReLU ----
    cols1 = cols1_ref[...]                                     # [B*n1, 9]
    y1_all = (jnp.dot(cols1, c1w_ref[...], preferred_element_type=f32)
              + c1b_ref[...])
    y1_all = jnp.maximum(y1_all, 0.0)                          # [B*n1, 32]

    # ---- conv2 (3x3, s2, p1): in-kernel patch gather + per-tap matmuls ----
    g2 = g2_ref[...]                                           # [9*n2, n1] constant 0/1
    c2b = c2b_ref[...]                                         # [1, 64]
    y2_list = []
    for b in range(B):
        y1_b = y1_all[b * n1:(b + 1) * n1, :]                  # [n1, 32]
        # all 9 taps' patches in one matmul; rows ordered (tap, out_pos)
        patches = jnp.dot(g2, y1_b, preferred_element_type=f32)   # [9*n2, 32]
        acc2 = jnp.zeros((n2, c2out), f32)
        for t in range(9):
            p_t = patches[t * n2:(t + 1) * n2, :]              # [n2, 32]
            acc2 = acc2 + jnp.dot(p_t, c2w_ref[t],
                                  preferred_element_type=f32)  # [n2, 64]
        y2_list.append(jnp.maximum(acc2 + c2b, 0.0))           # [n2, 64]

    # ---- fc1 + ReLU: sum over spatial positions of per-position matmuls ----
    # (NCHW flatten order already folded into f1w at init)
    accf = jnp.zeros((B, hdim), f32)
    for s in range(n2):
        rows = jnp.concatenate([y2_list[b][s:s + 1, :] for b in range(B)],
                               axis=0)                         # [B, 64]
        accf = accf + jnp.dot(rows, f1w_ref[s], preferred_element_type=f32)
    img_feat = jnp.maximum(accf + f1b_ref[...], 0.0)           # [B, hdim]

    # ---- fc2 on concat([state_feat, img_feat]) as two matmuls + ReLU ----
    merged = (jnp.dot(state_feat, f2wa_ref[...], preferred_element_type=f32)
              + jnp.dot(img_feat, f2wb_ref[...], preferred_element_type=f32)
              + f2b_ref[...])
    o_ref[...] = jnp.maximum(merged, 0.0)


def _full_spec(shape):
    # whole array as one block (block == full dims satisfies the (8,128) rule)
    return pl.BlockSpec(shape, lambda i, _n=len(shape): (0,) * _n)


# ------------------------------ JAX glue -------------------------------------

def _im2col_c1(image, k=3, s=2, p=1):
    """image [B, H, W] (single channel) -> conv1 patches [B*Ho*Wo, k*k].
    Rows ordered (b, oi, oj); columns ordered t = kh*k + kw."""
    B, H, W = image.shape
    xp = jnp.pad(image, ((0, 0), (p, p), (p, p)))
    Ho = (H + 2 * p - k) // s + 1
    Wo = (W + 2 * p - k) // s + 1
    taps = [xp[:, kh:kh + s * Ho:s, kw:kw + s * Wo:s]
            for kh in range(k) for kw in range(k)]
    cols = jnp.stack(taps, axis=-1)                  # [B, Ho, Wo, k*k]
    return cols.reshape(B * Ho * Wo, k * k)


def _build_conv_gather(Hin, Win, Hout, Wout, k=3, s=2, p=1):
    """Constant 0/1 matrix G [(k*k*Hout*Wout), Hin*Win]:
    G[t*Hout*Wout + o, i*Win + j] = 1 iff tap t of output position o of a
    kxk / stride-s / pad-p conv reads input position (i, j).
    All-zero rows encode zero padding."""
    G = np.zeros((k * k, Hout * Wout, Hin * Win), np.float32)
    for kh in range(k):
        for kw in range(k):
            t = kh * k + kw
            for oi in range(Hout):
                for oj in range(Wout):
                    i = s * oi + kh - p
                    j = s * oj + kw - p
                    if 0 <= i < Hin and 0 <= j < Win:
                        G[t, oi * Wout + oj, i * Win + j] = 1.0
    return jnp.asarray(G.reshape(k * k * Hout * Wout, Hin * Win))


def prepare_params(pt, image_height, image_width):
    """Convert PyTorch-layout params into kernel-ready layouts, once at init:
    conv weights reshaped for the gather/matmul form, fc1_w permuted so the
    NCHW flatten is folded in, fc2_w pre-split, biases as [1, n] rows."""
    H, W = image_height, image_width
    H1, W1, H2, W2 = H // 2, W // 2, H // 4, W // 4
    hdim = pt["fc2_w"].shape[0]

    def row(b):
        return b.reshape(1, -1)

    # conv1 [32,1,3,3] -> [9, 32], rows ordered t = kh*3+kw
    c1w = jnp.transpose(pt["conv1_w"].reshape(32, 9), (1, 0))
    # conv2 [64,32,3,3] -> [9, 32, 64] indexed [t, cin, cout]
    c2w = jnp.transpose(pt["conv2_w"], (2, 3, 1, 0)).reshape(9, 32, 64)
    # fc1 [h, 64*H2*W2] (NCHW input order c*H2*W2 + s) -> [H2*W2, 64, h]
    f1w = jnp.transpose(pt["fc1_w"], (1, 0)).reshape(64, H2 * W2, hdim)
    f1w = jnp.transpose(f1w, (1, 0, 2))
    # fc2 [h, 2h] -> two [h, h] halves (concat expressed as sum of matmuls)
    f2wa = jnp.transpose(pt["fc2_w"][:, :hdim], (1, 0))
    f2wb = jnp.transpose(pt["fc2_w"][:, hdim:], (1, 0))

    return {
        "mlp1_w1": jnp.transpose(pt["mlp1_w1"], (1, 0)),
        "mlp1_b1": row(pt["mlp1_b1"]),
        "mlp1_w2": jnp.transpose(pt["mlp1_w2"], (1, 0)),
        "mlp1_b2": row(pt["mlp1_b2"]),
        "conv1_w": c1w, "conv1_b": row(pt["conv1_b"]),
        "gather2": _build_conv_gather(H1, W1, H2, W2),
        "conv2_w": c2w, "conv2_b": row(pt["conv2_b"]),
        "fc1_w": f1w, "fc1_b": row(pt["fc1_b"]),
        "fc2_wa": f2wa, "fc2_wb": f2wb, "fc2_b": row(pt["fc2_b"]),
    }


def multimodal_forward(state, kp, image_height, image_width):
    """Fused forward: one pallas_call, all weights/intermediates VMEM-resident."""
    B = state.shape[0]
    H, W = image_height, image_width
    hdim = kp["mlp1_w1"].shape[1]
    H2, W2 = H // 4, W // 4

    vec_state = state[:, :38]
    image = state[:, 38:].reshape(B, H, W)          # Cin=1: no transpose needed

    # conv1 im2col: pure input formatting of the HBM input (fused by XLA).
    cols1 = _im2col_c1(image)                        # [B*(H//2)*(W//2), 9]

    args = (vec_state, cols1,
            kp["mlp1_w1"], kp["mlp1_b1"], kp["mlp1_w2"], kp["mlp1_b2"],
            kp["conv1_w"], kp["conv1_b"],
            kp["gather2"], kp["conv2_w"], kp["conv2_b"],
            kp["fc1_w"], kp["fc1_b"],
            kp["fc2_wa"], kp["fc2_wb"], kp["fc2_b"])

    n_g = kp["gather2"].shape
    flops = int(2 * (B * 38 * hdim + B * hdim * hdim            # mlp1
                     + cols1.shape[0] * 9 * 32                   # conv1
                     + B * n_g[0] * n_g[1] * 32                  # conv2 gather
                     + B * 9 * H2 * W2 * 32 * 64                 # conv2 weights
                     + B * 64 * H2 * W2 * hdim                   # fc1
                     + 2 * B * hdim * hdim))                     # fc2
    bytes_accessed = int(sum(int(np.prod(a.shape)) * 4 for a in args)
                         + B * hdim * 4)

    return pl.pallas_call(
        _fused_forward_kernel,
        out_shape=jax.ShapeDtypeStruct((B, hdim), jnp.float32),
        grid=(1,),
        in_specs=[_full_spec(a.shape) for a in args],
        out_specs=_full_spec((B, hdim)),
        compiler_params=pltpu.CompilerParams(
            dimension_semantics=("arbitrary",)),
        cost_estimate=pl.CostEstimate(flops=flops, transcendentals=0,
                                      bytes_accessed=bytes_accessed),
    )(*args)


# ----------------------- reference (plain JAX, PyTorch layout) ---------------

def multimodal_forward_ref(state, pt, image_height, image_width):
    B = state.shape[0]
    H, W = image_height, image_width
    vec = state[:, :38]
    sf = jnp.maximum(vec @ pt["mlp1_w1"].T + pt["mlp1_b1"], 0.0)
    sf = sf @ pt["mlp1_w2"].T + pt["mlp1_b2"]

    img = state[:, 38:].reshape(B, 1, H, W)
    y1 = lax.conv_general_dilated(img, pt["conv1_w"], (2, 2), ((1, 1), (1, 1)),
                                  dimension_numbers=("NCHW", "OIHW", "NCHW"))
    y1 = jnp.maximum(y1 + pt["conv1_b"].reshape(1, -1, 1, 1), 0.0)
    y2 = lax.conv_general_dilated(y1, pt["conv2_w"], (2, 2), ((1, 1), (1, 1)),
                                  dimension_numbers=("NCHW", "OIHW", "NCHW"))
    y2 = jnp.maximum(y2 + pt["conv2_b"].reshape(1, -1, 1, 1), 0.0)

    flat = y2.reshape(B, -1)                         # PyTorch .view(B, -1) on NCHW
    imf = jnp.maximum(flat @ pt["fc1_w"].T + pt["fc1_b"], 0.0)
    merged = jnp.concatenate([sf, imf], axis=-1)
    return jnp.maximum(merged @ pt["fc2_w"].T + pt["fc2_b"], 0.0)


# ------------------------------ param init -----------------------------------

def init_params_pt(key, image_height, image_width, hidden_dim):
    """Params in PyTorch layouts: Linear [out,in] (+[out] bias), conv [O,I,3,3]."""
    H, W = image_height, image_width
    vec_dim = 38
    keys = jax.random.split(key, 12)

    def nrm(k, shape, scale=0.05):
        return (scale * jax.random.normal(k, shape)).astype(jnp.float32)

    return {
        "mlp1_w1": nrm(keys[0], (hidden_dim, vec_dim)),
        "mlp1_b1": nrm(keys[1], (hidden_dim,)),
        "mlp1_w2": nrm(keys[2], (hidden_dim, hidden_dim)),
        "mlp1_b2": nrm(keys[3], (hidden_dim,)),
        "conv1_w": nrm(keys[4], (32, 1, 3, 3)),
        "conv1_b": nrm(keys[5], (32,)),
        "conv2_w": nrm(keys[6], (64, 32, 3, 3)),
        "conv2_b": nrm(keys[7], (64,)),
        "fc1_w": nrm(keys[8], (hidden_dim, 64 * (H // 4) * (W // 4))),
        "fc1_b": nrm(keys[9], (hidden_dim,)),
        "fc2_w": nrm(keys[10], (hidden_dim, 2 * hidden_dim)),
        "fc2_b": nrm(keys[11], (hidden_dim,)),
    }


# --------------------------------- main ---------------------------------------

if __name__ == "__main__":
    # Small shapes: B=2, 16x16 single-channel image, hidden=32.
    # state_dim = 38 + 16*16 = 294 (forward slices the first 38 as vec state).
    B, H, W, HIDDEN = 2, 16, 16, 32
    STATE_DIM = 38 + H * W

    key = jax.random.PRNGKey(0)
    k_state, k_params = jax.random.split(key)
    state = jax.random.normal(k_state, (B, STATE_DIM), dtype=jnp.float32)

    pt_params = init_params_pt(k_params, H, W, HIDDEN)
    kparams = prepare_params(pt_params, H, W)       # one-time layout conversion

    fwd = jax.jit(functools.partial(multimodal_forward,
                                    image_height=H, image_width=W))
    out = jax.block_until_ready(fwd(state, kparams))

    ref = jax.block_until_ready(multimodal_forward_ref(state, pt_params, H, W))
    assert out.shape == (B, HIDDEN)
    assert jnp.allclose(out, ref, atol=1e-3, rtol=1e-3), "mismatch vs reference"

    print("KERNEL_OK")
</pallas_src>

<mosaic_0001>
module attributes {stable_mosaic.version = 11 : i64} {
  func.func @_fused_forward_kernel(%arg0: i32, %arg1: memref<2x38xf32, #tpu.memory_space<vmem>>, %arg2: memref<128x9xf32, #tpu.memory_space<vmem>>, %arg3: memref<38x32xf32, #tpu.memory_space<vmem>>, %arg4: memref<1x32xf32, #tpu.memory_space<vmem>>, %arg5: memref<32x32xf32, #tpu.memory_space<vmem>>, %arg6: memref<1x32xf32, #tpu.memory_space<vmem>>, %arg7: memref<9x32xf32, #tpu.memory_space<vmem>>, %arg8: memref<1x32xf32, #tpu.memory_space<vmem>>, %arg9: memref<144x64xf32, #tpu.memory_space<vmem>>, %arg10: memref<9x32x64xf32, #tpu.memory_space<vmem>>, %arg11: memref<1x64xf32, #tpu.memory_space<vmem>>, %arg12: memref<16x64x32xf32, #tpu.memory_space<vmem>>, %arg13: memref<1x32xf32, #tpu.memory_space<vmem>>, %arg14: memref<32x32xf32, #tpu.memory_space<vmem>>, %arg15: memref<32x32xf32, #tpu.memory_space<vmem>>, %arg16: memref<1x32xf32, #tpu.memory_space<vmem>>, %arg17: memref<2x32xf32, #tpu.memory_space<vmem>>) attributes {dimension_semantics = [#tpu.dimension_semantics<arbitrary>], iteration_bounds = array<i64: 1>, scalar_prefetch = 0 : i64, scratch_operands = 0 : i64, tpu.core_type = #tpu.core_type<tc>, window_params = [{pipeline_mode = #tpu.pipeline_mode<synchronous>, transform_indices = @transform_0, window_bounds = array<i64: 2, 38>}, {pipeline_mode = #tpu.pipeline_mode<synchronous>, transform_indices = @transform_1, window_bounds = array<i64: 128, 9>}, {pipeline_mode = #tpu.pipeline_mode<synchronous>, transform_indices = @transform_2, window_bounds = array<i64: 38, 32>}, {pipeline_mode = #tpu.pipeline_mode<synchronous>, transform_indices = @transform_3, window_bounds = array<i64: 1, 32>}, {pipeline_mode = #tpu.pipeline_mode<synchronous>, transform_indices = @transform_4, window_bounds = array<i64: 32, 32>}, {pipeline_mode = #tpu.pipeline_mode<synchronous>, transform_indices = @transform_5, window_bounds = array<i64: 1, 32>}, {pipeline_mode = #tpu.pipeline_mode<synchronous>, transform_indices = @transform_6, window_bounds = array<i64: 9, 32>}, {pipeline_mode = #tpu.pipeline_mode<synchronous>, transform_indices = @transform_7, window_bounds = array<i64: 1, 32>}, {pipeline_mode = #tpu.pipeline_mode<synchronous>, transform_indices = @transform_8, window_bounds = array<i64: 144, 64>}, {pipeline_mode = #tpu.pipeline_mode<synchronous>, transform_indices = @transform_9, window_bounds = array<i64: 9, 32, 64>}, {pipeline_mode = #tpu.pipeline_mode<synchronous>, transform_indices = @transform_10, window_bounds = array<i64: 1, 64>}, {pipeline_mode = #tpu.pipeline_mode<synchronous>, transform_indices = @transform_11, window_bounds = array<i64: 16, 64, 32>}, {pipeline_mode = #tpu.pipeline_mode<synchronous>, transform_indices = @transform_12, window_bounds = array<i64: 1, 32>}, {pipeline_mode = #tpu.pipeline_mode<synchronous>, transform_indices = @transform_13, window_bounds = array<i64: 32, 32>}, {pipeline_mode = #tpu.pipeline_mode<synchronous>, transform_indices = @transform_14, window_bounds = array<i64: 32, 32>}, {pipeline_mode = #tpu.pipeline_mode<synchronous>, transform_indices = @transform_15, window_bounds = array<i64: 1, 32>}, {pipeline_mode = #tpu.pipeline_mode<synchronous>, transform_indices = @transform_16, window_bounds = array<i64: 2, 32>}]} {
    %c0 = arith.constant 0 : index
    %c0_0 = arith.constant 0 : index
    %0 = vector.load %arg1[%c0, %c0_0] : memref<2x38xf32, #tpu.memory_space<vmem>>, vector<2x38xf32>
    %c0_1 = arith.constant 0 : index
    %c0_2 = arith.constant 0 : index
    %1 = vector.load %arg3[%c0_1, %c0_2] : memref<38x32xf32, #tpu.memory_space<vmem>>, vector<38x32xf32>
    %cst = arith.constant dense<0.000000e+00> : vector<2x32xf32>
    %2 = tpu.matmul %0, %1, %cst {dimension_numbers = #tpu.dot_dimension_numbers<[1], [0], [0], [1], [0, 0, 1, 1], [], []>} : vector<2x38xf32>, vector<38x32xf32>, vector<2x32xf32> -> vector<2x32xf32>
    %c0_3 = arith.constant 0 : index
    %c0_4 = arith.constant 0 : index
    %3 = vector.load %arg4[%c0_3, %c0_4] : memref<1x32xf32, #tpu.memory_space<vmem>>, vector<1x32xf32>
    %4 = vector.broadcast %3 : vector<1x32xf32> to vector<2x32xf32>
    %5 = arith.addf %2, %4 : vector<2x32xf32>
    %cst_5 = arith.constant 0.000000e+00 : f32
    %6 = vector.broadcast %cst_5 : f32 to vector<2x32xf32>
    %7 = arith.maximumf %5, %6 : vector<2x32xf32>
    %c0_6 = arith.constant 0 : index
    %c0_7 = arith.constant 0 : index
    %8 = vector.load %arg5[%c0_6, %c0_7] : memref<32x32xf32, #tpu.memory_space<vmem>>, vector<32x32xf32>
    %cst_8 = arith.constant dense<0.000000e+00> : vector<2x32xf32>
    %9 = tpu.matmul %7, %8, %cst_8 {dimension_numbers = #tpu.dot_dimension_numbers<[1], [0], [0], [1], [0, 0, 1, 1], [], []>} : vector<2x32xf32>, vector<32x32xf32>, vector<2x32xf32> -> vector<2x32xf32>
    %c0_9 = arith.constant 0 : index
    %c0_10 = arith.constant 0 : index
    %10 = vector.load %arg6[%c0_9, %c0_10] : memref<1x32xf32, #tpu.memory_space<vmem>>, vector<1x32xf32>
    %11 = vector.broadcast %10 : vector<1x32xf32> to vector<2x32xf32>
    %12 = arith.addf %9, %11 : vector<2x32xf32>
    %c0_11 = arith.constant 0 : index
    %c0_12 = arith.constant 0 : index
    %13 = vector.load %arg2[%c0_11, %c0_12] : memref<128x9xf32, #tpu.memory_space<vmem>>, vector<128x9xf32>
    %c0_13 = arith.constant 0 : index
    %c0_14 = arith.constant 0 : index
    %14 = vector.load %arg7[%c0_13, %c0_14] : memref<9x32xf32, #tpu.memory_space<vmem>>, vector<9x32xf32>
    %cst_15 = arith.constant dense<0.000000e+00> : vector<128x32xf32>
    %15 = tpu.matmul %13, %14, %cst_15 {dimension_numbers = #tpu.dot_dimension_numbers<[1], [0], [0], [1], [0, 0, 1, 1], [], []>} : vector<128x9xf32>, vector<9x32xf32>, vector<128x32xf32> -> vector<128x32xf32>
    %c0_16 = arith.constant 0 : index
    %c0_17 = arith.constant 0 : index
    %16 = vector.load %arg8[%c0_16, %c0_17] : memref<1x32xf32, #tpu.memory_space<vmem>>, vector<1x32xf32>
    %17 = vector.broadcast %16 : vector<1x32xf32> to vector<128x32xf32>
    %18 = arith.addf %15, %17 : vector<128x32xf32>
    %cst_18 = arith.constant 0.000000e+00 : f32
    %19 = vector.broadcast %cst_18 : f32 to vector<128x32xf32>
    %20 = arith.maximumf %18, %19 : vector<128x32xf32>
    %c0_19 = arith.constant 0 : index
    %c0_20 = arith.constant 0 : index
    %21 = vector.load %arg9[%c0_19, %c0_20] : memref<144x64xf32, #tpu.memory_space<vmem>>, vector<144x64xf32>
    %c0_21 = arith.constant 0 : index
    %c0_22 = arith.constant 0 : index
    %22 = vector.load %arg11[%c0_21, %c0_22] : memref<1x64xf32, #tpu.memory_space<vmem>>, vector<1x64xf32>
    %23 = vector.extract_strided_slice %20 {offsets = [0, 0], sizes = [64, 32], strides = [1, 1]} : vector<128x32xf32> to vector<64x32xf32>
    %cst_23 = arith.constant dense<0.000000e+00> : vector<144x32xf32>
    %24 = tpu.matmul %21, %23, %cst_23 {dimension_numbers = #tpu.dot_dimension_numbers<[1], [0], [0], [1], [0, 0, 1, 1], [], []>} : vector<144x64xf32>, vector<64x32xf32>, vector<144x32xf32> -> vector<144x32xf32>
    %cst_24 = arith.constant 0.000000e+00 : f32
    %25 = vector.broadcast %cst_24 : f32 to vector<16x64xf32>
    %26 = vector.extract_strided_slice %24 {offsets = [0, 0], sizes = [16, 32], strides = [1, 1]} : vector<144x32xf32> to vector<16x32xf32>
    %c0_25 = arith.constant 0 : index
    %c0_26 = arith.constant 0 : index
    %c0_27 = arith.constant 0 : index
    %27 = vector.load %arg10[%c0_25, %c0_26, %c0_27] : memref<9x32x64xf32, #tpu.memory_space<vmem>>, vector<1x32x64xf32>
    %28 = vector.shape_cast %27 : vector<1x32x64xf32> to vector<32x64xf32>
    %cst_28 = arith.constant dense<0.000000e+00> : vector<16x64xf32>
    %29 = tpu.matmul %26, %28, %cst_28 {dimension_numbers = #tpu.dot_dimension_numbers<[1], [0], [0], [1], [0, 0, 1, 1], [], []>} : vector<16x32xf32>, vector<32x64xf32>, vector<16x64xf32> -> vector<16x64xf32>
    %30 = arith.addf %25, %29 : vector<16x64xf32>
    %31 = vector.extract_strided_slice %24 {offsets = [16, 0], sizes = [16, 32], strides = [1, 1]} : vector<144x32xf32> to vector<16x32xf32>
    %c1 = arith.constant 1 : index
    %c0_29 = arith.constant 0 : index
    %c0_30 = arith.constant 0 : index
    %32 = vector.load %arg10[%c1, %c0_29, %c0_30] : memref<9x32x64xf32, #tpu.memory_space<vmem>>, vector<1x32x64xf32>
    %33 = vector.shape_cast %32 : vector<1x32x64xf32> to vector<32x64xf32>
    %cst_31 = arith.constant dense<0.000000e+00> : vector<16x64xf32>
    %34 = tpu.matmul %31, %33, %cst_31 {dimension_numbers = #tpu.dot_dimension_numbers<[1], [0], [0], [1], [0, 0, 1, 1], [], []>} : vector<16x32xf32>, vector<32x64xf32>, vector<16x64xf32> -> vector<16x64xf32>
    %35 = arith.addf %30, %34 : vector<16x64xf32>
    %36 = vector.extract_strided_slice %24 {offsets = [32, 0], sizes = [16, 32], strides = [1, 1]} : vector<144x32xf32> to vector<16x32xf32>
    %c2 = arith.constant 2 : index
    %c0_32 = arith.constant 0 : index
    %c0_33 = arith.constant 0 : index
    %37 = vector.load %arg10[%c2, %c0_32, %c0_33] : memref<9x32x64xf32, #tpu.memory_space<vmem>>, vector<1x32x64xf32>
    %38 = vector.shape_cast %37 : vector<1x32x64xf32> to vector<32x64xf32>
    %cst_34 = arith.constant dense<0.000000e+00> : vector<16x64xf32>
    %39 = tpu.matmul %36, %38, %cst_34 {dimension_numbers = #tpu.dot_dimension_numbers<[1], [0], [0], [1], [0, 0, 1, 1], [], []>} : vector<16x32xf32>, vector<32x64xf32>, vector<16x64xf32> -> vector<16x64xf32>
    %40 = arith.addf %35, %39 : vector<16x64xf32>
    %41 = vector.extract_strided_slice %24 {offsets = [48, 0], sizes = [16, 32], strides = [1, 1]} : vector<144x32xf32> to vector<16x32xf32>
    %c3 = arith.constant 3 : index
    %c0_35 = arith.constant 0 : index
    %c0_36 = arith.constant 0 : index
    %42 = vector.load %arg10[%c3, %c0_35, %c0_36] : memref<9x32x64xf32, #tpu.memory_space<vmem>>, vector<1x32x64xf32>
    %43 = vector.shape_cast %42 : vector<1x32x64xf32> to vector<32x64xf32>
    %cst_37 = arith.constant dense<0.000000e+00> : vector<16x64xf32>
    %44 = tpu.matmul %41, %43, %cst_37 {dimension_numbers = #tpu.dot_dimension_numbers<[1], [0], [0], [1], [0, 0, 1, 1], [], []>} : vector<16x32xf32>, vector<32x64xf32>, vector<16x64xf32> -> vector<16x64xf32>
    %45 = arith.addf %40, %44 : vector<16x64xf32>
    %46 = vector.extract_strided_slice %24 {offsets = [64, 0], sizes = [16, 32], strides = [1, 1]} : vector<144x32xf32> to vector<16x32xf32>
    %c4 = arith.constant 4 : index
    %c0_38 = arith.constant 0 : index
    %c0_39 = arith.constant 0 : index
    %47 = vector.load %arg10[%c4, %c0_38, %c0_39] : memref<9x32x64xf32, #tpu.memory_space<vmem>>, vector<1x32x64xf32>
    %48 = vector.shape_cast %47 : vector<1x32x64xf32> to vector<32x64xf32>
    %cst_40 = arith.constant dense<0.000000e+00> : vector<16x64xf32>
    %49 = tpu.matmul %46, %48, %cst_40 {dimension_numbers = #tpu.dot_dimension_numbers<[1], [0], [0], [1], [0, 0, 1, 1], [], []>} : vector<16x32xf32>, vector<32x64xf32>, vector<16x64xf32> -> vector<16x64xf32>
    %50 = arith.addf %45, %49 : vector<16x64xf32>
    %51 = vector.extract_strided_slice %24 {offsets = [80, 0], sizes = [16, 32], strides = [1, 1]} : vector<144x32xf32> to vector<16x32xf32>
    %c5 = arith.constant 5 : index
    %c0_41 = arith.constant 0 : index
    %c0_42 = arith.constant 0 : index
    %52 = vector.load %arg10[%c5, %c0_41, %c0_42] : memref<9x32x64xf32, #tpu.memory_space<vmem>>, vector<1x32x64xf32>
    %53 = vector.shape_cast %52 : vector<1x32x64xf32> to vector<32x64xf32>
    %cst_43 = arith.constant dense<0.000000e+00> : vector<16x64xf32>
    %54 = tpu.matmul %51, %53, %cst_43 {dimension_numbers = #tpu.dot_dimension_numbers<[1], [0], [0], [1], [0, 0, 1, 1], [], []>} : vector<16x32xf32>, vector<32x64xf32>, vector<16x64xf32> -> vector<16x64xf32>
    %55 = arith.addf %50, %54 : vector<16x64xf32>
    %56 = vector.extract_strided_slice %24 {offsets = [96, 0], sizes = [16, 32], strides = [1, 1]} : vector<144x32xf32> to vector<16x32xf32>
    %c6 = arith.constant 6 : index
    %c0_44 = arith.constant 0 : index
    %c0_45 = arith.constant 0 : index
    %57 = vector.load %arg10[%c6, %c0_44, %c0_45] : memref<9x32x64xf32, #tpu.memory_space<vmem>>, vector<1x32x64xf32>
    %58 = vector.shape_cast %57 : vector<1x32x64xf32> to vector<32x64xf32>
    %cst_46 = arith.constant dense<0.000000e+00> : vector<16x64xf32>
    %59 = tpu.matmul %56, %58, %cst_46 {dimension_numbers = #tpu.dot_dimension_numbers<[1], [0], [0], [1], [0, 0, 1, 1], [], []>} : vector<16x32xf32>, vector<32x64xf32>, vector<16x64xf32> -> vector<16x64xf32>
    %60 = arith.addf %55, %59 : vector<16x64xf32>
    %61 = vector.extract_strided_slice %24 {offsets = [112, 0], sizes = [16, 32], strides = [1, 1]} : vector<144x32xf32> to vector<16x32xf32>
    %c7 = arith.constant 7 : index
    %c0_47 = arith.constant 0 : index
    %c0_48 = arith.constant 0 : index
    %62 = vector.load %arg10[%c7, %c0_47, %c0_48] : memref<9x32x64xf32, #tpu.memory_space<vmem>>, vector<1x32x64xf32>
    %63 = vector.shape_cast %62 : vector<1x32x64xf32> to vector<32x64xf32>
    %cst_49 = arith.constant dense<0.000000e+00> : vector<16x64xf32>
    %64 = tpu.matmul %61, %63, %cst_49 {dimension_numbers = #tpu.dot_dimension_numbers<[1], [0], [0], [1], [0, 0, 1, 1], [], []>} : vector<16x32xf32>, vector<32x64xf32>, vector<16x64xf32> -> vector<16x64xf32>
    %65 = arith.addf %60, %64 : vector<16x64xf32>
    %66 = vector.extract_strided_slice %24 {offsets = [128, 0], sizes = [16, 32], strides = [1, 1]} : vector<144x32xf32> to vector<16x32xf32>
    %c8 = arith.constant 8 : index
    %c0_50 = arith.constant 0 : index
    %c0_51 = arith.constant 0 : index
    %67 = vector.load %arg10[%c8, %c0_50, %c0_51] : memref<9x32x64xf32, #tpu.memory_space<vmem>>, vector<1x32x64xf32>
    %68 = vector.shape_cast %67 : vector<1x32x64xf32> to vector<32x64xf32>
    %cst_52 = arith.constant dense<0.000000e+00> : vector<16x64xf32>
    %69 = tpu.matmul %66, %68, %cst_52 {dimension_numbers = #tpu.dot_dimension_numbers<[1], [0], [0], [1], [0, 0, 1, 1], [], []>} : vector<16x32xf32>, vector<32x64xf32>, vector<16x64xf32> -> vector<16x64xf32>
    %70 = arith.addf %65, %69 : vector<16x64xf32>
    %71 = vector.broadcast %22 : vector<1x64xf32> to vector<16x64xf32>
    %72 = arith.addf %70, %71 : vector<16x64xf32>
    %cst_53 = arith.constant 0.000000e+00 : f32
    %73 = vector.broadcast %cst_53 : f32 to vector<16x64xf32>
    %74 = arith.maximumf %72, %73 : vector<16x64xf32>
    %75 = vector.extract_strided_slice %20 {offsets = [64, 0], sizes = [64, 32], strides = [1, 1]} : vector<128x32xf32> to vector<64x32xf32>
    %cst_54 = arith.constant dense<0.000000e+00> : vector<144x32xf32>
    %76 = tpu.matmul %21, %75, %cst_54 {dimension_numbers = #tpu.dot_dimension_numbers<[1], [0], [0], [1], [0, 0, 1, 1], [], []>} : vector<144x64xf32>, vector<64x32xf32>, vector<144x32xf32> -> vector<144x32xf32>
    %cst_55 = arith.constant 0.000000e+00 : f32
    %77 = vector.broadcast %cst_55 : f32 to vector<16x64xf32>
    %78 = vector.extract_strided_slice %76 {offsets = [0, 0], sizes = [16, 32], strides = [1, 1]} : vector<144x32xf32> to vector<16x32xf32>
    %c0_56 = arith.constant 0 : index
    %c0_57 = arith.constant 0 : index
    %c0_58 = arith.constant 0 : index
    %79 = vector.load %arg10[%c0_56, %c0_57, %c0_58] : memref<9x32x64xf32, #tpu.memory_space<vmem>>, vector<1x32x64xf32>
    %80 = vector.shape_cast %79 : vector<1x32x64xf32> to vector<32x64xf32>
    %cst_59 = arith.constant dense<0.000000e+00> : vector<16x64xf32>
    %81 = tpu.matmul %78, %80, %cst_59 {dimension_numbers = #tpu.dot_dimension_numbers<[1], [0], [0], [1], [0, 0, 1, 1], [], []>} : vector<16x32xf32>, vector<32x64xf32>, vector<16x64xf32> -> vector<16x64xf32>
    %82 = arith.addf %77, %81 : vector<16x64xf32>
    %83 = vector.extract_strided_slice %76 {offsets = [16, 0], sizes = [16, 32], strides = [1, 1]} : vector<144x32xf32> to vector<16x32xf32>
    %c1_60 = arith.constant 1 : index
    %c0_61 = arith.constant 0 : index
    %c0_62 = arith.constant 0 : index
    %84 = vector.load %arg10[%c1_60, %c0_61, %c0_62] : memref<9x32x64xf32, #tpu.memory_space<vmem>>, vector<1x32x64xf32>
    %85 = vector.shape_cast %84 : vector<1x32x64xf32> to vector<32x64xf32>
    %cst_63 = arith.constant dense<0.000000e+00> : vector<16x64xf32>
    %86 = tpu.matmul %83, %85, %cst_63 {dimension_numbers = #tpu.dot_dimension_numbers<[1], [0], [0], [1], [0, 0, 1, 1], [], []>} : vector<16x32xf32>, vector<32x64xf32>, vector<16x64xf32> -> vector<16x64xf32>
    %87 = arith.addf %82, %86 : vector<16x64xf32>
    %88 = vector.extract_strided_slice %76 {offsets = [32, 0], sizes = [16, 32], strides = [1, 1]} : vector<144x32xf32> to vector<16x32xf32>
    %c2_64 = arith.constant 2 : index
    %c0_65 = arith.constant 0 : index
    %c0_66 = arith.constant 0 : index
    %89 = vector.load %arg10[%c2_64, %c0_65, %c0_66] : memref<9x32x64xf32, #tpu.memory_space<vmem>>, vector<1x32x64xf32>
    %90 = vector.shape_cast %89 : vector<1x32x64xf32> to vector<32x64xf32>
    %cst_67 = arith.constant dense<0.000000e+00> : vector<16x64xf32>
    %91 = tpu.matmul %88, %90, %cst_67 {dimension_numbers = #tpu.dot_dimension_numbers<[1], [0], [0], [1], [0, 0, 1, 1], [], []>} : vector<16x32xf32>, vector<32x64xf32>, vector<16x64xf32> -> vector<16x64xf32>
    %92 = arith.addf %87, %91 : vector<16x64xf32>
    %93 = vector.extract_strided_slice %76 {offsets = [48, 0], sizes = [16, 32], strides = [1, 1]} : vector<144x32xf32> to vector<16x32xf32>
    %c3_68 = arith.constant 3 : index
    %c0_69 = arith.constant 0 : index
    %c0_70 = arith.constant 0 : index
    %94 = vector.load %arg10[%c3_68, %c0_69, %c0_70] : memref<9x32x64xf32, #tpu.memory_space<vmem>>, vector<1x32x64xf32>
    %95 = vector.shape_cast %94 : vector<1x32x64xf32> to vector<32x64xf32>
    %cst_71 = arith.constant dense<0.000000e+00> : vector<16x64xf32>
    %96 = tpu.matmul %93, %95, %cst_71 {dimension_numbers = #tpu.dot_dimension_numbers<[1], [0], [0], [1], [0, 0, 1, 1], [], []>} : vector<16x32xf32>, vector<32x64xf32>, vector<16x64xf32> -> vector<16x64xf32>
    %97 = arith.addf %92, %96 : vector<16x64xf32>
    %98 = vector.extract_strided_slice %76 {offsets = [64, 0], sizes = [16, 32], strides = [1, 1]} : vector<144x32xf32> to vector<16x32xf32>
    %c4_72 = arith.constant 4 : index
    %c0_73 = arith.constant 0 : index
    %c0_74 = arith.constant 0 : index
    %99 = vector.load %arg10[%c4_72, %c0_73, %c0_74] : memref<9x32x64xf32, #tpu.memory_space<vmem>>, vector<1x32x64xf32>
    %100 = vector.shape_cast %99 : vector<1x32x64xf32> to vector<32x64xf32>
    %cst_75 = arith.constant dense<0.000000e+00> : vector<16x64xf32>
    %101 = tpu.matmul %98, %100, %cst_75 {dimension_numbers = #tpu.dot_dimension_numbers<[1], [0], [0], [1], [0, 0, 1, 1], [], []>} : vector<16x32xf32>, vector<32x64xf32>, vector<16x64xf32> -> vector<16x64xf32>
    %102 = arith.addf %97, %101 : vector<16x64xf32>
    %103 = vector.extract_strided_slice %76 {offsets = [80, 0], sizes = [16, 32], strides = [1, 1]} : vector<144x32xf32> to vector<16x32xf32>
    %c5_76 = arith.constant 5 : index
    %c0_77 = arith.constant 0 : index
    %c0_78 = arith.constant 0 : index
    %104 = vector.load %arg10[%c5_76, %c0_77, %c0_78] : memref<9x32x64xf32, #tpu.memory_space<vmem>>, vector<1x32x64xf32>
    %105 = vector.shape_cast %104 : vector<1x32x64xf32> to vector<32x64xf32>
    %cst_79 = arith.constant dense<0.000000e+00> : vector<16x64xf32>
    %106 = tpu.matmul %103, %105, %cst_79 {dimension_numbers = #tpu.dot_dimension_numbers<[1], [0], [0], [1], [0, 0, 1, 1], [], []>} : vector<16x32xf32>, vector<32x64xf32>, vector<16x64xf32> -> vector<16x64xf32>
    %107 = arith.addf %102, %106 : vector<16x64xf32>
    %108 = vector.extract_strided_slice %76 {offsets = [96, 0], sizes = [16, 32], strides = [1, 1]} : vector<144x32xf32> to vector<16x32xf32>
    %c6_80 = arith.constant 6 : index
    %c0_81 = arith.constant 0 : index
    %c0_82 = arith.constant 0 : index
    %109 = vector.load %arg10[%c6_80, %c0_81, %c0_82] : memref<9x32x64xf32, #tpu.memory_space<vmem>>, vector<1x32x64xf32>
    %110 = vector.shape_cast %109 : vector<1x32x64xf32> to vector<32x64xf32>
    %cst_83 = arith.constant dense<0.000000e+00> : vector<16x64xf32>
    %111 = tpu.matmul %108, %110, %cst_83 {dimension_numbers = #tpu.dot_dimension_numbers<[1], [0], [0], [1], [0, 0, 1, 1], [], []>} : vector<16x32xf32>, vector<32x64xf32>, vector<16x64xf32> -> vector<16x64xf32>
    %112 = arith.addf %107, %111 : vector<16x64xf32>
    %113 = vector.extract_strided_slice %76 {offsets = [112, 0], sizes = [16, 32], strides = [1, 1]} : vector<144x32xf32> to vector<16x32xf32>
    %c7_84 = arith.constant 7 : index
    %c0_85 = arith.constant 0 : index
    %c0_86 = arith.constant 0 : index
    %114 = vector.load %arg10[%c7_84, %c0_85, %c0_86] : memref<9x32x64xf32, #tpu.memory_space<vmem>>, vector<1x32x64xf32>
    %115 = vector.shape_cast %114 : vector<1x32x64xf32> to vector<32x64xf32>
    %cst_87 = arith.constant dense<0.000000e+00> : vector<16x64xf32>
    %116 = tpu.matmul %113, %115, %cst_87 {dimension_numbers = #tpu.dot_dimension_numbers<[1], [0], [0], [1], [0, 0, 1, 1], [], []>} : vector<16x32xf32>, vector<32x64xf32>, vector<16x64xf32> -> vector<16x64xf32>
    %117 = arith.addf %112, %116 : vector<16x64xf32>
    %118 = vector.extract_strided_slice %76 {offsets = [128, 0], sizes = [16, 32], strides = [1, 1]} : vector<144x32xf32> to vector<16x32xf32>
    %c8_88 = arith.constant 8 : index
    %c0_89 = arith.constant 0 : index
    %c0_90 = arith.constant 0 : index
    %119 = vector.load %arg10[%c8_88, %c0_89, %c0_90] : memref<9x32x64xf32, #tpu.memory_space<vmem>>, vector<1x32x64xf32>
    %120 = vector.shape_cast %119 : vector<1x32x64xf32> to vector<32x64xf32>
    %cst_91 = arith.constant dense<0.000000e+00> : vector<16x64xf32>
    %121 = tpu.matmul %118, %120, %cst_91 {dimension_numbers = #tpu.dot_dimension_numbers<[1], [0], [0], [1], [0, 0, 1, 1], [], []>} : vector<16x32xf32>, vector<32x64xf32>, vector<16x64xf32> -> vector<16x64xf32>
    %122 = arith.addf %117, %121 : vector<16x64xf32>
    %123 = vector.broadcast %22 : vector<1x64xf32> to vector<16x64xf32>
    %124 = arith.addf %122, %123 : vector<16x64xf32>
    %cst_92 = arith.constant 0.000000e+00 : f32
    %125 = vector.broadcast %cst_92 : f32 to vector<16x64xf32>
    %126 = arith.maximumf %124, %125 : vector<16x64xf32>
    %cst_93 = arith.constant 0.000000e+00 : f32
    %127 = vector.broadcast %cst_93 : f32 to vector<2x32xf32>
    %128 = vector.extract_strided_slice %74 {offsets = [0, 0], sizes = [1, 64], strides = [1, 1]} : vector<16x64xf32> to vector<1x64xf32>
    %129 = vector.extract_strided_slice %126 {offsets = [0, 0], sizes = [1, 64], strides = [1, 1]} : vector<16x64xf32> to vector<1x64xf32>
    %130 = tpu.concatenate %128, %129 in 0 : vector<1x64xf32>, vector<1x64xf32> -> vector<2x64xf32>
    %c0_94 = arith.constant 0 : index
    %c0_95 = arith.constant 0 : index
    %c0_96 = arith.constant 0 : index
    %131 = vector.load %arg12[%c0_94, %c0_95, %c0_96] : memref<16x64x32xf32, #tpu.memory_space<vmem>>, vector<1x64x32xf32>
    %132 = vector.shape_cast %131 : vector<1x64x32xf32> to vector<64x32xf32>
    %cst_97 = arith.constant dense<0.000000e+00> : vector<2x32xf32>
    %133 = tpu.matmul %130, %132, %cst_97 {dimension_numbers = #tpu.dot_dimension_numbers<[1], [0], [0], [1], [0, 0, 1, 1], [], []>} : vector<2x64xf32>, vector<64x32xf32>, vector<2x32xf32> -> vector<2x32xf32>
    %134 = arith.addf %127, %133 : vector<2x32xf32>
    %135 = vector.extract_strided_slice %74 {offsets = [1, 0], sizes = [1, 64], strides = [1, 1]} : vector<16x64xf32> to vector<1x64xf32>
    %136 = vector.extract_strided_slice %126 {offsets = [1, 0], sizes = [1, 64], strides = [1, 1]} : vector<16x64xf32> to vector<1x64xf32>
    %137 = tpu.concatenate %135, %136 in 0 : vector<1x64xf32>, vector<1x64xf32> -> vector<2x64xf32>
    %c1_98 = arith.constant 1 : index
    %c0_99 = arith.constant 0 : index
    %c0_100 = arith.constant 0 : index
    %138 = vector.load %arg12[%c1_98, %c0_99, %c0_100] : memref<16x64x32xf32, #tpu.memory_space<vmem>>, vector<1x64x32xf32>
    %139 = vector.shape_cast %138 : vector<1x64x32xf32> to vector<64x32xf32>
    %cst_101 = arith.constant dense<0.000000e+00> : vector<2x32xf32>
    %140 = tpu.matmul %137, %139, %cst_101 {dimension_numbers = #tpu.dot_dimension_numbers<[1], [0], [0], [1], [0, 0, 1, 1], [], []>} : vector<2x64xf32>, vector<64x32xf32>, vector<2x32xf32> -> vector<2x32xf32>
    %141 = arith.addf %134, %140 : vector<2x32xf32>
    %142 = vector.extract_strided_slice %74 {offsets = [2, 0], sizes = [1, 64], strides = [1, 1]} : vector<16x64xf32> to vector<1x64xf32>
    %143 = vector.extract_strided_slice %126 {offsets = [2, 0], sizes = [1, 64], strides = [1, 1]} : vector<16x64xf32> to vector<1x64xf32>
    %144 = tpu.concatenate %142, %143 in 0 : vector<1x64xf32>, vector<1x64xf32> -> vector<2x64xf32>
    %c2_102 = arith.constant 2 : index
    %c0_103 = arith.constant 0 : index
    %c0_104 = arith.constant 0 : index
    %145 = vector.load %arg12[%c2_102, %c0_103, %c0_104] : memref<16x64x32xf32, #tpu.memory_space<vmem>>, vector<1x64x32xf32>
    %146 = vector.shape_cast %145 : vector<1x64x32xf32> to vector<64x32xf32>
    %cst_105 = arith.constant dense<0.000000e+00> : vector<2x32xf32>
    %147 = tpu.matmul %144, %146, %cst_105 {dimension_numbers = #tpu.dot_dimension_numbers<[1], [0], [0], [1], [0, 0, 1, 1], [], []>} : vector<2x64xf32>, vector<64x32xf32>, vector<2x32xf32> -> vector<2x32xf32>
    %148 = arith.addf %141, %147 : vector<2x32xf32>
    %149 = vector.extract_strided_slice %74 {offsets = [3, 0], sizes = [1, 64], strides = [1, 1]} : vector<16x64xf32> to vector<1x64xf32>
    %150 = vector.extract_strided_slice %126 {offsets = [3, 0], sizes = [1, 64], strides = [1, 1]} : vector<16x64xf32> to vector<1x64xf32>
    %151 = tpu.concatenate %149, %150 in 0 : vector<1x64xf32>, vector<1x64xf32> -> vector<2x64xf32>
    %c3_106 = arith.constant 3 : index
    %c0_107 = arith.constant 0 : index
    %c0_108 = arith.constant 0 : index
    %152 = vector.load %arg12[%c3_106, %c0_107, %c0_108] : memref<16x64x32xf32, #tpu.memory_space<vmem>>, vector<1x64x32xf32>
    %153 = vector.shape_cast %152 : vector<1x64x32xf32> to vector<64x32xf32>
    %cst_109 = arith.constant dense<0.000000e+00> : vector<2x32xf32>
    %154 = tpu.matmul %151, %153, %cst_109 {dimension_numbers = #tpu.dot_dimension_numbers<[1], [0], [0], [1], [0, 0, 1, 1], [], []>} : vector<2x64xf32>, vector<64x32xf32>, vector<2x32xf32> -> vector<2x32xf32>
    %155 = arith.addf %148, %154 : vector<2x32xf32>
    %156 = vector.extract_strided_slice %74 {offsets = [4, 0], sizes = [1, 64], strides = [1, 1]} : vector<16x64xf32> to vector<1x64xf32>
    %157 = vector.extract_strided_slice %126 {offsets = [4, 0], sizes = [1, 64], strides = [1, 1]} : vector<16x64xf32> to vector<1x64xf32>
    %158 = tpu.concatenate %156, %157 in 0 : vector<1x64xf32>, vector<1x64xf32> -> vector<2x64xf32>
    %c4_110 = arith.constant 4 : index
    %c0_111 = arith.constant 0 : index
    %c0_112 = arith.constant 0 : index
    %159 = vector.load %arg12[%c4_110, %c0_111, %c0_112] : memref<16x64x32xf32, #tpu.memory_space<vmem>>, vector<1x64x32xf32>
    %160 = vector.shape_cast %159 : vector<1x64x32xf32> to vector<64x32xf32>
    %cst_113 = arith.constant dense<0.000000e+00> : vector<2x32xf32>
    %161 = tpu.matmul %158, %160, %cst_113 {dimension_numbers = #tpu.dot_dimension_numbers<[1], [0], [0], [1], [0, 0, 1, 1], [], []>} : vector<2x64xf32>, vector<64x32xf32>, vector<2x32xf32> -> vector<2x32xf32>
    %162 = arith.addf %155, %161 : vector<2x32xf32>
    %163 = vector.extract_strided_slice %74 {offsets = [5, 0], sizes = [1, 64], strides = [1, 1]} : vector<16x64xf32> to vector<1x64xf32>
    %164 = vector.extract_strided_slice %126 {offsets = [5, 0], sizes = [1, 64], strides = [1, 1]} : vector<16x64xf32> to vector<1x64xf32>
    %165 = tpu.concatenate %163, %164 in 0 : vector<1x64xf32>, vector<1x64xf32> -> vector<2x64xf32>
    %c5_114 = arith.constant 5 : index
    %c0_115 = arith.constant 0 : index
    %c0_116 = arith.constant 0 : index
    %166 = vector.load %arg12[%c5_114, %c0_115, %c0_116] : memref<16x64x32xf32, #tpu.memory_space<vmem>>, vector<1x64x32xf32>
    %167 = vector.shape_cast %166 : vector<1x64x32xf32> to vector<64x32xf32>
    %cst_117 = arith.constant dense<0.000000e+00> : vector<2x32xf32>
    %168 = tpu.matmul %165, %167, %cst_117 {dimension_numbers = #tpu.dot_dimension_numbers<[1], [0], [0], [1], [0, 0, 1, 1], [], []>} : vector<2x64xf32>, vector<64x32xf32>, vector<2x32xf32> -> vector<2x32xf32>
    %169 = arith.addf %162, %168 : vector<2x32xf32>
    %170 = vector.extract_strided_slice %74 {offsets = [6, 0], sizes = [1, 64], strides = [1, 1]} : vector<16x64xf32> to vector<1x64xf32>
    %171 = vector.extract_strided_slice %126 {offsets = [6, 0], sizes = [1, 64], strides = [1, 1]} : vector<16x64xf32> to vector<1x64xf32>
    %172 = tpu.concatenate %170, %171 in 0 : vector<1x64xf32>, vector<1x64xf32> -> vector<2x64xf32>
    %c6_118 = arith.constant 6 : index
    %c0_119 = arith.constant 0 : index
    %c0_120 = arith.constant 0 : index
    %173 = vector.load %arg12[%c6_118, %c0_119, %c0_120] : memref<16x64x32xf32, #tpu.memory_space<vmem>>, vector<1x64x32xf32>
    %174 = vector.shape_cast %173 : vector<1x64x32xf32> to vector<64x32xf32>
    %cst_121 = arith.constant dense<0.000000e+00> : vector<2x32xf32>
    %175 = tpu.matmul %172, %174, %cst_121 {dimension_numbers = #tpu.dot_dimension_numbers<[1], [0], [0], [1], [0, 0, 1, 1], [], []>} : vector<2x64xf32>, vector<64x32xf32>, vector<2x32xf32> -> vector<2x32xf32>
    %176 = arith.addf %169, %175 : vector<2x32xf32>
    %177 = vector.extract_strided_slice %74 {offsets = [7, 0], sizes = [1, 64], strides = [1, 1]} : vector<16x64xf32> to vector<1x64xf32>
    %178 = vector.extract_strided_slice %126 {offsets = [7, 0], sizes = [1, 64], strides = [1, 1]} : vector<16x64xf32> to vector<1x64xf32>
    %179 = tpu.concatenate %177, %178 in 0 : vector<1x64xf32>, vector<1x64xf32> -> vector<2x64xf32>
    %c7_122 = arith.constant 7 : index
    %c0_123 = arith.constant 0 : index
    %c0_124 = arith.constant 0 : index
    %180 = vector.load %arg12[%c7_122, %c0_123, %c0_124] : memref<16x64x32xf32, #tpu.memory_space<vmem>>, vector<1x64x32xf32>
    %181 = vector.shape_cast %180 : vector<1x64x32xf32> to vector<64x32xf32>
    %cst_125 = arith.constant dense<0.000000e+00> : vector<2x32xf32>
    %182 = tpu.matmul %179, %181, %cst_125 {dimension_numbers = #tpu.dot_dimension_numbers<[1], [0], [0], [1], [0, 0, 1, 1], [], []>} : vector<2x64xf32>, vector<64x32xf32>, vector<2x32xf32> -> vector<2x32xf32>
    %183 = arith.addf %176, %182 : vector<2x32xf32>
    %184 = vector.extract_strided_slice %74 {offsets = [8, 0], sizes = [1, 64], strides = [1, 1]} : vector<16x64xf32> to vector<1x64xf32>
    %185 = vector.extract_strided_slice %126 {offsets = [8, 0], sizes = [1, 64], strides = [1, 1]} : vector<16x64xf32> to vector<1x64xf32>
    %186 = tpu.concatenate %184, %185 in 0 : vector<1x64xf32>, vector<1x64xf32> -> vector<2x64xf32>
    %c8_126 = arith.constant 8 : index
    %c0_127 = arith.constant 0 : index
    %c0_128 = arith.constant 0 : index
    %187 = vector.load %arg12[%c8_126, %c0_127, %c0_128] : memref<16x64x32xf32, #tpu.memory_space<vmem>>, vector<1x64x32xf32>
    %188 = vector.shape_cast %187 : vector<1x64x32xf32> to vector<64x32xf32>
    %cst_129 = arith.constant dense<0.000000e+00> : vector<2x32xf32>
    %189 = tpu.matmul %186, %188, %cst_129 {dimension_numbers = #tpu.dot_dimension_numbers<[1], [0], [0], [1], [0, 0, 1, 1], [], []>} : vector<2x64xf32>, vector<64x32xf32>, vector<2x32xf32> -> vector<2x32xf32>
    %190 = arith.addf %183, %189 : vector<2x32xf32>
    %191 = vector.extract_strided_slice %74 {offsets = [9, 0], sizes = [1, 64], strides = [1, 1]} : vector<16x64xf32> to vector<1x64xf32>
    %192 = vector.extract_strided_slice %126 {offsets = [9, 0], sizes = [1, 64], strides = [1, 1]} : vector<16x64xf32> to vector<1x64xf32>
    %193 = tpu.concatenate %191, %192 in 0 : vector<1x64xf32>, vector<1x64xf32> -> vector<2x64xf32>
    %c9 = arith.constant 9 : index
    %c0_130 = arith.constant 0 : index
    %c0_131 = arith.constant 0 : index
    %194 = vector.load %arg12[%c9, %c0_130, %c0_131] : memref<16x64x32xf32, #tpu.memory_space<vmem>>, vector<1x64x32xf32>
    %195 = vector.shape_cast %194 : vector<1x64x32xf32> to vector<64x32xf32>
    %cst_132 = arith.constant dense<0.000000e+00> : vector<2x32xf32>
    %196 = tpu.matmul %193, %195, %cst_132 {dimension_numbers = #tpu.dot_dimension_numbers<[1], [0], [0], [1], [0, 0, 1, 1], [], []>} : vector<2x64xf32>, vector<64x32xf32>, vector<2x32xf32> -> vector<2x32xf32>
    %197 = arith.addf %190, %196 : vector<2x32xf32>
    %198 = vector.extract_strided_slice %74 {offsets = [10, 0], sizes = [1, 64], strides = [1, 1]} : vector<16x64xf32> to vector<1x64xf32>
    %199 = vector.extract_strided_slice %126 {offsets = [10, 0], sizes = [1, 64], strides = [1, 1]} : vector<16x64xf32> to vector<1x64xf32>
    %200 = tpu.concatenate %198, %199 in 0 : vector<1x64xf32>, vector<1x64xf32> -> vector<2x64xf32>
    %c10 = arith.constant 10 : index
    %c0_133 = arith.constant 0 : index
    %c0_134 = arith.constant 0 : index
    %201 = vector.load %arg12[%c10, %c0_133, %c0_134] : memref<16x64x32xf32, #tpu.memory_space<vmem>>, vector<1x64x32xf32>
    %202 = vector.shape_cast %201 : vector<1x64x32xf32> to vector<64x32xf32>
    %cst_135 = arith.constant dense<0.000000e+00> : vector<2x32xf32>
    %203 = tpu.matmul %200, %202, %cst_135 {dimension_numbers = #tpu.dot_dimension_numbers<[1], [0], [0], [1], [0, 0, 1, 1], [], []>} : vector<2x64xf32>, vector<64x32xf32>, vector<2x32xf32> -> vector<2x32xf32>
    %204 = arith.addf %197, %203 : vector<2x32xf32>
    %205 = vector.extract_strided_slice %74 {offsets = [11, 0], sizes = [1, 64], strides = [1, 1]} : vector<16x64xf32> to vector<1x64xf32>
    %206 = vector.extract_strided_slice %126 {offsets = [11, 0], sizes = [1, 64], strides = [1, 1]} : vector<16x64xf32> to vector<1x64xf32>
    %207 = tpu.concatenate %205, %206 in 0 : vector<1x64xf32>, vector<1x64xf32> -> vector<2x64xf32>
    %c11 = arith.constant 11 : index
    %c0_136 = arith.constant 0 : index
    %c0_137 = arith.constant 0 : index
    %208 = vector.load %arg12[%c11, %c0_136, %c0_137] : memref<16x64x32xf32, #tpu.memory_space<vmem>>, vector<1x64x32xf32>
    %209 = vector.shape_cast %208 : vector<1x64x32xf32> to vector<64x32xf32>
    %cst_138 = arith.constant dense<0.000000e+00> : vector<2x32xf32>
    %210 = tpu.matmul %207, %209, %cst_138 {dimension_numbers = #tpu.dot_dimension_numbers<[1], [0], [0], [1], [0, 0, 1, 1], [], []>} : vector<2x64xf32>, vector<64x32xf32>, vector<2x32xf32> -> vector<2x32xf32>
    %211 = arith.addf %204, %210 : vector<2x32xf32>
    %212 = vector.extract_strided_slice %74 {offsets = [12, 0], sizes = [1, 64], strides = [1, 1]} : vector<16x64xf32> to vector<1x64xf32>
    %213 = vector.extract_strided_slice %126 {offsets = [12, 0], sizes = [1, 64], strides = [1, 1]} : vector<16x64xf32> to vector<1x64xf32>
    %214 = tpu.concatenate %212, %213 in 0 : vector<1x64xf32>, vector<1x64xf32> -> vector<2x64xf32>
    %c12 = arith.constant 12 : index
    %c0_139 = arith.constant 0 : index
    %c0_140 = arith.constant 0 : index
    %215 = vector.load %arg12[%c12, %c0_139, %c0_140] : memref<16x64x32xf32, #tpu.memory_space<vmem>>, vector<1x64x32xf32>
    %216 = vector.shape_cast %215 : vector<1x64x32xf32> to vector<64x32xf32>
    %cst_141 = arith.constant dense<0.000000e+00> : vector<2x32xf32>
    %217 = tpu.matmul %214, %216, %cst_141 {dimension_numbers = #tpu.dot_dimension_numbers<[1], [0], [0], [1], [0, 0, 1, 1], [], []>} : vector<2x64xf32>, vector<64x32xf32>, vector<2x32xf32> -> vector<2x32xf32>
    %218 = arith.addf %211, %217 : vector<2x32xf32>
    %219 = vector.extract_strided_slice %74 {offsets = [13, 0], sizes = [1, 64], strides = [1, 1]} : vector<16x64xf32> to vector<1x64xf32>
    %220 = vector.extract_strided_slice %126 {offsets = [13, 0], sizes = [1, 64], strides = [1, 1]} : vector<16x64xf32> to vector<1x64xf32>
    %221 = tpu.concatenate %219, %220 in 0 : vector<1x64xf32>, vector<1x64xf32> -> vector<2x64xf32>
    %c13 = arith.constant 13 : index
    %c0_142 = arith.constant 0 : index
    %c0_143 = arith.constant 0 : index
    %222 = vector.load %arg12[%c13, %c0_142, %c0_143] : memref<16x64x32xf32, #tpu.memory_space<vmem>>, vector<1x64x32xf32>
    %223 = vector.shape_cast %222 : vector<1x64x32xf32> to vector<64x32xf32>
    %cst_144 = arith.constant dense<0.000000e+00> : vector<2x32xf32>
    %224 = tpu.matmul %221, %223, %cst_144 {dimension_numbers = #tpu.dot_dimension_numbers<[1], [0], [0], [1], [0, 0, 1, 1], [], []>} : vector<2x64xf32>, vector<64x32xf32>, vector<2x32xf32> -> vector<2x32xf32>
    %225 = arith.addf %218, %224 : vector<2x32xf32>
    %226 = vector.extract_strided_slice %74 {offsets = [14, 0], sizes = [1, 64], strides = [1, 1]} : vector<16x64xf32> to vector<1x64xf32>
    %227 = vector.extract_strided_slice %126 {offsets = [14, 0], sizes = [1, 64], strides = [1, 1]} : vector<16x64xf32> to vector<1x64xf32>
    %228 = tpu.concatenate %226, %227 in 0 : vector<1x64xf32>, vector<1x64xf32> -> vector<2x64xf32>
    %c14 = arith.constant 14 : index
    %c0_145 = arith.constant 0 : index
    %c0_146 = arith.constant 0 : index
    %229 = vector.load %arg12[%c14, %c0_145, %c0_146] : memref<16x64x32xf32, #tpu.memory_space<vmem>>, vector<1x64x32xf32>
    %230 = vector.shape_cast %229 : vector<1x64x32xf32> to vector<64x32xf32>
    %cst_147 = arith.constant dense<0.000000e+00> : vector<2x32xf32>
    %231 = tpu.matmul %228, %230, %cst_147 {dimension_numbers = #tpu.dot_dimension_numbers<[1], [0], [0], [1], [0, 0, 1, 1], [], []>} : vector<2x64xf32>, vector<64x32xf32>, vector<2x32xf32> -> vector<2x32xf32>
    %232 = arith.addf %225, %231 : vector<2x32xf32>
    %233 = vector.extract_strided_slice %74 {offsets = [15, 0], sizes = [1, 64], strides = [1, 1]} : vector<16x64xf32> to vector<1x64xf32>
    %234 = vector.extract_strided_slice %126 {offsets = [15, 0], sizes = [1, 64], strides = [1, 1]} : vector<16x64xf32> to vector<1x64xf32>
    %235 = tpu.concatenate %233, %234 in 0 : vector<1x64xf32>, vector<1x64xf32> -> vector<2x64xf32>
    %c15 = arith.constant 15 : index
    %c0_148 = arith.constant 0 : index
    %c0_149 = arith.constant 0 : index
    %236 = vector.load %arg12[%c15, %c0_148, %c0_149] : memref<16x64x32xf32, #tpu.memory_space<vmem>>, vector<1x64x32xf32>
    %237 = vector.shape_cast %236 : vector<1x64x32xf32> to vector<64x32xf32>
    %cst_150 = arith.constant dense<0.000000e+00> : vector<2x32xf32>
    %238 = tpu.matmul %235, %237, %cst_150 {dimension_numbers = #tpu.dot_dimension_numbers<[1], [0], [0], [1], [0, 0, 1, 1], [], []>} : vector<2x64xf32>, vector<64x32xf32>, vector<2x32xf32> -> vector<2x32xf32>
    %239 = arith.addf %232, %238 : vector<2x32xf32>
    %c0_151 = arith.constant 0 : index
    %c0_152 = arith.constant 0 : index
    %240 = vector.load %arg13[%c0_151, %c0_152] : memref<1x32xf32, #tpu.memory_space<vmem>>, vector<1x32xf32>
    %241 = vector.broadcast %240 : vector<1x32xf32> to vector<2x32xf32>
    %242 = arith.addf %239, %241 : vector<2x32xf32>
    %cst_153 = arith.constant 0.000000e+00 : f32
    %243 = vector.broadcast %cst_153 : f32 to vector<2x32xf32>
    %244 = arith.maximumf %242, %243 : vector<2x32xf32>
    %c0_154 = arith.constant 0 : index
    %c0_155 = arith.constant 0 : index
    %245 = vector.load %arg14[%c0_154, %c0_155] : memref<32x32xf32, #tpu.memory_space<vmem>>, vector<32x32xf32>
    %cst_156 = arith.constant dense<0.000000e+00> : vector<2x32xf32>
    %246 = tpu.matmul %12, %245, %cst_156 {dimension_numbers = #tpu.dot_dimension_numbers<[1], [0], [0], [1], [0, 0, 1, 1], [], []>} : vector<2x32xf32>, vector<32x32xf32>, vector<2x32xf32> -> vector<2x32xf32>
    %c0_157 = arith.constant 0 : index
    %c0_158 = arith.constant 0 : index
    %247 = vector.load %arg15[%c0_157, %c0_158] : memref<32x32xf32, #tpu.memory_space<vmem>>, vector<32x32xf32>
    %cst_159 = arith.constant dense<0.000000e+00> : vector<2x32xf32>
    %248 = tpu.matmul %244, %247, %cst_159 {dimension_numbers = #tpu.dot_dimension_numbers<[1], [0], [0], [1], [0, 0, 1, 1], [], []>} : vector<2x32xf32>, vector<32x32xf32>, vector<2x32xf32> -> vector<2x32xf32>
    %249 = arith.addf %246, %248 : vector<2x32xf32>
    %c0_160 = arith.constant 0 : index
    %c0_161 = arith.constant 0 : index
    %250 = vector.load %arg16[%c0_160, %c0_161] : memref<1x32xf32, #tpu.memory_space<vmem>>, vector<1x32xf32>
    %251 = vector.broadcast %250 : vector<1x32xf32> to vector<2x32xf32>
    %252 = arith.addf %249, %251 : vector<2x32xf32>
    %cst_162 = arith.constant 0.000000e+00 : f32
    %253 = vector.broadcast %cst_162 : f32 to vector<2x32xf32>
    %254 = arith.maximumf %252, %253 : vector<2x32xf32>
    %c0_163 = arith.constant 0 : index
    %c0_164 = arith.constant 0 : index
    %255 = vector.load %arg17[%c0_163, %c0_164] : memref<2x32xf32, #tpu.memory_space<vmem>>, vector<2x32xf32>
    tpu.vector_store %arg17[%c0_163, %c0_164], %254 {strides = array<i32>} : memref<2x32xf32, #tpu.memory_space<vmem>>, vector<2x32xf32>,
    return
  }
  func.func @transform_0(%arg0: i32) -> (i32, i32) {
    %c0_i32 = arith.constant 0 : i32
    %c0_i32_0 = arith.constant 0 : i32
    %c0_i32_1 = arith.constant 0 : i32
    return %c0_i32, %c0_i32_0 : i32, i32
  }
  func.func @transform_1(%arg0: i32) -> (i32, i32) {
    %c0_i32 = arith.constant 0 : i32
    %c0_i32_0 = arith.constant 0 : i32
    %c0_i32_1 = arith.constant 0 : i32
    return %c0_i32, %c0_i32_0 : i32, i32
  }
  func.func @transform_2(%arg0: i32) -> (i32, i32) {
    %c0_i32 = arith.constant 0 : i32
    %c0_i32_0 = arith.constant 0 : i32
    %c0_i32_1 = arith.constant 0 : i32
    return %c0_i32, %c0_i32_0 : i32, i32
  }
  func.func @transform_3(%arg0: i32) -> (i32, i32) {
    %c0_i32 = arith.constant 0 : i32
    %c0_i32_0 = arith.constant 0 : i32
    %c0_i32_1 = arith.constant 0 : i32
    return %c0_i32, %c0_i32_0 : i32, i32
  }
  func.func @transform_4(%arg0: i32) -> (i32, i32) {
    %c0_i32 = arith.constant 0 : i32
    %c0_i32_0 = arith.constant 0 : i32
    %c0_i32_1 = arith.constant 0 : i32
    return %c0_i32, %c0_i32_0 : i32, i32
  }
  func.func @transform_5(%arg0: i32) -> (i32, i32) {
    %c0_i32 = arith.constant 0 : i32
    %c0_i32_0 = arith.constant 0 : i32
    %c0_i32_1 = arith.constant 0 : i32
    return %c0_i32, %c0_i32_0 : i32, i32
  }
  func.func @transform_6(%arg0: i32) -> (i32, i32) {
    %c0_i32 = arith.constant 0 : i32
    %c0_i32_0 = arith.constant 0 : i32
    %c0_i32_1 = arith.constant 0 : i32
    return %c0_i32, %c0_i32_0 : i32, i32
  }
  func.func @transform_7(%arg0: i32) -> (i32, i32) {
    %c0_i32 = arith.constant 0 : i32
    %c0_i32_0 = arith.constant 0 : i32
    %c0_i32_1 = arith.constant 0 : i32
    return %c0_i32, %c0_i32_0 : i32, i32
  }
  func.func @transform_8(%arg0: i32) -> (i32, i32) {
    %c0_i32 = arith.constant 0 : i32
    %c0_i32_0 = arith.constant 0 : i32
    %c0_i32_1 = arith.constant 0 : i32
    return %c0_i32, %c0_i32_0 : i32, i32
  }
  func.func @transform_9(%arg0: i32) -> (i32, i32, i32) {
    %c0_i32 = arith.constant 0 : i32
    %c0_i32_0 = arith.constant 0 : i32
    %c0_i32_1 = arith.constant 0 : i32
    %c0_i32_2 = arith.constant 0 : i32
    return %c0_i32, %c0_i32_0, %c0_i32_1 : i32, i32, i32
  }
  func.func @transform_10(%arg0: i32) -> (i32, i32) {
    %c0_i32 = arith.constant 0 : i32
    %c0_i32_0 = arith.constant 0 : i32
    %c0_i32_1 = arith.constant 0 : i32
    return %c0_i32, %c0_i32_0 : i32, i32
  }
  func.func @transform_11(%arg0: i32) -> (i32, i32, i32) {
    %c0_i32 = arith.constant 0 : i32
    %c0_i32_0 = arith.constant 0 : i32
    %c0_i32_1 = arith.constant 0 : i32
    %c0_i32_2 = arith.constant 0 : i32
    return %c0_i32, %c0_i32_0, %c0_i32_1 : i32, i32, i32
  }
  func.func @transform_12(%arg0: i32) -> (i32, i32) {
    %c0_i32 = arith.constant 0 : i32
    %c0_i32_0 = arith.constant 0 : i32
    %c0_i32_1 = arith.constant 0 : i32
    return %c0_i32, %c0_i32_0 : i32, i32
  }
  func.func @transform_13(%arg0: i32) -> (i32, i32) {
    %c0_i32 = arith.constant 0 : i32
    %c0_i32_0 = arith.constant 0 : i32
    %c0_i32_1 = arith.constant 0 : i32
    return %c0_i32, %c0_i32_0 : i32, i32
  }
  func.func @transform_14(%arg0: i32) -> (i32, i32) {
    %c0_i32 = arith.constant 0 : i32
    %c0_i32_0 = arith.constant 0 : i32
    %c0_i32_1 = arith.constant 0 : i32
    return %c0_i32, %c0_i32_0 : i32, i32
  }
  func.func @transform_15(%arg0: i32) -> (i32, i32) {
    %c0_i32 = arith.constant 0 : i32
    %c0_i32_0 = arith.constant 0 : i32
    %c0_i32_1 = arith.constant 0 : i32
    return %c0_i32, %c0_i32_0 : i32, i32
  }
  func.func @transform_16(%arg0: i32) -> (i32, i32) {
    %c0_i32 = arith.constant 0 : i32
    %c0_i32_0 = arith.constant 0 : i32
    %c0_i32_1 = arith.constant 0 : i32
    return %c0_i32, %c0_i32_0 : i32, i32
  }
}

</mosaic_0001>

<llo_original>
// kernel: multimodal_forward.1
$region0: #{multimodal_forward.1}
  #allocation0 [shape = 'u32[]', space=smem, size = 0x4, offset = 0x4, fixed_abs, tag = 'smem constant byte address 0x4 - core index']
  #allocation1 [shape = 'u32[144,128]{1,0:T(1,128)}', space=vmem, size = 0x12000, scoped, tag = 'internal scratch']
  %s0 = inlined_call_operand.vmem [shape: f32[2,38], index: 0, kind: input, shape index: {}]
  %s1 = inlined_call_operand.vmem [shape: f32[128,9], index: 1, kind: input, shape index: {}]
  %s2 = inlined_call_operand.vmem [shape: f32[38,32], index: 2, kind: input, shape index: {}]
  %s3 = inlined_call_operand.vmem [shape: f32[1,32], index: 3, kind: input, shape index: {}]
  %s4 = inlined_call_operand.vmem [shape: f32[32,32], index: 4, kind: input, shape index: {}]
  %s5 = inlined_call_operand.vmem [shape: f32[1,32], index: 5, kind: input, shape index: {}]
  %s6 = inlined_call_operand.vmem [shape: f32[9,32], index: 6, kind: input, shape index: {}]
  %s7 = inlined_call_operand.vmem [shape: f32[1,32], index: 7, kind: input, shape index: {}]
  %s8 = inlined_call_operand.vmem [shape: f32[144,64], index: 8, kind: input, shape index: {}]
  %s9 = inlined_call_operand.vmem [shape: f32[9,32,64], index: 9, kind: input, shape index: {}]
  %s10 = inlined_call_operand.vmem [shape: f32[1,64], index: 10, kind: input, shape index: {}]
  %s11 = inlined_call_operand.vmem [shape: f32[16,64,32], index: 11, kind: input, shape index: {}]
  %s12 = inlined_call_operand.vmem [shape: f32[1,32], index: 12, kind: input, shape index: {}]
  %s13 = inlined_call_operand.vmem [shape: f32[32,32], index: 13, kind: input, shape index: {}]
  %s14 = inlined_call_operand.vmem [shape: f32[32,32], index: 14, kind: input, shape index: {}]
  %s15 = inlined_call_operand.vmem [shape: f32[1,32], index: 15, kind: input, shape index: {}]
  %s16 = inlined_call_operand.hbm [shape: f32[2,32], index: 16, kind: output, shape index: {}]
  %s17 = sld [smem:[#allocation0]]
  $region74: #{multimodal_forward.1} parent=0
    _
  %s19 = ssub.s32 1, %s17
  %s20 = scalar_select 0, %s19, %s17
  $region1: #{multimodal_forward.1} parent=0
    #allocation2 [shape = 'u8[1024]{0}', space=vmem, size = 0x400, scoped, tag = 'output window, operand 0, single buffered']
    #allocation3 [shape = 's32[1]{0}', space=sflag, size = 0x4, scoped, tag = 'scoped memory for multimodal_forward.1']
    %21 = vsyncpa [#allocation3], 0
    // Predicated region
    $region2: #{multimodal_forward.1} parent=1 // pred_check
      _
    $region3: #{multimodal_forward.1} parent=1 // pred_check_branch
      %23 = sbr.rel (0) target = $region5
    $region4: #{multimodal_forward.1} parent=1 // pred_region
      _
    $region5: #{multimodal_forward.1} parent=1 // pred_fallthru
      _
    // Predicated region
    $region6: #{multimodal_forward.1} parent=1 // pred_check
      _
    $region7: #{multimodal_forward.1} parent=1 // pred_check_branch
      %25 = sbr.rel (0) target = $region9
    $region8: #{multimodal_forward.1} parent=1 // pred_region
      _
    $region9: #{multimodal_forward.1} parent=1 // pred_fallthru
      _
    // Predicated region
    $region10: #{multimodal_forward.1} parent=1 // pred_check
      _
    $region11: #{multimodal_forward.1} parent=1 // pred_check_branch
      %27 = sbr.rel (0) target = $region13
    $region12: #{multimodal_forward.1} parent=1 // pred_region
      _
    $region13: #{multimodal_forward.1} parent=1 // pred_fallthru
      _
    // Predicated region
    $region14: #{multimodal_forward.1} parent=1 // pred_check
      _
    $region15: #{multimodal_forward.1} parent=1 // pred_check_branch
      %29 = sbr.rel (0) target = $region17
    $region16: #{multimodal_forward.1} parent=1 // pred_region
      _
    $region17: #{multimodal_forward.1} parent=1 // pred_fallthru
      _
    // Predicated region
    $region18: #{multimodal_forward.1} parent=1 // pred_check
      _
    $region19: #{multimodal_forward.1} parent=1 // pred_check_branch
      %31 = sbr.rel (0) target = $region21
    $region20: #{multimodal_forward.1} parent=1 // pred_region
      _
    $region21: #{multimodal_forward.1} parent=1 // pred_fallthru
      _
    // Predicated region
    $region22: #{multimodal_forward.1} parent=1 // pred_check
      _
    $region23: #{multimodal_forward.1} parent=1 // pred_check_branch
      %33 = sbr.rel (0) target = $region25
    $region24: #{multimodal_forward.1} parent=1 // pred_region
      _
    $region25: #{multimodal_forward.1} parent=1 // pred_fallthru
      _
    // Predicated region
    $region26: #{multimodal_forward.1} parent=1 // pred_check
      _
    $region27: #{multimodal_forward.1} parent=1 // pred_check_branch
      %35 = sbr.rel (0) target = $region29
    $region28: #{multimodal_forward.1} parent=1 // pred_region
      _
    $region29: #{multimodal_forward.1} parent=1 // pred_fallthru
      _
    // Predicated region
    $region30: #{multimodal_forward.1} parent=1 // pred_check
      _
    $region31: #{multimodal_forward.1} parent=1 // pred_check_branch
      %37 = sbr.rel (0) target = $region33
    $region32: #{multimodal_forward.1} parent=1 // pred_region
      _
    $region33: #{multimodal_forward.1} parent=1 // pred_fallthru
      _
    // Predicated region
    $region34: #{multimodal_forward.1} parent=1 // pred_check
      _
    $region35: #{multimodal_forward.1} parent=1 // pred_check_branch
      %39 = sbr.rel (0) target = $region37
    $region36: #{multimodal_forward.1} parent=1 // pred_region
      _
    $region37: #{multimodal_forward.1} parent=1 // pred_fallthru
      _
    // Predicated region
    $region38: #{multimodal_forward.1} parent=1 // pred_check
      _
    $region39: #{multimodal_forward.1} parent=1 // pred_check_branch
      %41 = sbr.rel (0) target = $region41
    $region40: #{multimodal_forward.1} parent=1 // pred_region
      _
    $region41: #{multimodal_forward.1} parent=1 // pred_fallthru
      _
    // Predicated region
    $region42: #{multimodal_forward.1} parent=1 // pred_check
      _
    $region43: #{multimodal_forward.1} parent=1 // pred_check_branch
      %43 = sbr.rel (0) target = $region45
    $region44: #{multimodal_forward.1} parent=1 // pred_region
      _
    $region45: #{multimodal_forward.1} parent=1 // pred_fallthru
      _
    // Predicated region
    $region46: #{multimodal_forward.1} parent=1 // pred_check
      _
    $region47: #{multimodal_forward.1} parent=1 // pred_check_branch
      %45 = sbr.rel (0) target = $region49
    $region48: #{multimodal_forward.1} parent=1 // pred_region
      _
    $region49: #{multimodal_forward.1} parent=1 // pred_fallthru
      _
    // Predicated region
    $region50: #{multimodal_forward.1} parent=1 // pred_check
      _
    $region51: #{multimodal_forward.1} parent=1 // pred_check_branch
      %47 = sbr.rel (0) target = $region53
    $region52: #{multimodal_forward.1} parent=1 // pred_region
      _
    $region53: #{multimodal_forward.1} parent=1 // pred_fallthru
      _
    // Predicated region
    $region54: #{multimodal_forward.1} parent=1 // pred_check
      _
    $region55: #{multimodal_forward.1} parent=1 // pred_check_branch
      %49 = sbr.rel (0) target = $region57
    $region56: #{multimodal_forward.1} parent=1 // pred_region
      _
    $region57: #{multimodal_forward.1} parent=1 // pred_fallthru
      _
    // Predicated region
    $region58: #{multimodal_forward.1} parent=1 // pred_check
      _
    $region59: #{multimodal_forward.1} parent=1 // pred_check_branch
      %51 = sbr.rel (0) target = $region61
    $region60: #{multimodal_forward.1} parent=1 // pred_region
      _
    $region61: #{multimodal_forward.1} parent=1 // pred_fallthru
      _
    // Predicated region
    $region62: #{multimodal_forward.1} parent=1 // pred_check
      _
    $region63: #{multimodal_forward.1} parent=1 // pred_check_branch
      %53 = sbr.rel (0) target = $region65
    $region64: #{multimodal_forward.1} parent=1 // pred_region
      _
    $region65: #{multimodal_forward.1} parent=1 // pred_fallthru
      _
    %v54 = vld [vmem:[%s0] sm:$0x3]
    %v55 = vld [vmem:[%s2] sm:$0xff]
    %v56 = vld [vmem:[%s2 + $0x8] sm:$0xff]
    %v57 = vld [vmem:[%s2 + $0x10] sm:$0xff]
    %v58 = vld [vmem:[%s2 + $0x18] sm:$0xff]
    %v59 = vld [vmem:[%s2 + $0x20] sm:$0x3f]
    %v60 = vld [vmem:[%s3] sm:$0x1]
    %v62 = vlaneseq
    %v63 = vshrl.u32 %v62, 7
    %v64 = vsub.s32 0, %v63
    %v65 = vrot.slane %v60, %v64
    %vm67 = vcmask 310272
    %v69 = vsel %vm67, %v54, 0
    %vm71 = vcmask 1045504
    %v73 = vsel %vm71, %v59, 0
    %75 = vmatprep.subr.mxu0 0.0
    %76 = vmatpush1.msra.mxu0 %v55
    %77 = vmatprep.subr.mxu0 0.0
    %78 = vmatpush1.msra.mxu0 %v56
    %79 = vmatprep.subr.mxu0 0.0
    %80 = vmatpush1.msra.mxu0 %v57
    %81 = vmatprep.subr.mxu0 0.0
    %82 = vmatpush1.msra.mxu0 %v58
    %83 = vmatprep.subr.mxu0 0.0
    %84 = vmatpush1.msra.mxu0 %v73
    %85 = vmatprep.subr.mxu0 0.0
    %86 = vmatpush1.msra.mxu0 0.0
    %87 = vmatprep.subr.mxu0 0.0
    %88 = vmatpush1.msra.mxu0 0.0
    %89 = vmatprep.subr.mxu0 0.0
    %90 = vmatpush1.msra.mxu0 0.0
    %91 = vmatprep.subr.mxu0 0.0
    %92 = vmatpush1.msra.mxu0 0.0
    %93 = vmatprep.subr.mxu0 0.0
    %94 = vmatpush1.msra.mxu0 0.0
    %95 = vmatprep.subr.mxu0 0.0
    %96 = vmatpush1.msra.mxu0 0.0
    %97 = vmatprep.subr.mxu0 0.0
    %98 = vmatpush1.msra.mxu0 0.0
    %99 = vmatprep.subr.mxu0 0.0
    %100 = vmatpush1.msra.mxu0 0.0
    %101 = vmatprep.subr.mxu0 0.0
    %102 = vmatpush1.msra.mxu0 0.0
    %103 = vmatprep.subr.mxu0 0.0
    %104 = vmatpush1.msra.mxu0 0.0
    %105 = vmatprep.subr.mxu0 0.0
    %106 = vmatpush1.msra.mxu0 0.0
    %107 = vmatprep.subr.mxu0 0.0
    %108 = vmatpush1.msra.mxu0 0.0
    %109 = vmatprep.subr.mxu0 0.0
    %110 = vmatpush1.msra.mxu0 0.0
    %111 = vmatprep.subr.mxu0 0.0
    %112 = vmatpush1.msra.mxu0 0.0
    %113 = vmatprep.subr.mxu0 0.0
    %114 = vmatpush1.msra.mxu0 0.0
    %115 = vmatprep.subr.mxu0 0.0
    %116 = vmatpush1.msra.mxu0 0.0
    %117 = vmatprep.subr.mxu0 0.0
    %118 = vmatpush1.msra.mxu0 0.0
    %119 = vmatprep.subr.mxu0 0.0
    %120 = vmatpush1.msra.mxu0 0.0
    %121 = vmatprep.subr.mxu0 0.0
    %122 = vmatpush1.msra.mxu0 0.0
    %123 = vmatprep.subr.mxu0 0.0
    %124 = vmatpush1.msra.mxu0 0.0
    %125 = vmatprep.subr.mxu0 0.0
    %126 = vmatpush1.msra.mxu0 0.0
    %127 = vmatprep.subr.mxu0 0.0
    %128 = vmatpush1.msra.mxu0 0.0
    %129 = vmatprep.subr.mxu0 0.0
    %130 = vmatpush1.msra.mxu0 0.0
    %131 = vmatprep.subr.mxu0 0.0
    %132 = vmatpush1.msra.mxu0 0.0
    %133 = vmatprep.subr.mxu0 0.0
    %134 = vmatpush1.msra.mxu0 0.0
    %135 = vmatprep.subr.mxu0 0.0
    %136 = vmatpush1.msra.mxu0 0.0
    %137 = vmatprep.subr.mxu0 0.0
    %138 = vmatpush1.msra.mxu0 0.0
    %139 = vmatprep.mubr.f32.mxu0 0.0
    %140 = vmatmul.mubr.f32.gmra.mrb[0].mxu0 %v69
    %v141 = vpop.f32.mrb[0].mxu0
    %v142 = vadd.f32 %v65, %v141
    %v143 = vpop.f32.mrb[0].mxu0
    %144 = vdwg.mxu0
    %v145 = vmax.f32 %v142, 0.0
    %v146 = vld [vmem:[%s4] sm:$0xff]
    %v147 = vld [vmem:[%s4 + $0x8] sm:$0xff]
    %v148 = vld [vmem:[%s4 + $0x10] sm:$0xff]
    %v149 = vld [vmem:[%s4 + $0x18] sm:$0xff]
    %v150 = vld [vmem:[%s5] sm:$0x1]
    %v152 = vlaneseq
    %v153 = vshrl.u32 %v152, 7
    %v154 = vsub.s32 0, %v153
    %v155 = vrot.slane %v150, %v154
    %vm157 = vcmask 261120
    %v159 = vsel %vm157, %v145, 0
    %161 = vmatprep.subr.mxu0 0.0
    %162 = vmatpush1.msra.mxu0 %v146
    %163 = vmatprep.subr.mxu0 0.0
    %164 = vmatpush1.msra.mxu0 %v147
    %165 = vmatprep.subr.mxu0 0.0
    %166 = vmatpush1.msra.mxu0 %v148
    %167 = vmatprep.subr.mxu0 0.0
    %168 = vmatpush1.msra.mxu0 %v149
    %169 = vmatprep.subr.mxu0 0.0
    %170 = vmatpush1.msra.mxu0 0.0
    %171 = vmatprep.subr.mxu0 0.0
    %172 = vmatpush1.msra.mxu0 0.0
    %173 = vmatprep.subr.mxu0 0.0
    %174 = vmatpush1.msra.mxu0 0.0
    %175 = vmatprep.subr.mxu0 0.0
    %176 = vmatpush1.msra.mxu0 0.0
    %177 = vmatprep.subr.mxu0 0.0
    %178 = vmatpush1.msra.mxu0 0.0
    %179 = vmatprep.subr.mxu0 0.0
    %180 = vmatpush1.msra.mxu0 0.0
    %181 = vmatprep.subr.mxu0 0.0
    %182 = vmatpush1.msra.mxu0 0.0
    %183 = vmatprep.subr.mxu0 0.0
    %184 = vmatpush1.msra.mxu0 0.0
    %185 = vmatprep.subr.mxu0 0.0
    %186 = vmatpush1.msra.mxu0 0.0
    %187 = vmatprep.subr.mxu0 0.0
    %188 = vmatpush1.msra.mxu0 0.0
    %189 = vmatprep.subr.mxu0 0.0
    %190 = vmatpush1.msra.mxu0 0.0
    %191 = vmatprep.subr.mxu0 0.0
    %192 = vmatpush1.msra.mxu0 0.0
    %193 = vmatprep.subr.mxu0 0.0
    %194 = vmatpush1.msra.mxu0 0.0
    %195 = vmatprep.subr.mxu0 0.0
    %196 = vmatpush1.msra.mxu0 0.0
    %197 = vmatprep.subr.mxu0 0.0
    %198 = vmatpush1.msra.mxu0 0.0
    %199 = vmatprep.subr.mxu0 0.0
    %200 = vmatpush1.msra.mxu0 0.0
    %201 = vmatprep.subr.mxu0 0.0
    %202 = vmatpush1.msra.mxu0 0.0
    %203 = vmatprep.subr.mxu0 0.0
    %204 = vmatpush1.msra.mxu0 0.0
    %205 = vmatprep.subr.mxu0 0.0
    %206 = vmatpush1.msra.mxu0 0.0
    %207 = vmatprep.subr.mxu0 0.0
    %208 = vmatpush1.msra.mxu0 0.0
    %209 = vmatprep.subr.mxu0 0.0
    %210 = vmatpush1.msra.mxu0 0.0
    %211 = vmatprep.subr.mxu0 0.0
    %212 = vmatpush1.msra.mxu0 0.0
    %213 = vmatprep.subr.mxu0 0.0
    %214 = vmatpush1.msra.mxu0 0.0
    %215 = vmatprep.subr.mxu0 0.0
    %216 = vmatpush1.msra.mxu0 0.0
    %217 = vmatprep.subr.mxu0 0.0
    %218 = vmatpush1.msra.mxu0 0.0
    %219 = vmatprep.subr.mxu0 0.0
    %220 = vmatpush1.msra.mxu0 0.0
    %221 = vmatprep.subr.mxu0 0.0
    %222 = vmatpush1.msra.mxu0 0.0
    %223 = vmatprep.subr.mxu0 0.0
    %224 = vmatpush1.msra.mxu0 0.0
    %225 = vmatprep.mubr.f32.mxu0 0.0
    %226 = vmatmul.mubr.f32.gmra.mrb[0].mxu0 %v159
    %v227 = vpop.f32.mrb[0].mxu0
    %v228 = vadd.f32 %v155, %v227
    %v229 = vpop.f32.mrb[0].mxu0
    %230 = vdwg.mxu0
    %v231 = vld [vmem:[%s1] sm:$0xff]
    %v232 = vld [vmem:[%s1 + $0x8] sm:$0xff]
    %v233 = vld [vmem:[%s1 + $0x10] sm:$0xff]
    %v234 = vld [vmem:[%s1 + $0x18] sm:$0xff]
    %v235 = vld [vmem:[%s1 + $0x20] sm:$0xff]
    %v236 = vld [vmem:[%s1 + $0x28] sm:$0xff]
    %v237 = vld [vmem:[%s1 + $0x30] sm:$0xff]
    %v238 = vld [vmem:[%s1 + $0x38] sm:$0xff]
    %v239 = vld [vmem:[%s1 + $0x40] sm:$0xff]
    %v240 = vld [vmem:[%s1 + $0x48] sm:$0xff]
    %v241 = vld [vmem:[%s1 + $0x50] sm:$0xff]
    %v242 = vld [vmem:[%s1 + $0x58] sm:$0xff]
    %v243 = vld [vmem:[%s1 + $0x60] sm:$0xff]
    %v244 = vld [vmem:[%s1 + $0x68] sm:$0xff]
    %v245 = vld [vmem:[%s1 + $0x70] sm:$0xff]
    %v246 = vld [vmem:[%s1 + $0x78] sm:$0xff]
    %v247 = vld [vmem:[%s6] sm:$0xff]
    %v248 = vld [vmem:[%s6 + $0x8] sm:$0x1]
    %v249 = vld [vmem:[%s7] sm:$0x1]
    %v251 = vlaneseq
    %v252 = vshrl.u32 %v251, 7
    %v253 = vsub.s32 0, %v252
    %v254 = vrot.slane %v249, %v253
    %vm256 = vcmask 72704
    %v258 = vsel %vm256, %v231, 0
    %v261 = vsel %vm256, %v232, 0
    %v264 = vsel %vm256, %v233, 0
    %v267 = vsel %vm256, %v234, 0
    %v270 = vsel %vm256, %v235, 0
    %v273 = vsel %vm256, %v236, 0
    %v276 = vsel %vm256, %v237, 0
    %v279 = vsel %vm256, %v238, 0
    %v282 = vsel %vm256, %v239, 0
    %v285 = vsel %vm256, %v240, 0
    %v288 = vsel %vm256, %v241, 0
    %v291 = vsel %vm256, %v242, 0
    %v294 = vsel %vm256, %v243, 0
    %v297 = vsel %vm256, %v244, 0
    %v300 = vsel %vm256, %v245, 0
    %v303 = vsel %vm256, %v246, 0
    %vm305 = vcmask 1040384
    %v307 = vsel %vm305, %v248, 0
    %309 = vmatprep.subr.mxu0 0.0
    %310 = vmatpush1.msra.mxu0 %v247
    %311 = vmatprep.subr.mxu0 0.0
    %312 = vmatpush1.msra.mxu0 %v307
    %313 = vmatprep.subr.mxu0 0.0
    %314 = vmatpush1.msra.mxu0 0.0
    %315 = vmatprep.subr.mxu0 0.0
    %316 = vmatpush1.msra.mxu0 0.0
    %317 = vmatprep.subr.mxu0 0.0
    %318 = vmatpush1.msra.mxu0 0.0
    %319 = vmatprep.subr.mxu0 0.0
    %320 = vmatpush1.msra.mxu0 0.0
    %321 = vmatprep.subr.mxu0 0.0
    %322 = vmatpush1.msra.mxu0 0.0
    %323 = vmatprep.subr.mxu0 0.0
    %324 = vmatpush1.msra.mxu0 0.0
    %325 = vmatprep.subr.mxu0 0.0
    %326 = vmatpush1.msra.mxu0 0.0
    %327 = vmatprep.subr.mxu0 0.0
    %328 = vmatpush1.msra.mxu0 0.0
    %329 = vmatprep.subr.mxu0 0.0
    %330 = vmatpush1.msra.mxu0 0.0
    %331 = vmatprep.subr.mxu0 0.0
    %332 = vmatpush1.msra.mxu0 0.0
    %333 = vmatprep.subr.mxu0 0.0
    %334 = vmatpush1.msra.mxu0 0.0
    %335 = vmatprep.subr.mxu0 0.0
    %336 = vmatpush1.msra.mxu0 0.0
    %337 = vmatprep.subr.mxu0 0.0
    %338 = vmatpush1.msra.mxu0 0.0
    %339 = vmatprep.subr.mxu0 0.0
    %340 = vmatpush1.msra.mxu0 0.0
    %341 = vmatprep.subr.mxu0 0.0
    %342 = vmatpush1.msra.mxu0 0.0
    %343 = vmatprep.subr.mxu0 0.0
    %344 = vmatpush1.msra.mxu0 0.0
    %345 = vmatprep.subr.mxu0 0.0
    %346 = vmatpush1.msra.mxu0 0.0
    %347 = vmatprep.subr.mxu0 0.0
    %348 = vmatpush1.msra.mxu0 0.0
    %349 = vmatprep.subr.mxu0 0.0
    %350 = vmatpush1.msra.mxu0 0.0
    %351 = vmatprep.subr.mxu0 0.0
    %352 = vmatpush1.msra.mxu0 0.0
    %353 = vmatprep.subr.mxu0 0.0
    %354 = vmatpush1.msra.mxu0 0.0
    %355 = vmatprep.subr.mxu0 0.0
    %356 = vmatpush1.msra.mxu0 0.0
    %357 = vmatprep.subr.mxu0 0.0
    %358 = vmatpush1.msra.mxu0 0.0
    %359 = vmatprep.subr.mxu0 0.0
    %360 = vmatpush1.msra.mxu0 0.0
    %361 = vmatprep.subr.mxu0 0.0
    %362 = vmatpush1.msra.mxu0 0.0
    %363 = vmatprep.subr.mxu0 0.0
    %364 = vmatpush1.msra.mxu0 0.0
    %365 = vmatprep.subr.mxu0 0.0
    %366 = vmatpush1.msra.mxu0 0.0
    %367 = vmatprep.subr.mxu0 0.0
    %368 = vmatpush1.msra.mxu0 0.0
    %369 = vmatprep.subr.mxu0 0.0
    %370 = vmatpush1.msra.mxu0 0.0
    %371 = vmatprep.subr.mxu0 0.0
    %372 = vmatpush1.msra.mxu0 0.0
    %373 = vmatprep.mubr.f32.mxu0 0.0
    %374 = vmatmul.mubr.f32.gmra.mrb[0].mxu0 %v258
    %v375 = vpop.f32.mrb[0].mxu0
    %v376 = vadd.f32 %v254, %v375
    %v377 = vpop.f32.mrb[0].mxu0
    %378 = vmatprep.mubr.f32.mxu0 0.0
    %379 = vmatmul.mubr.f32.gmra.mrb[0].mxu0 %v261
    %v380 = vpop.f32.mrb[0].mxu0
    %v381 = vadd.f32 %v254, %v380
    %v382 = vpop.f32.mrb[0].mxu0
    %383 = vmatprep.mubr.f32.mxu0 0.0
    %384 = vmatmul.mubr.f32.gmra.mrb[0].mxu0 %v264
    %v385 = vpop.f32.mrb[0].mxu0
    %v386 = vadd.f32 %v254, %v385
    %v387 = vpop.f32.mrb[0].mxu0
    %388 = vmatprep.mubr.f32.mxu0 0.0
    %389 = vmatmul.mubr.f32.gmra.mrb[0].mxu0 %v267
    %v390 = vpop.f32.mrb[0].mxu0
    %v391 = vadd.f32 %v254, %v390
    %v392 = vpop.f32.mrb[0].mxu0
    %393 = vmatprep.mubr.f32.mxu0 0.0
    %394 = vmatmul.mubr.f32.gmra.mrb[0].mxu0 %v270
    %v395 = vpop.f32.mrb[0].mxu0
    %v396 = vadd.f32 %v254, %v395
    %v397 = vpop.f32.mrb[0].mxu0
    %398 = vmatprep.mubr.f32.mxu0 0.0
    %399 = vmatmul.mubr.f32.gmra.mrb[0].mxu0 %v273
    %v400 = vpop.f32.mrb[0].mxu0
    %v401 = vadd.f32 %v254, %v400
    %v402 = vpop.f32.mrb[0].mxu0
    %403 = vmatprep.mubr.f32.mxu0 0.0
    %404 = vmatmul.mubr.f32.gmra.mrb[0].mxu0 %v276
    %v405 = vpop.f32.mrb[0].mxu0
    %v406 = vadd.f32 %v254, %v405
    %v407 = vpop.f32.mrb[0].mxu0
    %408 = vmatprep.mubr.f32.mxu0 0.0
    %409 = vmatmul.mubr.f32.gmra.mrb[0].mxu0 %v279
    %v410 = vpop.f32.mrb[0].mxu0
    %v411 = vadd.f32 %v254, %v410
    %v412 = vpop.f32.mrb[0].mxu0
    %413 = vmatprep.mubr.f32.mxu0 0.0
    %414 = vmatmul.mubr.f32.gmra.mrb[0].mxu0 %v282
    %v415 = vpop.f32.mrb[0].mxu0
    %v416 = vadd.f32 %v254, %v415
    %v417 = vpop.f32.mrb[0].mxu0
    %418 = vmatprep.mubr.f32.mxu0 0.0
    %419 = vmatmul.mubr.f32.gmra.mrb[0].mxu0 %v285
    %v420 = vpop.f32.mrb[0].mxu0
    %v421 = vadd.f32 %v254, %v420
    %v422 = vpop.f32.mrb[0].mxu0
    %423 = vmatprep.mubr.f32.mxu0 0.0
    %424 = vmatmul.mubr.f32.gmra.mrb[0].mxu0 %v288
    %v425 = vpop.f32.mrb[0].mxu0
    %v426 = vadd.f32 %v254, %v425
    %v427 = vpop.f32.mrb[0].mxu0
    %428 = vmatprep.mubr.f32.mxu0 0.0
    %429 = vmatmul.mubr.f32.gmra.mrb[0].mxu0 %v291
    %v430 = vpop.f32.mrb[0].mxu0
    %v431 = vadd.f32 %v254, %v430
    %v432 = vpop.f32.mrb[0].mxu0
    %433 = vmatprep.mubr.f32.mxu0 0.0
    %434 = vmatmul.mubr.f32.gmra.mrb[0].mxu0 %v294
    %v435 = vpop.f32.mrb[0].mxu0
    %v436 = vadd.f32 %v254, %v435
    %v437 = vpop.f32.mrb[0].mxu0
    %438 = vmatprep.mubr.f32.mxu0 0.0
    %439 = vmatmul.mubr.f32.gmra.mrb[0].mxu0 %v297
    %v440 = vpop.f32.mrb[0].mxu0
    %v441 = vadd.f32 %v254, %v440
    %v442 = vpop.f32.mrb[0].mxu0
    %443 = vmatprep.mubr.f32.mxu0 0.0
    %444 = vmatmul.mubr.f32.gmra.mrb[0].mxu0 %v300
    %v445 = vpop.f32.mrb[0].mxu0
    %v446 = vadd.f32 %v254, %v445
    %v447 = vpop.f32.mrb[0].mxu0
    %448 = vmatprep.mubr.f32.mxu0 0.0
    %449 = vmatmul.mubr.f32.gmra.mrb[0].mxu0 %v303
    %v450 = vpop.f32.mrb[0].mxu0
    %v451 = vadd.f32 %v254, %v450
    %v452 = vpop.f32.mrb[0].mxu0
    %453 = vdwg.mxu0
    %v454 = vmax.f32 %v376, 0.0
    %v455 = vmax.f32 %v381, 0.0
    %v456 = vmax.f32 %v386, 0.0
    %v457 = vmax.f32 %v391, 0.0
    %v458 = vmax.f32 %v396, 0.0
    %v459 = vmax.f32 %v401, 0.0
    %v460 = vmax.f32 %v406, 0.0
    %v461 = vmax.f32 %v411, 0.0
    %v462 = vmax.f32 %v416, 0.0
    %v463 = vmax.f32 %v421, 0.0
    %v464 = vmax.f32 %v426, 0.0
    %v465 = vmax.f32 %v431, 0.0
    %v466 = vmax.f32 %v436, 0.0
    %v467 = vmax.f32 %v441, 0.0
    %v468 = vmax.f32 %v446, 0.0
    %v469 = vmax.f32 %v451, 0.0
    %v470 = vld [vmem:[%s8] sm:$0xff]
    %v471 = vld [vmem:[%s8 + $0x8] sm:$0xff]
    %v472 = vld [vmem:[%s8 + $0x10] sm:$0xff]
    %v473 = vld [vmem:[%s8 + $0x18] sm:$0xff]
    %v474 = vld [vmem:[%s8 + $0x20] sm:$0xff]
    %v475 = vld [vmem:[%s8 + $0x28] sm:$0xff]
    %v476 = vld [vmem:[%s8 + $0x30] sm:$0xff]
    %v477 = vld [vmem:[%s8 + $0x38] sm:$0xff]
    %v478 = vld [vmem:[%s8 + $0x40] sm:$0xff]
    %v479 = vld [vmem:[%s8 + $0x48] sm:$0xff]
    %v480 = vld [vmem:[%s8 + $0x50] sm:$0xff]
    %v481 = vld [vmem:[%s8 + $0x58] sm:$0xff]
    %v482 = vld [vmem:[%s8 + $0x60] sm:$0xff]
    %v483 = vld [vmem:[%s8 + $0x68] sm:$0xff]
    %v484 = vld [vmem:[%s8 + $0x70] sm:$0xff]
    %v485 = vld [vmem:[%s8 + $0x78] sm:$0xff]
    %v486 = vld [vmem:[%s8 + $0x80] sm:$0xff]
    %v487 = vld [vmem:[%s8 + $0x88] sm:$0xff]
    %v488 = vld [vmem:[%s10] sm:$0x1]
    %vm489 = vcmask 523264
    %v491 = vsel %vm489, %v470, 0
    %v494 = vsel %vm489, %v471, 0
    %v497 = vsel %vm489, %v472, 0
    %v500 = vsel %vm489, %v473, 0
    %v503 = vsel %vm489, %v474, 0
    %v506 = vsel %vm489, %v475, 0
    %v509 = vsel %vm489, %v476, 0
    %v512 = vsel %vm489, %v477, 0
    %v515 = vsel %vm489, %v478, 0
    %v518 = vsel %vm489, %v479, 0
    %v521 = vsel %vm489, %v480, 0
    %v524 = vsel %vm489, %v481, 0
    %v527 = vsel %vm489, %v482, 0
    %v530 = vsel %vm489, %v483, 0
    %v533 = vsel %vm489, %v484, 0
    %v536 = vsel %vm489, %v485, 0
    %v539 = vsel %vm489, %v486, 0
    %v542 = vsel %vm489, %v487, 0
    %544 = vmatprep.subr.mxu0 0.0
    %545 = vmatpush1.msra.mxu0 %v454
    %546 = vmatprep.subr.mxu0 0.0
    %547 = vmatpush1.msra.mxu0 %v455
    %548 = vmatprep.subr.mxu0 0.0
    %549 = vmatpush1.msra.mxu0 %v456
    %550 = vmatprep.subr.mxu0 0.0
    %551 = vmatpush1.msra.mxu0 %v457
    %552 = vmatprep.subr.mxu0 0.0
    %553 = vmatpush1.msra.mxu0 %v458
    %554 = vmatprep.subr.mxu0 0.0
    %555 = vmatpush1.msra.mxu0 %v459
    %556 = vmatprep.subr.mxu0 0.0
    %557 = vmatpush1.msra.mxu0 %v460
    %558 = vmatprep.subr.mxu0 0.0
    %559 = vmatpush1.msra.mxu0 %v461
    %560 = vmatprep.subr.mxu0 0.0
    %561 = vmatpush1.msra.mxu0 0.0
    %562 = vmatprep.subr.mxu0 0.0
    %563 = vmatpush1.msra.mxu0 0.0
    %564 = vmatprep.subr.mxu0 0.0
    %565 = vmatpush1.msra.mxu0 0.0
    %566 = vmatprep.subr.mxu0 0.0
    %567 = vmatpush1.msra.mxu0 0.0
    %568 = vmatprep.subr.mxu0 0.0
    %569 = vmatpush1.msra.mxu0 0.0
    %570 = vmatprep.subr.mxu0 0.0
    %571 = vmatpush1.msra.mxu0 0.0
    %572 = vmatprep.subr.mxu0 0.0
    %573 = vmatpush1.msra.mxu0 0.0
    %574 = vmatprep.subr.mxu0 0.0
    %575 = vmatpush1.msra.mxu0 0.0
    %576 = vmatprep.subr.mxu0 0.0
    %577 = vmatpush1.msra.mxu0 0.0
    %578 = vmatprep.subr.mxu0 0.0
    %579 = vmatpush1.msra.mxu0 0.0
    %580 = vmatprep.subr.mxu0 0.0
    %581 = vmatpush1.msra.mxu0 0.0
    %582 = vmatprep.subr.mxu0 0.0
    %583 = vmatpush1.msra.mxu0 0.0
    %584 = vmatprep.subr.mxu0 0.0
    %585 = vmatpush1.msra.mxu0 0.0
    %586 = vmatprep.subr.mxu0 0.0
    %587 = vmatpush1.msra.mxu0 0.0
    %588 = vmatprep.subr.mxu0 0.0
    %589 = vmatpush1.msra.mxu0 0.0
    %590 = vmatprep.subr.mxu0 0.0
    %591 = vmatpush1.msra.mxu0 0.0
    %592 = vmatprep.subr.mxu0 0.0
    %593 = vmatpush1.msra.mxu0 0.0
    %594 = vmatprep.subr.mxu0 0.0
    %595 = vmatpush1.msra.mxu0 0.0
    %596 = vmatprep.subr.mxu0 0.0
    %597 = vmatpush1.msra.mxu0 0.0
    %598 = vmatprep.subr.mxu0 0.0
    %599 = vmatpush1.msra.mxu0 0.0
    %600 = vmatprep.subr.mxu0 0.0
    %601 = vmatpush1.msra.mxu0 0.0
    %602 = vmatprep.subr.mxu0 0.0
    %603 = vmatpush1.msra.mxu0 0.0
    %604 = vmatprep.subr.mxu0 0.0
    %605 = vmatpush1.msra.mxu0 0.0
    %606 = vmatprep.subr.mxu0 0.0
    %607 = vmatpush1.msra.mxu0 0.0
    %608 = vmatprep.mubr.f32.mxu0 0.0
    %609 = vmatmul.mubr.f32.gmra.mrb[0].mxu0 %v491
    %v610 = vpop.f32.mrb[0].mxu0
    %v611 = vadd.f32 0.0, %v610
    %v612 = vpop.f32.mrb[0].mxu0
    %613 = vmatprep.mubr.f32.mxu0 0.0
    %614 = vmatmul.mubr.f32.gmra.mrb[0].mxu0 %v494
    %v615 = vpop.f32.mrb[0].mxu0
    %v616 = vadd.f32 0.0, %v615
    %v617 = vpop.f32.mrb[0].mxu0
    %618 = vmatprep.mubr.f32.mxu0 0.0
    %619 = vmatmul.mubr.f32.gmra.mrb[0].mxu0 %v497
    %v620 = vpop.f32.mrb[0].mxu0
    %v621 = vadd.f32 0.0, %v620
    %v622 = vpop.f32.mrb[0].mxu0
    %623 = vmatprep.mubr.f32.mxu0 0.0
    %624 = vmatmul.mubr.f32.gmra.mrb[0].mxu0 %v500
    %v625 = vpop.f32.mrb[0].mxu0
    %v626 = vadd.f32 0.0, %v625
    %v627 = vpop.f32.mrb[0].mxu0
    %628 = vmatprep.mubr.f32.mxu0 0.0
    %629 = vmatmul.mubr.f32.gmra.mrb[0].mxu0 %v503
    %v630 = vpop.f32.mrb[0].mxu0
    %v631 = vadd.f32 0.0, %v630
    %v632 = vpop.f32.mrb[0].mxu0
    %633 = vmatprep.mubr.f32.mxu0 0.0
    %634 = vmatmul.mubr.f32.gmra.mrb[0].mxu0 %v506
    %v635 = vpop.f32.mrb[0].mxu0
    %v636 = vadd.f32 0.0, %v635
    %v637 = vpop.f32.mrb[0].mxu0
    %638 = vmatprep.mubr.f32.mxu0 0.0
    %639 = vmatmul.mubr.f32.gmra.mrb[0].mxu0 %v509
    %v640 = vpop.f32.mrb[0].mxu0
    %v641 = vadd.f32 0.0, %v640
    %v642 = vpop.f32.mrb[0].mxu0
    %643 = vmatprep.mubr.f32.mxu0 0.0
    %644 = vmatmul.mubr.f32.gmra.mrb[0].mxu0 %v512
    %v645 = vpop.f32.mrb[0].mxu0
    %v646 = vadd.f32 0.0, %v645
    %v647 = vpop.f32.mrb[0].mxu0
    %648 = vmatprep.mubr.f32.mxu0 0.0
    %649 = vmatmul.mubr.f32.gmra.mrb[0].mxu0 %v515
    %v650 = vpop.f32.mrb[0].mxu0
    %v651 = vadd.f32 0.0, %v650
    %v652 = vpop.f32.mrb[0].mxu0
    %653 = vmatprep.mubr.f32.mxu0 0.0
    %654 = vmatmul.mubr.f32.gmra.mrb[0].mxu0 %v518
    %v655 = vpop.f32.mrb[0].mxu0
    %v656 = vadd.f32 0.0, %v655
    %v657 = vpop.f32.mrb[0].mxu0
    %658 = vmatprep.mubr.f32.mxu0 0.0
    %659 = vmatmul.mubr.f32.gmra.mrb[0].mxu0 %v521
    %v660 = vpop.f32.mrb[0].mxu0
    %v661 = vadd.f32 0.0, %v660
    %v662 = vpop.f32.mrb[0].mxu0
    %663 = vmatprep.mubr.f32.mxu0 0.0
    %664 = vmatmul.mubr.f32.gmra.mrb[0].mxu0 %v524
    %v665 = vpop.f32.mrb[0].mxu0
    %v666 = vadd.f32 0.0, %v665
    %v667 = vpop.f32.mrb[0].mxu0
    %668 = vmatprep.mubr.f32.mxu0 0.0
    %669 = vmatmul.mubr.f32.gmra.mrb[0].mxu0 %v527
    %v670 = vpop.f32.mrb[0].mxu0
    %v671 = vadd.f32 0.0, %v670
    %v672 = vpop.f32.mrb[0].mxu0
    %673 = vmatprep.mubr.f32.mxu0 0.0
    %674 = vmatmul.mubr.f32.gmra.mrb[0].mxu0 %v530
    %v675 = vpop.f32.mrb[0].mxu0
    %v676 = vadd.f32 0.0, %v675
    %v677 = vpop.f32.mrb[0].mxu0
    %678 = vmatprep.mubr.f32.mxu0 0.0
    %679 = vmatmul.mubr.f32.gmra.mrb[0].mxu0 %v533
    %v680 = vpop.f32.mrb[0].mxu0
    %v681 = vadd.f32 0.0, %v680
    %v682 = vpop.f32.mrb[0].mxu0
    %683 = vmatprep.mubr.f32.mxu0 0.0
    %684 = vmatmul.mubr.f32.gmra.mrb[0].mxu0 %v536
    %v685 = vpop.f32.mrb[0].mxu0
    %v686 = vadd.f32 0.0, %v685
    %v687 = vpop.f32.mrb[0].mxu0
    %688 = vmatprep.mubr.f32.mxu0 0.0
    %689 = vmatmul.mubr.f32.gmra.mrb[0].mxu0 %v539
    %v690 = vpop.f32.mrb[0].mxu0
    %v691 = vadd.f32 0.0, %v690
    %v692 = vpop.f32.mrb[0].mxu0
    %693 = vmatprep.mubr.f32.mxu0 0.0
    %694 = vmatmul.mubr.f32.gmra.mrb[0].mxu0 %v542
    %v695 = vpop.f32.mrb[0].mxu0
    %v696 = vadd.f32 0.0, %v695
    %v697 = vpop.f32.mrb[0].mxu0
    %698 = vdwg.mxu0
    %v699 = vld [vmem:[%s9] sm:$0xff]
    %v700 = vld [vmem:[%s9 + $0x8] sm:$0xff]
    %v701 = vld [vmem:[%s9 + $0x10] sm:$0xff]
    %v702 = vld [vmem:[%s9 + $0x18] sm:$0xff]
    %s703 = scalar_lea.vmem %s9, 32
    %v704 = vld [vmem:[%s703] sm:$0xff]
    %v705 = vld [vmem:[%s703 + $0x8] sm:$0xff]
    %v706 = vld [vmem:[%s703 + $0x10] sm:$0xff]
    %v707 = vld [vmem:[%s703 + $0x18] sm:$0xff]
    %v709 = vsel %vm157, %v621, 0
    %v712 = vsel %vm157, %v626, 0
    %714 = vmatprep.subr.mxu0 0.0
    %715 = vmatpush1.msra.mxu0 %v704
    %716 = vmatprep.subr.mxu0 0.0
    %717 = vmatpush1.msra.mxu0 %v705
    %718 = vmatprep.subr.mxu0 0.0
    %719 = vmatpush1.msra.mxu0 %v706
    %720 = vmatprep.subr.mxu0 0.0
    %721 = vmatpush1.msra.mxu0 %v707
    %722 = vmatprep.subr.mxu0 0.0
    %723 = vmatpush1.msra.mxu0 0.0
    %724 = vmatprep.subr.mxu0 0.0
    %725 = vmatpush1.msra.mxu0 0.0
    %726 = vmatprep.subr.mxu0 0.0
    %727 = vmatpush1.msra.mxu0 0.0
    %728 = vmatprep.subr.mxu0 0.0
    %729 = vmatpush1.msra.mxu0 0.0
    %730 = vmatprep.subr.mxu0 0.0
    %731 = vmatpush1.msra.mxu0 0.0
    %732 = vmatprep.subr.mxu0 0.0
    %733 = vmatpush1.msra.mxu0 0.0
    %734 = vmatprep.subr.mxu0 0.0
    %735 = vmatpush1.msra.mxu0 0.0
    %736 = vmatprep.subr.mxu0 0.0
    %737 = vmatpush1.msra.mxu0 0.0
    %738 = vmatprep.subr.mxu0 0.0
    %739 = vmatpush1.msra.mxu0 0.0
    %740 = vmatprep.subr.mxu0 0.0
    %741 = vmatpush1.msra.mxu0 0.0
    %742 = vmatprep.subr.mxu0 0.0
    %743 = vmatpush1.msra.mxu0 0.0
    %744 = vmatprep.subr.mxu0 0.0
    %745 = vmatpush1.msra.mxu0 0.0
    %746 = vmatprep.subr.mxu0 0.0
    %747 = vmatpush1.msra.mxu0 0.0
    %748 = vmatprep.subr.mxu0 0.0
    %749 = vmatpush1.msra.mxu0 0.0
    %750 = vmatprep.subr.mxu0 0.0
    %751 = vmatpush1.msra.mxu0 0.0
    %752 = vmatprep.subr.mxu0 0.0
    %753 = vmatpush1.msra.mxu0 0.0
    %754 = vmatprep.subr.mxu0 0.0
    %755 = vmatpush1.msra.mxu0 0.0
    %756 = vmatprep.subr.mxu0 0.0
    %757 = vmatpush1.msra.mxu0 0.0
    %758 = vmatprep.subr.mxu0 0.0
    %759 = vmatpush1.msra.mxu0 0.0
    %760 = vmatprep.subr.mxu0 0.0
    %761 = vmatpush1.msra.mxu0 0.0
    %762 = vmatprep.subr.mxu0 0.0
    %763 = vmatpush1.msra.mxu0 0.0
    %764 = vmatprep.subr.mxu0 0.0
    %765 = vmatpush1.msra.mxu0 0.0
    %766 = vmatprep.subr.mxu0 0.0
    %767 = vmatpush1.msra.mxu0 0.0
    %768 = vmatprep.subr.mxu0 0.0
    %769 = vmatpush1.msra.mxu0 0.0
    %770 = vmatprep.subr.mxu0 0.0
    %771 = vmatpush1.msra.mxu0 0.0
    %772 = vmatprep.subr.mxu0 0.0
    %773 = vmatpush1.msra.mxu0 0.0
    %774 = vmatprep.subr.mxu0 0.0
    %775 = vmatpush1.msra.mxu0 0.0
    %776 = vmatprep.subr.mxu0 0.0
    %777 = vmatpush1.msra.mxu0 0.0
    %778 = vmatprep.mubr.f32.mxu0 0.0
    %779 = vmatmul.mubr.f32.gmra.mrb[0].mxu0 %v709
    %v780 = vpop.f32.mrb[0].mxu0
    %v781 = vadd.f32 0.0, %v780
    %v782 = vpop.f32.mrb[0].mxu0
    %783 = vmatprep.mubr.f32.mxu0 0.0
    %784 = vmatmul.mubr.f32.gmra.mrb[0].mxu0 %v712
    %v785 = vpop.f32.mrb[0].mxu0
    %v786 = vadd.f32 0.0, %v785
    %v787 = vpop.f32.mrb[0].mxu0
    %788 = vdwg.mxu0
    %v790 = vsel %vm157, %v611, 0
    %v793 = vsel %vm157, %v616, 0
    %795 = vmatprep.subr.mxu0 0.0
    %796 = vmatpush1.msra.mxu0 %v699
    %797 = vmatprep.subr.mxu0 0.0
    %798 = vmatpush1.msra.mxu0 %v700
    %799 = vmatprep.subr.mxu0 0.0
    %800 = vmatpush1.msra.mxu0 %v701
    %801 = vmatprep.subr.mxu0 0.0
    %802 = vmatpush1.msra.mxu0 %v702
    %803 = vmatprep.subr.mxu0 0.0
    %804 = vmatpush1.msra.mxu0 0.0
    %805 = vmatprep.subr.mxu0 0.0
    %806 = vmatpush1.msra.mxu0 0.0
    %807 = vmatprep.subr.mxu0 0.0
    %808 = vmatpush1.msra.mxu0 0.0
    %809 = vmatprep.subr.mxu0 0.0
    %810 = vmatpush1.msra.mxu0 0.0
    %811 = vmatprep.subr.mxu0 0.0
    %812 = vmatpush1.msra.mxu0 0.0
    %813 = vmatprep.subr.mxu0 0.0
    %814 = vmatpush1.msra.mxu0 0.0
    %815 = vmatprep.subr.mxu0 0.0
    %816 = vmatpush1.msra.mxu0 0.0
    %817 = vmatprep.subr.mxu0 0.0
    %818 = vmatpush1.msra.mxu0 0.0
    %819 = vmatprep.subr.mxu0 0.0
    %820 = vmatpush1.msra.mxu0 0.0
    %821 = vmatprep.subr.mxu0 0.0
    %822 = vmatpush1.msra.mxu0 0.0
    %823 = vmatprep.subr.mxu0 0.0
    %824 = vmatpush1.msra.mxu0 0.0
    %825 = vmatprep.subr.mxu0 0.0
    %826 = vmatpush1.msra.mxu0 0.0
    %827 = vmatprep.subr.mxu0 0.0
    %828 = vmatpush1.msra.mxu0 0.0
    %829 = vmatprep.subr.mxu0 0.0
    %830 = vmatpush1.msra.mxu0 0.0
    %831 = vmatprep.subr.mxu0 0.0
    %832 = vmatpush1.msra.mxu0 0.0
    %833 = vmatprep.subr.mxu0 0.0
    %834 = vmatpush1.msra.mxu0 0.0
    %835 = vmatprep.subr.mxu0 0.0
    %836 = vmatpush1.msra.mxu0 0.0
    %837 = vmatprep.subr.mxu0 0.0
    %838 = vmatpush1.msra.mxu0 0.0
    %839 = vmatprep.subr.mxu0 0.0
    %840 = vmatpush1.msra.mxu0 0.0
    %841 = vmatprep.subr.mxu0 0.0
    %842 = vmatpush1.msra.mxu0 0.0
    %843 = vmatprep.subr.mxu0 0.0
    %844 = vmatpush1.msra.mxu0 0.0
    %845 = vmatprep.subr.mxu0 0.0
    %846 = vmatpush1.msra.mxu0 0.0
    %847 = vmatprep.subr.mxu0 0.0
    %848 = vmatpush1.msra.mxu0 0.0
    %849 = vmatprep.subr.mxu0 0.0
    %850 = vmatpush1.msra.mxu0 0.0
    %851 = vmatprep.subr.mxu0 0.0
    %852 = vmatpush1.msra.mxu0 0.0
    %853 = vmatprep.subr.mxu0 0.0
    %854 = vmatpush1.msra.mxu0 0.0
    %855 = vmatprep.subr.mxu0 0.0
    %856 = vmatpush1.msra.mxu0 0.0
    %857 = vmatprep.subr.mxu0 0.0
    %858 = vmatpush1.msra.mxu0 0.0
    %859 = vmatprep.mubr.f32.mxu0 0.0
    %860 = vmatmul.mubr.f32.gmra.mrb[0].mxu0 %v790
    %v861 = vpop.f32.mrb[0].mxu0
    %v862 = vadd.f32 %v781, %v861
    %v863 = vpop.f32.mrb[0].mxu0
    %864 = vmatprep.mubr.f32.mxu0 0.0
    %865 = vmatmul.mubr.f32.gmra.mrb[0].mxu0 %v793
    %v866 = vpop.f32.mrb[0].mxu0
    %v867 = vadd.f32 %v786, %v866
    %v868 = vpop.f32.mrb[0].mxu0
    %869 = vdwg.mxu0
    %s870 = scalar_lea.vmem %s9, 64
    %v871 = vld [vmem:[%s870] sm:$0xff]
    %v872 = vld [vmem:[%s870 + $0x8] sm:$0xff]
    %v873 = vld [vmem:[%s870 + $0x10] sm:$0xff]
    %v874 = vld [vmem:[%s870 + $0x18] sm:$0xff]
    %v876 = vsel %vm157, %v631, 0
    %v879 = vsel %vm157, %v636, 0
    %881 = vmatprep.subr.mxu0 0.0
    %882 = vmatpush1.msra.mxu0 %v871
    %883 = vmatprep.subr.mxu0 0.0
    %884 = vmatpush1.msra.mxu0 %v872
    %885 = vmatprep.subr.mxu0 0.0
    %886 = vmatpush1.msra.mxu0 %v873
    %887 = vmatprep.subr.mxu0 0.0
    %888 = vmatpush1.msra.mxu0 %v874
    %889 = vmatprep.subr.mxu0 0.0
    %890 = vmatpush1.msra.mxu0 0.0
    %891 = vmatprep.subr.mxu0 0.0
    %892 = vmatpush1.msra.mxu0 0.0
    %893 = vmatprep.subr.mxu0 0.0
    %894 = vmatpush1.msra.mxu0 0.0
    %895 = vmatprep.subr.mxu0 0.0
    %896 = vmatpush1.msra.mxu0 0.0
    %897 = vmatprep.subr.mxu0 0.0
    %898 = vmatpush1.msra.mxu0 0.0
    %899 = vmatprep.subr.mxu0 0.0
    %900 = vmatpush1.msra.mxu0 0.0
    %901 = vmatprep.subr.mxu0 0.0
    %902 = vmatpush1.msra.mxu0 0.0
    %903 = vmatprep.subr.mxu0 0.0
    %904 = vmatpush1.msra.mxu0 0.0
    %905 = vmatprep.subr.mxu0 0.0
    %906 = vmatpush1.msra.mxu0 0.0
    %907 = vmatprep.subr.mxu0 0.0
    %908 = vmatpush1.msra.mxu0 0.0
    %909 = vmatprep.subr.mxu0 0.0
    %910 = vmatpush1.msra.mxu0 0.0
    %911 = vmatprep.subr.mxu0 0.0
    %912 = vmatpush1.msra.mxu0 0.0
    %913 = vmatprep.subr.mxu0 0.0
    %914 = vmatpush1.msra.mxu0 0.0
    %915 = vmatprep.subr.mxu0 0.0
    %916 = vmatpush1.msra.mxu0 0.0
    %917 = vmatprep.subr.mxu0 0.0
    %918 = vmatpush1.msra.mxu0 0.0
    %919 = vmatprep.subr.mxu0 0.0
    %920 = vmatpush1.msra.mxu0 0.0
    %921 = vmatprep.subr.mxu0 0.0
    %922 = vmatpush1.msra.mxu0 0.0
    %923 = vmatprep.subr.mxu0 0.0
    %924 = vmatpush1.msra.mxu0 0.0
    %925 = vmatprep.subr.mxu0 0.0
    %926 = vmatpush1.msra.mxu0 0.0
    %927 = vmatprep.subr.mxu0 0.0
    %928 = vmatpush1.msra.mxu0 0.0
    %929 = vmatprep.subr.mxu0 0.0
    %930 = vmatpush1.msra.mxu0 0.0
    %931 = vmatprep.subr.mxu0 0.0
    %932 = vmatpush1.msra.mxu0 0.0
    %933 = vmatprep.subr.mxu0 0.0
    %934 = vmatpush1.msra.mxu0 0.0
    %935 = vmatprep.subr.mxu0 0.0
    %936 = vmatpush1.msra.mxu0 0.0
    %937 = vmatprep.subr.mxu0 0.0
    %938 = vmatpush1.msra.mxu0 0.0
    %939 = vmatprep.subr.mxu0 0.0
    %940 = vmatpush1.msra.mxu0 0.0
    %941 = vmatprep.subr.mxu0 0.0
    %942 = vmatpush1.msra.mxu0 0.0
    %943 = vmatprep.subr.mxu0 0.0
    %944 = vmatpush1.msra.mxu0 0.0
    %945 = vmatprep.mubr.f32.mxu0 0.0
    %946 = vmatmul.mubr.f32.gmra.mrb[0].mxu0 %v876
    %v947 = vpop.f32.mrb[0].mxu0
    %v948 = vadd.f32 0.0, %v947
    %v949 = vpop.f32.mrb[0].mxu0
    %950 = vmatprep.mubr.f32.mxu0 0.0
    %951 = vmatmul.mubr.f32.gmra.mrb[0].mxu0 %v879
    %v952 = vpop.f32.mrb[0].mxu0
    %v953 = vadd.f32 0.0, %v952
    %v954 = vpop.f32.mrb[0].mxu0
    %955 = vdwg.mxu0
    %v956 = vadd.f32 %v862, %v948
    %v957 = vadd.f32 %v867, %v953
    %s958 = scalar_lea.vmem %s9, 96
    %v959 = vld [vmem:[%s958] sm:$0xff]
    %v960 = vld [vmem:[%s958 + $0x8] sm:$0xff]
    %v961 = vld [vmem:[%s958 + $0x10] sm:$0xff]
    %v962 = vld [vmem:[%s958 + $0x18] sm:$0xff]
    %v964 = vsel %vm157, %v641, 0
    %v967 = vsel %vm157, %v646, 0
    %969 = vmatprep.subr.mxu0 0.0
    %970 = vmatpush1.msra.mxu0 %v959
    %971 = vmatprep.subr.mxu0 0.0
    %972 = vmatpush1.msra.mxu0 %v960
    %973 = vmatprep.subr.mxu0 0.0
    %974 = vmatpush1.msra.mxu0 %v961
    %975 = vmatprep.subr.mxu0 0.0
    %976 = vmatpush1.msra.mxu0 %v962
    %977 = vmatprep.subr.mxu0 0.0
    %978 = vmatpush1.msra.mxu0 0.0
    %979 = vmatprep.subr.mxu0 0.0
    %980 = vmatpush1.msra.mxu0 0.0
    %981 = vmatprep.subr.mxu0 0.0
    %982 = vmatpush1.msra.mxu0 0.0
    %983 = vmatprep.subr.mxu0 0.0
    %984 = vmatpush1.msra.mxu0 0.0
    %985 = vmatprep.subr.mxu0 0.0
    %986 = vmatpush1.msra.mxu0 0.0
    %987 = vmatprep.subr.mxu0 0.0
    %988 = vmatpush1.msra.mxu0 0.0
    %989 = vmatprep.subr.mxu0 0.0
    %990 = vmatpush1.msra.mxu0 0.0
    %991 = vmatprep.subr.mxu0 0.0
    %992 = vmatpush1.msra.mxu0 0.0
    %993 = vmatprep.subr.mxu0 0.0
    %994 = vmatpush1.msra.mxu0 0.0
    %995 = vmatprep.subr.mxu0 0.0
    %996 = vmatpush1.msra.mxu0 0.0
    %997 = vmatprep.subr.mxu0 0.0
    %998 = vmatpush1.msra.mxu0 0.0
    %999 = vmatprep.subr.mxu0 0.0
    %1000 = vmatpush1.msra.mxu0 0.0
    %1001 = vmatprep.subr.mxu0 0.0
    %1002 = vmatpush1.msra.mxu0 0.0
    %1003 = vmatprep.subr.mxu0 0.0
    %1004 = vmatpush1.msra.mxu0 0.0
    %1005 = vmatprep.subr.mxu0 0.0
    %1006 = vmatpush1.msra.mxu0 0.0
    %1007 = vmatprep.subr.mxu0 0.0
    %1008 = vmatpush1.msra.mxu0 0.0
    %1009 = vmatprep.subr.mxu0 0.0
    %1010 = vmatpush1.msra.mxu0 0.0
    %1011 = vmatprep.subr.mxu0 0.0
    %1012 = vmatpush1.msra.mxu0 0.0
    %1013 = vmatprep.subr.mxu0 0.0
    %1014 = vmatpush1.msra.mxu0 0.0
    %1015 = vmatprep.subr.mxu0 0.0
    %1016 = vmatpush1.msra.mxu0 0.0
    %1017 = vmatprep.subr.mxu0 0.0
    %1018 = vmatpush1.msra.mxu0 0.0
    %1019 = vmatprep.subr.mxu0 0.0
    %1020 = vmatpush1.msra.mxu0 0.0
    %1021 = vmatprep.subr.mxu0 0.0
    %1022 = vmatpush1.msra.mxu0 0.0
    %1023 = vmatprep.subr.mxu0 0.0
    %1024 = vmatpush1.msra.mxu0 0.0
    %1025 = vmatprep.subr.mxu0 0.0
    %1026 = vmatpush1.msra.mxu0 0.0
    %1027 = vmatprep.subr.mxu0 0.0
    %1028 = vmatpush1.msra.mxu0 0.0
    %1029 = vmatprep.subr.mxu0 0.0
    %1030 = vmatpush1.msra.mxu0 0.0
    %1031 = vmatprep.subr.mxu0 0.0
    %1032 = vmatpush1.msra.mxu0 0.0
    %1033 = vmatprep.mubr.f32.mxu0 0.0
    %1034 = vmatmul.mubr.f32.gmra.mrb[0].mxu0 %v964
    %v1035 = vpop.f32.mrb[0].mxu0
    %v1036 = vadd.f32 0.0, %v1035
    %v1037 = vpop.f32.mrb[0].mxu0
    %1038 = vmatprep.mubr.f32.mxu0 0.0
    %1039 = vmatmul.mubr.f32.gmra.mrb[0].mxu0 %v967
    %v1040 = vpop.f32.mrb[0].mxu0
    %v1041 = vadd.f32 0.0, %v1040
    %v1042 = vpop.f32.mrb[0].mxu0
    %1043 = vdwg.mxu0
    %v1044 = vadd.f32 %v956, %v1036
    %v1045 = vadd.f32 %v957, %v1041
    %s1046 = scalar_lea.vmem %s9, 128
    %v1047 = vld [vmem:[%s1046] sm:$0xff]
    %v1048 = vld [vmem:[%s1046 + $0x8] sm:$0xff]
    %v1049 = vld [vmem:[%s1046 + $0x10] sm:$0xff]
    %v1050 = vld [vmem:[%s1046 + $0x18] sm:$0xff]
    %v1052 = vsel %vm157, %v651, 0
    %v1055 = vsel %vm157, %v656, 0
    %1057 = vmatprep.subr.mxu0 0.0
    %1058 = vmatpush1.msra.mxu0 %v1047
    %1059 = vmatprep.subr.mxu0 0.0
    %1060 = vmatpush1.msra.mxu0 %v1048
    %1061 = vmatprep.subr.mxu0 0.0
    %1062 = vmatpush1.msra.mxu0 %v1049
    %1063 = vmatprep.subr.mxu0 0.0
    %1064 = vmatpush1.msra.mxu0 %v1050
    %1065 = vmatprep.subr.mxu0 0.0
    %1066 = vmatpush1.msra.mxu0 0.0
    %1067 = vmatprep.subr.mxu0 0.0
    %1068 = vmatpush1.msra.mxu0 0.0
    %1069 = vmatprep.subr.mxu0 0.0
    %1070 = vmatpush1.msra.mxu0 0.0
    %1071 = vmatprep.subr.mxu0 0.0
    %1072 = vmatpush1.msra.mxu0 0.0
    %1073 = vmatprep.subr.mxu0 0.0
    %1074 = vmatpush1.msra.mxu0 0.0
    %1075 = vmatprep.subr.mxu0 0.0
    %1076 = vmatpush1.msra.mxu0 0.0
    %1077 = vmatprep.subr.mxu0 0.0
    %1078 = vmatpush1.msra.mxu0 0.0
    %1079 = vmatprep.subr.mxu0 0.0
    %1080 = vmatpush1.msra.mxu0 0.0
    %1081 = vmatprep.subr.mxu0 0.0
    %1082 = vmatpush1.msra.mxu0 0.0
    %1083 = vmatprep.subr.mxu0 0.0
    %1084 = vmatpush1.msra.mxu0 0.0
    %1085 = vmatprep.subr.mxu0 0.0
    %1086 = vmatpush1.msra.mxu0 0.0
    %1087 = vmatprep.subr.mxu0 0.0
    %1088 = vmatpush1.msra.mxu0 0.0
    %1089 = vmatprep.subr.mxu0 0.0
    %1090 = vmatpush1.msra.mxu0 0.0
    %1091 = vmatprep.subr.mxu0 0.0
    %1092 = vmatpush1.msra.mxu0 0.0
    %1093 = vmatprep.subr.mxu0 0.0
    %1094 = vmatpush1.msra.mxu0 0.0
    %1095 = vmatprep.subr.mxu0 0.0
    %1096 = vmatpush1.msra.mxu0 0.0
    %1097 = vmatprep.subr.mxu0 0.0
    %1098 = vmatpush1.msra.mxu0 0.0
    %1099 = vmatprep.subr.mxu0 0.0
    %1100 = vmatpush1.msra.mxu0 0.0
    %1101 = vmatprep.subr.mxu0 0.0
    %1102 = vmatpush1.msra.mxu0 0.0
    %1103 = vmatprep.subr.mxu0 0.0
    %1104 = vmatpush1.msra.mxu0 0.0
    %1105 = vmatprep.subr.mxu0 0.0
    %1106 = vmatpush1.msra.mxu0 0.0
    %1107 = vmatprep.subr.mxu0 0.0
    %1108 = vmatpush1.msra.mxu0 0.0
    %1109 = vmatprep.subr.mxu0 0.0
    %1110 = vmatpush1.msra.mxu0 0.0
    %1111 = vmatprep.subr.mxu0 0.0
    %1112 = vmatpush1.msra.mxu0 0.0
    %1113 = vmatprep.subr.mxu0 0.0
    %1114 = vmatpush1.msra.mxu0 0.0
    %1115 = vmatprep.subr.mxu0 0.0
    %1116 = vmatpush1.msra.mxu0 0.0
    %1117 = vmatprep.subr.mxu0 0.0
    %1118 = vmatpush1.msra.mxu0 0.0
    %1119 = vmatprep.subr.mxu0 0.0
    %1120 = vmatpush1.msra.mxu0 0.0
    %1121 = vmatprep.mubr.f32.mxu0 0.0
    %1122 = vmatmul.mubr.f32.gmra.mrb[0].mxu0 %v1052
    %v1123 = vpop.f32.mrb[0].mxu0
    %v1124 = vadd.f32 0.0, %v1123
    %v1125 = vpop.f32.mrb[0].mxu0
    %1126 = vmatprep.mubr.f32.mxu0 0.0
    %1127 = vmatmul.mubr.f32.gmra.mrb[0].mxu0 %v1055
    %v1128 = vpop.f32.mrb[0].mxu0
    %v1129 = vadd.f32 0.0, %v1128
    %v1130 = vpop.f32.mrb[0].mxu0
    %1131 = vdwg.mxu0
    %v1132 = vadd.f32 %v1044, %v1124
    %v1133 = vadd.f32 %v1045, %v1129
    %s1134 = scalar_lea.vmem %s9, 160
    %v1135 = vld [vmem:[%s1134] sm:$0xff]
    %v1136 = vld [vmem:[%s1134 + $0x8] sm:$0xff]
    %v1137 = vld [vmem:[%s1134 + $0x10] sm:$0xff]
    %v1138 = vld [vmem:[%s1134 + $0x18] sm:$0xff]
    %v1140 = vsel %vm157, %v661, 0
    %v1143 = vsel %vm157, %v666, 0
    %1145 = vmatprep.subr.mxu0 0.0
    %1146 = vmatpush1.msra.mxu0 %v1135
    %1147 = vmatprep.subr.mxu0 0.0
    %1148 = vmatpush1.msra.mxu0 %v1136
    %1149 = vmatprep.subr.mxu0 0.0
    %1150 = vmatpush1.msra.mxu0 %v1137
    %1151 = vmatprep.subr.mxu0 0.0
    %1152 = vmatpush1.msra.mxu0 %v1138
    %1153 = vmatprep.subr.mxu0 0.0
    %1154 = vmatpush1.msra.mxu0 0.0
    %1155 = vmatprep.subr.mxu0 0.0
    %1156 = vmatpush1.msra.mxu0 0.0
    %1157 = vmatprep.subr.mxu0 0.0
    %1158 = vmatpush1.msra.mxu0 0.0
    %1159 = vmatprep.subr.mxu0 0.0
    %1160 = vmatpush1.msra.mxu0 0.0
    %1161 = vmatprep.subr.mxu0 0.0
    %1162 = vmatpush1.msra.mxu0 0.0
    %1163 = vmatprep.subr.mxu0 0.0
    %1164 = vmatpush1.msra.mxu0 0.0
    %1165 = vmatprep.subr.mxu0 0.0
    %1166 = vmatpush1.msra.mxu0 0.0
    %1167 = vmatprep.subr.mxu0 0.0
    %1168 = vmatpush1.msra.mxu0 0.0
    %1169 = vmatprep.subr.mxu0 0.0
    %1170 = vmatpush1.msra.mxu0 0.0
    %1171 = vmatprep.subr.mxu0 0.0
    %1172 = vmatpush1.msra.mxu0 0.0
    %1173 = vmatprep.subr.mxu0 0.0
    %1174 = vmatpush1.msra.mxu0 0.0
    %1175 = vmatprep.subr.mxu0 0.0
    %1176 = vmatpush1.msra.mxu0 0.0
    %1177 = vmatprep.subr.mxu0 0.0
    %1178 = vmatpush1.msra.mxu0 0.0
    %1179 = vmatprep.subr.mxu0 0.0
    %1180 = vmatpush1.msra.mxu0 0.0
    %1181 = vmatprep.subr.mxu0 0.0
    %1182 = vmatpush1.msra.mxu0 0.0
    %1183 = vmatprep.subr.mxu0 0.0
    %1184 = vmatpush1.msra.mxu0 0.0
    %1185 = vmatprep.subr.mxu0 0.0
    %1186 = vmatpush1.msra.mxu0 0.0
    %1187 = vmatprep.subr.mxu0 0.0
    %1188 = vmatpush1.msra.mxu0 0.0
    %1189 = vmatprep.subr.mxu0 0.0
    %1190 = vmatpush1.msra.mxu0 0.0
    %1191 = vmatprep.subr.mxu0 0.0
    %1192 = vmatpush1.msra.mxu0 0.0
    %1193 = vmatprep.subr.mxu0 0.0
    %1194 = vmatpush1.msra.mxu0 0.0
    %1195 = vmatprep.subr.mxu0 0.0
    %1196 = vmatpush1.msra.mxu0 0.0
    %1197 = vmatprep.subr.mxu0 0.0
    %1198 = vmatpush1.msra.mxu0 0.0
    %1199 = vmatprep.subr.mxu0 0.0
    %1200 = vmatpush1.msra.mxu0 0.0
    %1201 = vmatprep.subr.mxu0 0.0
    %1202 = vmatpush1.msra.mxu0 0.0
    %1203 = vmatprep.subr.mxu0 0.0
    %1204 = vmatpush1.msra.mxu0 0.0
    %1205 = vmatprep.subr.mxu0 0.0
    %1206 = vmatpush1.msra.mxu0 0.0
    %1207 = vmatprep.subr.mxu0 0.0
    %1208 = vmatpush1.msra.mxu0 0.0
    %1209 = vmatprep.mubr.f32.mxu0 0.0
    %1210 = vmatmul.mubr.f32.gmra.mrb[0].mxu0 %v1140
    %v1211 = vpop.f32.mrb[0].mxu0
    %v1212 = vadd.f32 0.0, %v1211
    %v1213 = vpop.f32.mrb[0].mxu0
    %1214 = vmatprep.mubr.f32.mxu0 0.0
    %1215 = vmatmul.mubr.f32.gmra.mrb[0].mxu0 %v1143
    %v1216 = vpop.f32.mrb[0].mxu0
    %v1217 = vadd.f32 0.0, %v1216
    %v1218 = vpop.f32.mrb[0].mxu0
    %1219 = vdwg.mxu0
    %v1220 = vadd.f32 %v1132, %v1212
    %v1221 = vadd.f32 %v1133, %v1217
    %s1222 = scalar_lea.vmem %s9, 192
    %v1223 = vld [vmem:[%s1222] sm:$0xff]
    %v1224 = vld [vmem:[%s1222 + $0x8] sm:$0xff]
    %v1225 = vld [vmem:[%s1222 + $0x10] sm:$0xff]
    %v1226 = vld [vmem:[%s1222 + $0x18] sm:$0xff]
    %v1228 = vsel %vm157, %v671, 0
    %v1231 = vsel %vm157, %v676, 0
    %1233 = vmatprep.subr.mxu0 0.0
    %1234 = vmatpush1.msra.mxu0 %v1223
    %1235 = vmatprep.subr.mxu0 0.0
    %1236 = vmatpush1.msra.mxu0 %v1224
    %1237 = vmatprep.subr.mxu0 0.0
    %1238 = vmatpush1.msra.mxu0 %v1225
    %1239 = vmatprep.subr.mxu0 0.0
    %1240 = vmatpush1.msra.mxu0 %v1226
    %1241 = vmatprep.subr.mxu0 0.0
    %1242 = vmatpush1.msra.mxu0 0.0
    %1243 = vmatprep.subr.mxu0 0.0
    %1244 = vmatpush1.msra.mxu0 0.0
    %1245 = vmatprep.subr.mxu0 0.0
    %1246 = vmatpush1.msra.mxu0 0.0
    %1247 = vmatprep.subr.mxu0 0.0
    %1248 = vmatpush1.msra.mxu0 0.0
    %1249 = vmatprep.subr.mxu0 0.0
    %1250 = vmatpush1.msra.mxu0 0.0
    %1251 = vmatprep.subr.mxu0 0.0
    %1252 = vmatpush1.msra.mxu0 0.0
    %1253 = vmatprep.subr.mxu0 0.0
    %1254 = vmatpush1.msra.mxu0 0.0
    %1255 = vmatprep.subr.mxu0 0.0
    %1256 = vmatpush1.msra.mxu0 0.0
    %1257 = vmatprep.subr.mxu0 0.0
    %1258 = vmatpush1.msra.mxu0 0.0
    %1259 = vmatprep.subr.mxu0 0.0
    %1260 = vmatpush1.msra.mxu0 0.0
    %1261 = vmatprep.subr.mxu0 0.0
    %1262 = vmatpush1.msra.mxu0 0.0
    %1263 = vmatprep.subr.mxu0 0.0
    %1264 = vmatpush1.msra.mxu0 0.0
    %1265 = vmatprep.subr.mxu0 0.0
    %1266 = vmatpush1.msra.mxu0 0.0
    %1267 = vmatprep.subr.mxu0 0.0
    %1268 = vmatpush1.msra.mxu0 0.0
    %1269 = vmatprep.subr.mxu0 0.0
    %1270 = vmatpush1.msra.mxu0 0.0
    %1271 = vmatprep.subr.mxu0 0.0
    %1272 = vmatpush1.msra.mxu0 0.0
    %1273 = vmatprep.subr.mxu0 0.0
    %1274 = vmatpush1.msra.mxu0 0.0
    %1275 = vmatprep.subr.mxu0 0.0
    %1276 = vmatpush1.msra.mxu0 0.0
    %1277 = vmatprep.subr.mxu0 0.0
    %1278 = vmatpush1.msra.mxu0 0.0
    %1279 = vmatprep.subr.mxu0 0.0
    %1280 = vmatpush1.msra.mxu0 0.0
    %1281 = vmatprep.subr.mxu0 0.0
    %1282 = vmatpush1.msra.mxu0 0.0
    %1283 = vmatprep.subr.mxu0 0.0
    %1284 = vmatpush1.msra.mxu0 0.0
    %1285 = vmatprep.subr.mxu0 0.0
    %1286 = vmatpush1.msra.mxu0 0.0
    %1287 = vmatprep.subr.mxu0 0.0
    %1288 = vmatpush1.msra.mxu0 0.0
    %1289 = vmatprep.subr.mxu0 0.0
    %1290 = vmatpush1.msra.mxu0 0.0
    %1291 = vmatprep.subr.mxu0 0.0
    %1292 = vmatpush1.msra.mxu0 0.0
    %1293 = vmatprep.subr.mxu0 0.0
    %1294 = vmatpush1.msra.mxu0 0.0
    %1295 = vmatprep.subr.mxu0 0.0
    %1296 = vmatpush1.msra.mxu0 0.0
    %1297 = vmatprep.mubr.f32.mxu0 0.0
    %1298 = vmatmul.mubr.f32.gmra.mrb[0].mxu0 %v1228
    %v1299 = vpop.f32.mrb[0].mxu0
    %v1300 = vadd.f32 0.0, %v1299
    %v1301 = vpop.f32.mrb[0].mxu0
    %1302 = vmatprep.mubr.f32.mxu0 0.0
    %1303 = vmatmul.mubr.f32.gmra.mrb[0].mxu0 %v1231
    %v1304 = vpop.f32.mrb[0].mxu0
    %v1305 = vadd.f32 0.0, %v1304
    %v1306 = vpop.f32.mrb[0].mxu0
    %1307 = vdwg.mxu0
    %v1308 = vadd.f32 %v1220, %v1300
    %v1309 = vadd.f32 %v1221, %v1305
    %s1310 = scalar_lea.vmem %s9, 224
    %v1311 = vld [vmem:[%s1310] sm:$0xff]
    %v1312 = vld [vmem:[%s1310 + $0x8] sm:$0xff]
    %v1313 = vld [vmem:[%s1310 + $0x10] sm:$0xff]
    %v1314 = vld [vmem:[%s1310 + $0x18] sm:$0xff]
    %v1316 = vsel %vm157, %v681, 0
    %v1319 = vsel %vm157, %v686, 0
    %1321 = vmatprep.subr.mxu0 0.0
    %1322 = vmatpush1.msra.mxu0 %v1311
    %1323 = vmatprep.subr.mxu0 0.0
    %1324 = vmatpush1.msra.mxu0 %v1312
    %1325 = vmatprep.subr.mxu0 0.0
    %1326 = vmatpush1.msra.mxu0 %v1313
    %1327 = vmatprep.subr.mxu0 0.0
    %1328 = vmatpush1.msra.mxu0 %v1314
    %1329 = vmatprep.subr.mxu0 0.0
    %1330 = vmatpush1.msra.mxu0 0.0
    %1331 = vmatprep.subr.mxu0 0.0
    %1332 = vmatpush1.msra.mxu0 0.0
    %1333 = vmatprep.subr.mxu0 0.0
    %1334 = vmatpush1.msra.mxu0 0.0
    %1335 = vmatprep.subr.mxu0 0.0
    %1336 = vmatpush1.msra.mxu0 0.0
    %1337 = vmatprep.subr.mxu0 0.0
    %1338 = vmatpush1.msra.mxu0 0.0
    %1339 = vmatprep.subr.mxu0 0.0
    %1340 = vmatpush1.msra.mxu0 0.0
    %1341 = vmatprep.subr.mxu0 0.0
    %1342 = vmatpush1.msra.mxu0 0.0
    %1343 = vmatprep.subr.mxu0 0.0
    %1344 = vmatpush1.msra.mxu0 0.0
    %1345 = vmatprep.subr.mxu0 0.0
    %1346 = vmatpush1.msra.mxu0 0.0
    %1347 = vmatprep.subr.mxu0 0.0
    %1348 = vmatpush1.msra.mxu0 0.0
    %1349 = vmatprep.subr.mxu0 0.0
    %1350 = vmatpush1.msra.mxu0 0.0
    %1351 = vmatprep.subr.mxu0 0.0
    %1352 = vmatpush1.msra.mxu0 0.0
    %1353 = vmatprep.subr.mxu0 0.0
    %1354 = vmatpush1.msra.mxu0 0.0
    %1355 = vmatprep.subr.mxu0 0.0
    %1356 = vmatpush1.msra.mxu0 0.0
    %1357 = vmatprep.subr.mxu0 0.0
    %1358 = vmatpush1.msra.mxu0 0.0
    %1359 = vmatprep.subr.mxu0 0.0
    %1360 = vmatpush1.msra.mxu0 0.0
    %1361 = vmatprep.subr.mxu0 0.0
    %1362 = vmatpush1.msra.mxu0 0.0
    %1363 = vmatprep.subr.mxu0 0.0
    %1364 = vmatpush1.msra.mxu0 0.0
    %1365 = vmatprep.subr.mxu0 0.0
    %1366 = vmatpush1.msra.mxu0 0.0
    %1367 = vmatprep.subr.mxu0 0.0
    %1368 = vmatpush1.msra.mxu0 0.0
    %1369 = vmatprep.subr.mxu0 0.0
    %1370 = vmatpush1.msra.mxu0 0.0
    %1371 = vmatprep.subr.mxu0 0.0
    %1372 = vmatpush1.msra.mxu0 0.0
    %1373 = vmatprep.subr.mxu0 0.0
    %1374 = vmatpush1.msra.mxu0 0.0
    %1375 = vmatprep.subr.mxu0 0.0
    %1376 = vmatpush1.msra.mxu0 0.0
    %1377 = vmatprep.subr.mxu0 0.0
    %1378 = vmatpush1.msra.mxu0 0.0
    %1379 = vmatprep.subr.mxu0 0.0
    %1380 = vmatpush1.msra.mxu0 0.0
    %1381 = vmatprep.subr.mxu0 0.0
    %1382 = vmatpush1.msra.mxu0 0.0
    %1383 = vmatprep.subr.mxu0 0.0
    %1384 = vmatpush1.msra.mxu0 0.0
    %1385 = vmatprep.mubr.f32.mxu0 0.0
    %1386 = vmatmul.mubr.f32.gmra.mrb[0].mxu0 %v1316
    %v1387 = vpop.f32.mrb[0].mxu0
    %v1388 = vadd.f32 0.0, %v1387
    %v1389 = vpop.f32.mrb[0].mxu0
    %1390 = vmatprep.mubr.f32.mxu0 0.0
    %1391 = vmatmul.mubr.f32.gmra.mrb[0].mxu0 %v1319
    %v1392 = vpop.f32.mrb[0].mxu0
    %v1393 = vadd.f32 0.0, %v1392
    %v1394 = vpop.f32.mrb[0].mxu0
    %1395 = vdwg.mxu0
    %v1396 = vadd.f32 %v1308, %v1388
    %v1397 = vadd.f32 %v1309, %v1393
    %s1398 = scalar_lea.vmem %s9, 256
    %v1399 = vld [vmem:[%s1398] sm:$0xff]
    %v1400 = vld [vmem:[%s1398 + $0x8] sm:$0xff]
    %v1401 = vld [vmem:[%s1398 + $0x10] sm:$0xff]
    %v1402 = vld [vmem:[%s1398 + $0x18] sm:$0xff]
    %v1404 = vsel %vm157, %v691, 0
    %v1407 = vsel %vm157, %v696, 0
    %1409 = vmatprep.subr.mxu0 0.0
    %1410 = vmatpush1.msra.mxu0 %v1399
    %1411 = vmatprep.subr.mxu0 0.0
    %1412 = vmatpush1.msra.mxu0 %v1400
    %1413 = vmatprep.subr.mxu0 0.0
    %1414 = vmatpush1.msra.mxu0 %v1401
    %1415 = vmatprep.subr.mxu0 0.0
    %1416 = vmatpush1.msra.mxu0 %v1402
    %1417 = vmatprep.subr.mxu0 0.0
    %1418 = vmatpush1.msra.mxu0 0.0
    %1419 = vmatprep.subr.mxu0 0.0
    %1420 = vmatpush1.msra.mxu0 0.0
    %1421 = vmatprep.subr.mxu0 0.0
    %1422 = vmatpush1.msra.mxu0 0.0
    %1423 = vmatprep.subr.mxu0 0.0
    %1424 = vmatpush1.msra.mxu0 0.0
    %1425 = vmatprep.subr.mxu0 0.0
    %1426 = vmatpush1.msra.mxu0 0.0
    %1427 = vmatprep.subr.mxu0 0.0
    %1428 = vmatpush1.msra.mxu0 0.0
    %1429 = vmatprep.subr.mxu0 0.0
    %1430 = vmatpush1.msra.mxu0 0.0
    %1431 = vmatprep.subr.mxu0 0.0
    %1432 = vmatpush1.msra.mxu0 0.0
    %1433 = vmatprep.subr.mxu0 0.0
    %1434 = vmatpush1.msra.mxu0 0.0
    %1435 = vmatprep.subr.mxu0 0.0
    %1436 = vmatpush1.msra.mxu0 0.0
    %1437 = vmatprep.subr.mxu0 0.0
    %1438 = vmatpush1.msra.mxu0 0.0
    %1439 = vmatprep.subr.mxu0 0.0
    %1440 = vmatpush1.msra.mxu0 0.0
    %1441 = vmatprep.subr.mxu0 0.0
    %1442 = vmatpush1.msra.mxu0 0.0
    %1443 = vmatprep.subr.mxu0 0.0
    %1444 = vmatpush1.msra.mxu0 0.0
    %1445 = vmatprep.subr.mxu0 0.0
    %1446 = vmatpush1.msra.mxu0 0.0
    %1447 = vmatprep.subr.mxu0 0.0
    %1448 = vmatpush1.msra.mxu0 0.0
    %1449 = vmatprep.subr.mxu0 0.0
    %1450 = vmatpush1.msra.mxu0 0.0
    %1451 = vmatprep.subr.mxu0 0.0
    %1452 = vmatpush1.msra.mxu0 0.0
    %1453 = vmatprep.subr.mxu0 0.0
    %1454 = vmatpush1.msra.mxu0 0.0
    %1455 = vmatprep.subr.mxu0 0.0
    %1456 = vmatpush1.msra.mxu0 0.0
    %1457 = vmatprep.subr.mxu0 0.0
    %1458 = vmatpush1.msra.mxu0 0.0
    %1459 = vmatprep.subr.mxu0 0.0
    %1460 = vmatpush1.msra.mxu0 0.0
    %1461 = vmatprep.subr.mxu0 0.0
    %1462 = vmatpush1.msra.mxu0 0.0
    %1463 = vmatprep.subr.mxu0 0.0
    %1464 = vmatpush1.msra.mxu0 0.0
    %1465 = vmatprep.subr.mxu0 0.0
    %1466 = vmatpush1.msra.mxu0 0.0
    %1467 = vmatprep.subr.mxu0 0.0
    %1468 = vmatpush1.msra.mxu0 0.0
    %1469 = vmatprep.subr.mxu0 0.0
    %1470 = vmatpush1.msra.mxu0 0.0
    %1471 = vmatprep.subr.mxu0 0.0
    %1472 = vmatpush1.msra.mxu0 0.0
    %1473 = vmatprep.mubr.f32.mxu0 0.0
    %1474 = vmatmul.mubr.f32.gmra.mrb[0].mxu0 %v1404
    %v1475 = vpop.f32.mrb[0].mxu0
    %v1476 = vadd.f32 0.0, %v1475
    %v1477 = vpop.f32.mrb[0].mxu0
    %1478 = vmatprep.mubr.f32.mxu0 0.0
    %1479 = vmatmul.mubr.f32.gmra.mrb[0].mxu0 %v1407
    %v1480 = vpop.f32.mrb[0].mxu0
    %v1481 = vadd.f32 0.0, %v1480
    %v1482 = vpop.f32.mrb[0].mxu0
    %1483 = vdwg.mxu0
    %v1484 = vadd.f32 %v1396, %v1476
    %v1485 = vadd.f32 %v1397, %v1481
    %v1487 = vlaneseq
    %v1488 = vshrl.u32 %v1487, 7
    %v1489 = vsub.s32 0, %v1488
    %v1490 = vrot.slane %v488, %v1489
    %v1492 = vadd.f32 %v1484, %v1490
    %v1493 = vadd.f32 %v1485, %v1490
    %v1494 = vmax.f32 %v1492, 0.0
    %v1495 = vmax.f32 %v1493, 0.0
    %1496 = vmatprep.subr.mxu0 0.0
    %1497 = vmatpush1.msra.mxu0 %v462
    %1498 = vmatprep.subr.mxu0 0.0
    %1499 = vmatpush1.msra.mxu0 %v463
    %1500 = vmatprep.subr.mxu0 0.0
    %1501 = vmatpush1.msra.mxu0 %v464
    %1502 = vmatprep.subr.mxu0 0.0
    %1503 = vmatpush1.msra.mxu0 %v465
    %1504 = vmatprep.subr.mxu0 0.0
    %1505 = vmatpush1.msra.mxu0 %v466
    %1506 = vmatprep.subr.mxu0 0.0
    %1507 = vmatpush1.msra.mxu0 %v467
    %1508 = vmatprep.subr.mxu0 0.0
    %1509 = vmatpush1.msra.mxu0 %v468
    %1510 = vmatprep.subr.mxu0 0.0
    %1511 = vmatpush1.msra.mxu0 %v469
    %1512 = vmatprep.subr.mxu0 0.0
    %1513 = vmatpush1.msra.mxu0 0.0
    %1514 = vmatprep.subr.mxu0 0.0
    %1515 = vmatpush1.msra.mxu0 0.0
    %1516 = vmatprep.subr.mxu0 0.0
    %1517 = vmatpush1.msra.mxu0 0.0
    %1518 = vmatprep.subr.mxu0 0.0
    %1519 = vmatpush1.msra.mxu0 0.0
    %1520 = vmatprep.subr.mxu0 0.0
    %1521 = vmatpush1.msra.mxu0 0.0
    %1522 = vmatprep.subr.mxu0 0.0
    %1523 = vmatpush1.msra.mxu0 0.0
    %1524 = vmatprep.subr.mxu0 0.0
    %1525 = vmatpush1.msra.mxu0 0.0
    %1526 = vmatprep.subr.mxu0 0.0
    %1527 = vmatpush1.msra.mxu0 0.0
    %1528 = vmatprep.subr.mxu0 0.0
    %1529 = vmatpush1.msra.mxu0 0.0
    %1530 = vmatprep.subr.mxu0 0.0
    %1531 = vmatpush1.msra.mxu0 0.0
    %1532 = vmatprep.subr.mxu0 0.0
    %1533 = vmatpush1.msra.mxu0 0.0
    %1534 = vmatprep.subr.mxu0 0.0
    %1535 = vmatpush1.msra.mxu0 0.0
    %1536 = vmatprep.subr.mxu0 0.0
    %1537 = vmatpush1.msra.mxu0 0.0
    %1538 = vmatprep.subr.mxu0 0.0
    %1539 = vmatpush1.msra.mxu0 0.0
    %1540 = vmatprep.subr.mxu0 0.0
    %1541 = vmatpush1.msra.mxu0 0.0
    %1542 = vmatprep.subr.mxu0 0.0
    %1543 = vmatpush1.msra.mxu0 0.0
    %1544 = vmatprep.subr.mxu0 0.0
    %1545 = vmatpush1.msra.mxu0 0.0
    %1546 = vmatprep.subr.mxu0 0.0
    %1547 = vmatpush1.msra.mxu0 0.0
    %1548 = vmatprep.subr.mxu0 0.0
    %1549 = vmatpush1.msra.mxu0 0.0
    %1550 = vmatprep.subr.mxu0 0.0
    %1551 = vmatpush1.msra.mxu0 0.0
    %1552 = vmatprep.subr.mxu0 0.0
    %1553 = vmatpush1.msra.mxu0 0.0
    %1554 = vmatprep.subr.mxu0 0.0
    %1555 = vmatpush1.msra.mxu0 0.0
    %1556 = vmatprep.subr.mxu0 0.0
    %1557 = vmatpush1.msra.mxu0 0.0
    %1558 = vmatprep.subr.mxu0 0.0
    %1559 = vmatpush1.msra.mxu0 0.0
    %1560 = vmatprep.mubr.f32.mxu0 0.0
    %1561 = vmatmul.mubr.f32.gmra.mrb[0].mxu0 %v491
    %v1562 = vpop.f32.mrb[0].mxu0
    %v1563 = vadd.f32 0.0, %v1562
    %v1564 = vpop.f32.mrb[0].mxu0
    %1565 = vmatprep.mubr.f32.mxu0 0.0
    %1566 = vmatmul.mubr.f32.gmra.mrb[0].mxu0 %v494
    %v1567 = vpop.f32.mrb[0].mxu0
    %v1568 = vadd.f32 0.0, %v1567
    %v1569 = vpop.f32.mrb[0].mxu0
    %1570 = vmatprep.mubr.f32.mxu0 0.0
    %1571 = vmatmul.mubr.f32.gmra.mrb[0].mxu0 %v497
    %v1572 = vpop.f32.mrb[0].mxu0
    %v1573 = vadd.f32 0.0, %v1572
    %v1574 = vpop.f32.mrb[0].mxu0
    %1575 = vmatprep.mubr.f32.mxu0 0.0
    %1576 = vmatmul.mubr.f32.gmra.mrb[0].mxu0 %v500
    %v1577 = vpop.f32.mrb[0].mxu0
    %v1578 = vadd.f32 0.0, %v1577
    %v1579 = vpop.f32.mrb[0].mxu0
    %1580 = vmatprep.mubr.f32.mxu0 0.0
    %1581 = vmatmul.mubr.f32.gmra.mrb[0].mxu0 %v503
    %v1582 = vpop.f32.mrb[0].mxu0
    %v1583 = vadd.f32 0.0, %v1582
    %v1584 = vpop.f32.mrb[0].mxu0
    %1585 = vmatprep.mubr.f32.mxu0 0.0
    %1586 = vmatmul.mubr.f32.gmra.mrb[0].mxu0 %v506
    %v1587 = vpop.f32.mrb[0].mxu0
    %v1588 = vadd.f32 0.0, %v1587
    %v1589 = vpop.f32.mrb[0].mxu0
    %1590 = vmatprep.mubr.f32.mxu0 0.0
    %1591 = vmatmul.mubr.f32.gmra.mrb[0].mxu0 %v509
    %v1592 = vpop.f32.mrb[0].mxu0
    %v1593 = vadd.f32 0.0, %v1592
    %v1594 = vpop.f32.mrb[0].mxu0
    %1595 = vmatprep.mubr.f32.mxu0 0.0
    %1596 = vmatmul.mubr.f32.gmra.mrb[0].mxu0 %v512
    %v1597 = vpop.f32.mrb[0].mxu0
    %v1598 = vadd.f32 0.0, %v1597
    %v1599 = vpop.f32.mrb[0].mxu0
    %1600 = vmatprep.mubr.f32.mxu0 0.0
    %1601 = vmatmul.mubr.f32.gmra.mrb[0].mxu0 %v515
    %v1602 = vpop.f32.mrb[0].mxu0
    %v1603 = vadd.f32 0.0, %v1602
    %v1604 = vpop.f32.mrb[0].mxu0
    %1605 = vmatprep.mubr.f32.mxu0 0.0
    %1606 = vmatmul.mubr.f32.gmra.mrb[0].mxu0 %v518
    %v1607 = vpop.f32.mrb[0].mxu0
    %v1608 = vadd.f32 0.0, %v1607
    %v1609 = vpop.f32.mrb[0].mxu0
    %1610 = vmatprep.mubr.f32.mxu0 0.0
    %1611 = vmatmul.mubr.f32.gmra.mrb[0].mxu0 %v521
    %v1612 = vpop.f32.mrb[0].mxu0
    %v1613 = vadd.f32 0.0, %v1612
    %v1614 = vpop.f32.mrb[0].mxu0
    %1615 = vmatprep.mubr.f32.mxu0 0.0
    %1616 = vmatmul.mubr.f32.gmra.mrb[0].mxu0 %v524
    %v1617 = vpop.f32.mrb[0].mxu0
    %v1618 = vadd.f32 0.0, %v1617
    %v1619 = vpop.f32.mrb[0].mxu0
    %1620 = vmatprep.mubr.f32.mxu0 0.0
    %1621 = vmatmul.mubr.f32.gmra.mrb[0].mxu0 %v527
    %v1622 = vpop.f32.mrb[0].mxu0
    %v1623 = vadd.f32 0.0, %v1622
    %v1624 = vpop.f32.mrb[0].mxu0
    %1625 = vmatprep.mubr.f32.mxu0 0.0
    %1626 = vmatmul.mubr.f32.gmra.mrb[0].mxu0 %v530
    %v1627 = vpop.f32.mrb[0].mxu0
    %v1628 = vadd.f32 0.0, %v1627
    %v1629 = vpop.f32.mrb[0].mxu0
    %1630 = vmatprep.mubr.f32.mxu0 0.0
    %1631 = vmatmul.mubr.f32.gmra.mrb[0].mxu0 %v533
    %v1632 = vpop.f32.mrb[0].mxu0
    %v1633 = vadd.f32 0.0, %v1632
    %v1634 = vpop.f32.mrb[0].mxu0
    %1635 = vmatprep.mubr.f32.mxu0 0.0
    %1636 = vmatmul.mubr.f32.gmra.mrb[0].mxu0 %v536
    %v1637 = vpop.f32.mrb[0].mxu0
    %v1638 = vadd.f32 0.0, %v1637
    %v1639 = vpop.f32.mrb[0].mxu0
    %1640 = vmatprep.mubr.f32.mxu0 0.0
    %1641 = vmatmul.mubr.f32.gmra.mrb[0].mxu0 %v539
    %v1642 = vpop.f32.mrb[0].mxu0
    %v1643 = vadd.f32 0.0, %v1642
    %v1644 = vpop.f32.mrb[0].mxu0
    %1645 = vmatprep.mubr.f32.mxu0 0.0
    %1646 = vmatmul.mubr.f32.gmra.mrb[0].mxu0 %v542
    %v1647 = vpop.f32.mrb[0].mxu0
    %v1648 = vadd.f32 0.0, %v1647
    %v1649 = vpop.f32.mrb[0].mxu0
    %1650 = vdwg.mxu0
    %v1652 = vsel %vm157, %v1573, 0
    %v1655 = vsel %vm157, %v1578, 0
    %1657 = vmatprep.subr.mxu0 0.0
    %1658 = vmatpush1.msra.mxu0 %v704
    %1659 = vmatprep.subr.mxu0 0.0
    %1660 = vmatpush1.msra.mxu0 %v705
    %1661 = vmatprep.subr.mxu0 0.0
    %1662 = vmatpush1.msra.mxu0 %v706
    %1663 = vmatprep.subr.mxu0 0.0
    %1664 = vmatpush1.msra.mxu0 %v707
    %1665 = vmatprep.subr.mxu0 0.0
    %1666 = vmatpush1.msra.mxu0 0.0
    %1667 = vmatprep.subr.mxu0 0.0
    %1668 = vmatpush1.msra.mxu0 0.0
    %1669 = vmatprep.subr.mxu0 0.0
    %1670 = vmatpush1.msra.mxu0 0.0
    %1671 = vmatprep.subr.mxu0 0.0
    %1672 = vmatpush1.msra.mxu0 0.0
    %1673 = vmatprep.subr.mxu0 0.0
    %1674 = vmatpush1.msra.mxu0 0.0
    %1675 = vmatprep.subr.mxu0 0.0
    %1676 = vmatpush1.msra.mxu0 0.0
    %1677 = vmatprep.subr.mxu0 0.0
    %1678 = vmatpush1.msra.mxu0 0.0
    %1679 = vmatprep.subr.mxu0 0.0
    %1680 = vmatpush1.msra.mxu0 0.0
    %1681 = vmatprep.subr.mxu0 0.0
    %1682 = vmatpush1.msra.mxu0 0.0
    %1683 = vmatprep.subr.mxu0 0.0
    %1684 = vmatpush1.msra.mxu0 0.0
    %1685 = vmatprep.subr.mxu0 0.0
    %1686 = vmatpush1.msra.mxu0 0.0
    %1687 = vmatprep.subr.mxu0 0.0
    %1688 = vmatpush1.msra.mxu0 0.0
    %1689 = vmatprep.subr.mxu0 0.0
    %1690 = vmatpush1.msra.mxu0 0.0
    %1691 = vmatprep.subr.mxu0 0.0
    %1692 = vmatpush1.msra.mxu0 0.0
    %1693 = vmatprep.subr.mxu0 0.0
    %1694 = vmatpush1.msra.mxu0 0.0
    %1695 = vmatprep.subr.mxu0 0.0
    %1696 = vmatpush1.msra.mxu0 0.0
    %1697 = vmatprep.subr.mxu0 0.0
    %1698 = vmatpush1.msra.mxu0 0.0
    %1699 = vmatprep.subr.mxu0 0.0
    %1700 = vmatpush1.msra.mxu0 0.0
    %1701 = vmatprep.subr.mxu0 0.0
    %1702 = vmatpush1.msra.mxu0 0.0
    %1703 = vmatprep.subr.mxu0 0.0
    %1704 = vmatpush1.msra.mxu0 0.0
    %1705 = vmatprep.subr.mxu0 0.0
    %1706 = vmatpush1.msra.mxu0 0.0
    %1707 = vmatprep.subr.mxu0 0.0
    %1708 = vmatpush1.msra.mxu0 0.0
    %1709 = vmatprep.subr.mxu0 0.0
    %1710 = vmatpush1.msra.mxu0 0.0
    %1711 = vmatprep.subr.mxu0 0.0
    %1712 = vmatpush1.msra.mxu0 0.0
    %1713 = vmatprep.subr.mxu0 0.0
    %1714 = vmatpush1.msra.mxu0 0.0
    %1715 = vmatprep.subr.mxu0 0.0
    %1716 = vmatpush1.msra.mxu0 0.0
    %1717 = vmatprep.subr.mxu0 0.0
    %1718 = vmatpush1.msra.mxu0 0.0
    %1719 = vmatprep.subr.mxu0 0.0
    %1720 = vmatpush1.msra.mxu0 0.0
    %1721 = vmatprep.mubr.f32.mxu0 0.0
    %1722 = vmatmul.mubr.f32.gmra.mrb[0].mxu0 %v1652
    %v1723 = vpop.f32.mrb[0].mxu0
    %v1724 = vadd.f32 0.0, %v1723
    %v1725 = vpop.f32.mrb[0].mxu0
    %1726 = vmatprep.mubr.f32.mxu0 0.0
    %1727 = vmatmul.mubr.f32.gmra.mrb[0].mxu0 %v1655
    %v1728 = vpop.f32.mrb[0].mxu0
    %v1729 = vadd.f32 0.0, %v1728
    %v1730 = vpop.f32.mrb[0].mxu0
    %1731 = vdwg.mxu0
    %v1733 = vsel %vm157, %v1563, 0
    %v1736 = vsel %vm157, %v1568, 0
    %1738 = vmatprep.subr.mxu0 0.0
    %1739 = vmatpush1.msra.mxu0 %v699
    %1740 = vmatprep.subr.mxu0 0.0
    %1741 = vmatpush1.msra.mxu0 %v700
    %1742 = vmatprep.subr.mxu0 0.0
    %1743 = vmatpush1.msra.mxu0 %v701
    %1744 = vmatprep.subr.mxu0 0.0
    %1745 = vmatpush1.msra.mxu0 %v702
    %1746 = vmatprep.subr.mxu0 0.0
    %1747 = vmatpush1.msra.mxu0 0.0
    %1748 = vmatprep.subr.mxu0 0.0
    %1749 = vmatpush1.msra.mxu0 0.0
    %1750 = vmatprep.subr.mxu0 0.0
    %1751 = vmatpush1.msra.mxu0 0.0
    %1752 = vmatprep.subr.mxu0 0.0
    %1753 = vmatpush1.msra.mxu0 0.0
    %1754 = vmatprep.subr.mxu0 0.0
    %1755 = vmatpush1.msra.mxu0 0.0
    %1756 = vmatprep.subr.mxu0 0.0
    %1757 = vmatpush1.msra.mxu0 0.0
    %1758 = vmatprep.subr.mxu0 0.0
    %1759 = vmatpush1.msra.mxu0 0.0
    %1760 = vmatprep.subr.mxu0 0.0
    %1761 = vmatpush1.msra.mxu0 0.0
    %1762 = vmatprep.subr.mxu0 0.0
    %1763 = vmatpush1.msra.mxu0 0.0
    %1764 = vmatprep.subr.mxu0 0.0
    %1765 = vmatpush1.msra.mxu0 0.0
    %1766 = vmatprep.subr.mxu0 0.0
    %1767 = vmatpush1.msra.mxu0 0.0
    %1768 = vmatprep.subr.mxu0 0.0
    %1769 = vmatpush1.msra.mxu0 0.0
    %1770 = vmatprep.subr.mxu0 0.0
    %1771 = vmatpush1.msra.mxu0 0.0
    %1772 = vmatprep.subr.mxu0 0.0
    %1773 = vmatpush1.msra.mxu0 0.0
    %1774 = vmatprep.subr.mxu0 0.0
    %1775 = vmatpush1.msra.mxu0 0.0
    %1776 = vmatprep.subr.mxu0 0.0
    %1777 = vmatpush1.msra.mxu0 0.0
    %1778 = vmatprep.subr.mxu0 0.0
    %1779 = vmatpush1.msra.mxu0 0.0
    %1780 = vmatprep.subr.mxu0 0.0
    %1781 = vmatpush1.msra.mxu0 0.0
    %1782 = vmatprep.subr.mxu0 0.0
    %1783 = vmatpush1.msra.mxu0 0.0
    %1784 = vmatprep.subr.mxu0 0.0
    %1785 = vmatpush1.msra.mxu0 0.0
    %1786 = vmatprep.subr.mxu0 0.0
    %1787 = vmatpush1.msra.mxu0 0.0
    %1788 = vmatprep.subr.mxu0 0.0
    %1789 = vmatpush1.msra.mxu0 0.0
    %1790 = vmatprep.subr.mxu0 0.0
    %1791 = vmatpush1.msra.mxu0 0.0
    %1792 = vmatprep.subr.mxu0 0.0
    %1793 = vmatpush1.msra.mxu0 0.0
    %1794 = vmatprep.subr.mxu0 0.0
    %1795 = vmatpush1.msra.mxu0 0.0
    %1796 = vmatprep.subr.mxu0 0.0
    %1797 = vmatpush1.msra.mxu0 0.0
    %1798 = vmatprep.subr.mxu0 0.0
    %1799 = vmatpush1.msra.mxu0 0.0
    %1800 = vmatprep.subr.mxu0 0.0
    %1801 = vmatpush1.msra.mxu0 0.0
    %1802 = vmatprep.mubr.f32.mxu0 0.0
    %1803 = vmatmul.mubr.f32.gmra.mrb[0].mxu0 %v1733
    %v1804 = vpop.f32.mrb[0].mxu0
    %v1805 = vadd.f32 %v1724, %v1804
    %v1806 = vpop.f32.mrb[0].mxu0
    %1807 = vmatprep.mubr.f32.mxu0 0.0
    %1808 = vmatmul.mubr.f32.gmra.mrb[0].mxu0 %v1736
    %v1809 = vpop.f32.mrb[0].mxu0
    %v1810 = vadd.f32 %v1729, %v1809
    %v1811 = vpop.f32.mrb[0].mxu0
    %1812 = vdwg.mxu0
    %v1814 = vsel %vm157, %v1583, 0
    %v1817 = vsel %vm157, %v1588, 0
    %1819 = vmatprep.subr.mxu0 0.0
    %1820 = vmatpush1.msra.mxu0 %v871
    %1821 = vmatprep.subr.mxu0 0.0
    %1822 = vmatpush1.msra.mxu0 %v872
    %1823 = vmatprep.subr.mxu0 0.0
    %1824 = vmatpush1.msra.mxu0 %v873
    %1825 = vmatprep.subr.mxu0 0.0
    %1826 = vmatpush1.msra.mxu0 %v874
    %1827 = vmatprep.subr.mxu0 0.0
    %1828 = vmatpush1.msra.mxu0 0.0
    %1829 = vmatprep.subr.mxu0 0.0
    %1830 = vmatpush1.msra.mxu0 0.0
    %1831 = vmatprep.subr.mxu0 0.0
    %1832 = vmatpush1.msra.mxu0 0.0
    %1833 = vmatprep.subr.mxu0 0.0
    %1834 = vmatpush1.msra.mxu0 0.0
    %1835 = vmatprep.subr.mxu0 0.0
    %1836 = vmatpush1.msra.mxu0 0.0
    %1837 = vmatprep.subr.mxu0 0.0
    %1838 = vmatpush1.msra.mxu0 0.0
    %1839 = vmatprep.subr.mxu0 0.0
    %1840 = vmatpush1.msra.mxu0 0.0
    %1841 = vmatprep.subr.mxu0 0.0
    %1842 = vmatpush1.msra.mxu0 0.0
    %1843 = vmatprep.subr.mxu0 0.0
    %1844 = vmatpush1.msra.mxu0 0.0
    %1845 = vmatprep.subr.mxu0 0.0
    %1846 = vmatpush1.msra.mxu0 0.0
    %1847 = vmatprep.subr.mxu0 0.0
    %1848 = vmatpush1.msra.mxu0 0.0
    %1849 = vmatprep.subr.mxu0 0.0
    %1850 = vmatpush1.msra.mxu0 0.0
    %1851 = vmatprep.subr.mxu0 0.0
    %1852 = vmatpush1.msra.mxu0 0.0
    %1853 = vmatprep.subr.mxu0 0.0
    %1854 = vmatpush1.msra.mxu0 0.0
    %1855 = vmatprep.subr.mxu0 0.0
    %1856 = vmatpush1.msra.mxu0 0.0
    %1857 = vmatprep.subr.mxu0 0.0
    %1858 = vmatpush1.msra.mxu0 0.0
    %1859 = vmatprep.subr.mxu0 0.0
    %1860 = vmatpush1.msra.mxu0 0.0
    %1861 = vmatprep.subr.mxu0 0.0
    %1862 = vmatpush1.msra.mxu0 0.0
    %1863 = vmatprep.subr.mxu0 0.0
    %1864 = vmatpush1.msra.mxu0 0.0
    %1865 = vmatprep.subr.mxu0 0.0
    %1866 = vmatpush1.msra.mxu0 0.0
    %1867 = vmatprep.subr.mxu0 0.0
    %1868 = vmatpush1.msra.mxu0 0.0
    %1869 = vmatprep.subr.mxu0 0.0
    %1870 = vmatpush1.msra.mxu0 0.0
    %1871 = vmatprep.subr.mxu0 0.0
    %1872 = vmatpush1.msra.mxu0 0.0
    %1873 = vmatprep.subr.mxu0 0.0
    %1874 = vmatpush1.msra.mxu0 0.0
    %1875 = vmatprep.subr.mxu0 0.0
    %1876 = vmatpush1.msra.mxu0 0.0
    %1877 = vmatprep.subr.mxu0 0.0
    %1878 = vmatpush1.msra.mxu0 0.0
    %1879 = vmatprep.subr.mxu0 0.0
    %1880 = vmatpush1.msra.mxu0 0.0
    %1881 = vmatprep.subr.mxu0 0.0
    %1882 = vmatpush1.msra.mxu0 0.0
    %1883 = vmatprep.mubr.f32.mxu0 0.0
    %1884 = vmatmul.mubr.f32.gmra.mrb[0].mxu0 %v1814
    %v1885 = vpop.f32.mrb[0].mxu0
    %v1886 = vadd.f32 0.0, %v1885
    %v1887 = vpop.f32.mrb[0].mxu0
    %1888 = vmatprep.mubr.f32.mxu0 0.0
    %1889 = vmatmul.mubr.f32.gmra.mrb[0].mxu0 %v1817
    %v1890 = vpop.f32.mrb[0].mxu0
    %v1891 = vadd.f32 0.0, %v1890
    %v1892 = vpop.f32.mrb[0].mxu0
    %1893 = vdwg.mxu0
    %v1894 = vadd.f32 %v1805, %v1886
    %v1895 = vadd.f32 %v1810, %v1891
    %v1897 = vsel %vm157, %v1593, 0
    %v1900 = vsel %vm157, %v1598, 0
    %1902 = vmatprep.subr.mxu0 0.0
    %1903 = vmatpush1.msra.mxu0 %v959
    %1904 = vmatprep.subr.mxu0 0.0
    %1905 = vmatpush1.msra.mxu0 %v960
    %1906 = vmatprep.subr.mxu0 0.0
    %1907 = vmatpush1.msra.mxu0 %v961
    %1908 = vmatprep.subr.mxu0 0.0
    %1909 = vmatpush1.msra.mxu0 %v962
    %1910 = vmatprep.subr.mxu0 0.0
    %1911 = vmatpush1.msra.mxu0 0.0
    %1912 = vmatprep.subr.mxu0 0.0
    %1913 = vmatpush1.msra.mxu0 0.0
    %1914 = vmatprep.subr.mxu0 0.0
    %1915 = vmatpush1.msra.mxu0 0.0
    %1916 = vmatprep.subr.mxu0 0.0
    %1917 = vmatpush1.msra.mxu0 0.0
    %1918 = vmatprep.subr.mxu0 0.0
    %1919 = vmatpush1.msra.mxu0 0.0
    %1920 = vmatprep.subr.mxu0 0.0
    %1921 = vmatpush1.msra.mxu0 0.0
    %1922 = vmatprep.subr.mxu0 0.0
    %1923 = vmatpush1.msra.mxu0 0.0
    %1924 = vmatprep.subr.mxu0 0.0
    %1925 = vmatpush1.msra.mxu0 0.0
    %1926 = vmatprep.subr.mxu0 0.0
    %1927 = vmatpush1.msra.mxu0 0.0
    %1928 = vmatprep.subr.mxu0 0.0
    %1929 = vmatpush1.msra.mxu0 0.0
    %1930 = vmatprep.subr.mxu0 0.0
    %1931 = vmatpush1.msra.mxu0 0.0
    %1932 = vmatprep.subr.mxu0 0.0
    %1933 = vmatpush1.msra.mxu0 0.0
    %1934 = vmatprep.subr.mxu0 0.0
    %1935 = vmatpush1.msra.mxu0 0.0
    %1936 = vmatprep.subr.mxu0 0.0
    %1937 = vmatpush1.msra.mxu0 0.0
    %1938 = vmatprep.subr.mxu0 0.0
    %1939 = vmatpush1.msra.mxu0 0.0
    %1940 = vmatprep.subr.mxu0 0.0
    %1941 = vmatpush1.msra.mxu0 0.0
    %1942 = vmatprep.subr.mxu0 0.0
    %1943 = vmatpush1.msra.mxu0 0.0
    %1944 = vmatprep.subr.mxu0 0.0
    %1945 = vmatpush1.msra.mxu0 0.0
    %1946 = vmatprep.subr.mxu0 0.0
    %1947 = vmatpush1.msra.mxu0 0.0
    %1948 = vmatprep.subr.mxu0 0.0
    %1949 = vmatpush1.msra.mxu0 0.0
    %1950 = vmatprep.subr.mxu0 0.0
    %1951 = vmatpush1.msra.mxu0 0.0
    %1952 = vmatprep.subr.mxu0 0.0
    %1953 = vmatpush1.msra.mxu0 0.0
    %1954 = vmatprep.subr.mxu0 0.0
    %1955 = vmatpush1.msra.mxu0 0.0
    %1956 = vmatprep.subr.mxu0 0.0
    %1957 = vmatpush1.msra.mxu0 0.0
    %1958 = vmatprep.subr.mxu0 0.0
    %1959 = vmatpush1.msra.mxu0 0.0
    %1960 = vmatprep.subr.mxu0 0.0
    %1961 = vmatpush1.msra.mxu0 0.0
    %1962 = vmatprep.subr.mxu0 0.0
    %1963 = vmatpush1.msra.mxu0 0.0
    %1964 = vmatprep.subr.mxu0 0.0
    %1965 = vmatpush1.msra.mxu0 0.0
    %1966 = vmatprep.mubr.f32.mxu0 0.0
    %1967 = vmatmul.mubr.f32.gmra.mrb[0].mxu0 %v1897
    %v1968 = vpop.f32.mrb[0].mxu0
    %v1969 = vadd.f32 0.0, %v1968
    %v1970 = vpop.f32.mrb[0].mxu0
    %1971 = vmatprep.mubr.f32.mxu0 0.0
    %1972 = vmatmul.mubr.f32.gmra.mrb[0].mxu0 %v1900
    %v1973 = vpop.f32.mrb[0].mxu0
    %v1974 = vadd.f32 0.0, %v1973
    %v1975 = vpop.f32.mrb[0].mxu0
    %1976 = vdwg.mxu0
    %v1977 = vadd.f32 %v1894, %v1969
    %v1978 = vadd.f32 %v1895, %v1974
    %v1980 = vsel %vm157, %v1603, 0
    %v1983 = vsel %vm157, %v1608, 0
    %1985 = vmatprep.subr.mxu0 0.0
    %1986 = vmatpush1.msra.mxu0 %v1047
    %1987 = vmatprep.subr.mxu0 0.0
    %1988 = vmatpush1.msra.mxu0 %v1048
    %1989 = vmatprep.subr.mxu0 0.0
    %1990 = vmatpush1.msra.mxu0 %v1049
    %1991 = vmatprep.subr.mxu0 0.0
    %1992 = vmatpush1.msra.mxu0 %v1050
    %1993 = vmatprep.subr.mxu0 0.0
    %1994 = vmatpush1.msra.mxu0 0.0
    %1995 = vmatprep.subr.mxu0 0.0
    %1996 = vmatpush1.msra.mxu0 0.0
    %1997 = vmatprep.subr.mxu0 0.0
    %1998 = vmatpush1.msra.mxu0 0.0
    %1999 = vmatprep.subr.mxu0 0.0
    %2000 = vmatpush1.msra.mxu0 0.0
    %2001 = vmatprep.subr.mxu0 0.0
    %2002 = vmatpush1.msra.mxu0 0.0
    %2003 = vmatprep.subr.mxu0 0.0
    %2004 = vmatpush1.msra.mxu0 0.0
    %2005 = vmatprep.subr.mxu0 0.0
    %2006 = vmatpush1.msra.mxu0 0.0
    %2007 = vmatprep.subr.mxu0 0.0
    %2008 = vmatpush1.msra.mxu0 0.0
    %2009 = vmatprep.subr.mxu0 0.0
    %2010 = vmatpush1.msra.mxu0 0.0
    %2011 = vmatprep.subr.mxu0 0.0
    %2012 = vmatpush1.msra.mxu0 0.0
    %2013 = vmatprep.subr.mxu0 0.0
    %2014 = vmatpush1.msra.mxu0 0.0
    %2015 = vmatprep.subr.mxu0 0.0
    %2016 = vmatpush1.msra.mxu0 0.0
    %2017 = vmatprep.subr.mxu0 0.0
    %2018 = vmatpush1.msra.mxu0 0.0
    %2019 = vmatprep.subr.mxu0 0.0
    %2020 = vmatpush1.msra.mxu0 0.0
    %2021 = vmatprep.subr.mxu0 0.0
    %2022 = vmatpush1.msra.mxu0 0.0
    %2023 = vmatprep.subr.mxu0 0.0
    %2024 = vmatpush1.msra.mxu0 0.0
    %2025 = vmatprep.subr.mxu0 0.0
    %2026 = vmatpush1.msra.mxu0 0.0
    %2027 = vmatprep.subr.mxu0 0.0
    %2028 = vmatpush1.msra.mxu0 0.0
    %2029 = vmatprep.subr.mxu0 0.0
    %2030 = vmatpush1.msra.mxu0 0.0
    %2031 = vmatprep.subr.mxu0 0.0
    %2032 = vmatpush1.msra.mxu0 0.0
    %2033 = vmatprep.subr.mxu0 0.0
    %2034 = vmatpush1.msra.mxu0 0.0
    %2035 = vmatprep.subr.mxu0 0.0
    %2036 = vmatpush1.msra.mxu0 0.0
    %2037 = vmatprep.subr.mxu0 0.0
    %2038 = vmatpush1.msra.mxu0 0.0
    %2039 = vmatprep.subr.mxu0 0.0
    %2040 = vmatpush1.msra.mxu0 0.0
    %2041 = vmatprep.subr.mxu0 0.0
    %2042 = vmatpush1.msra.mxu0 0.0
    %2043 = vmatprep.subr.mxu0 0.0
    %2044 = vmatpush1.msra.mxu0 0.0
    %2045 = vmatprep.subr.mxu0 0.0
    %2046 = vmatpush1.msra.mxu0 0.0
    %2047 = vmatprep.subr.mxu0 0.0
    %2048 = vmatpush1.msra.mxu0 0.0
    %2049 = vmatprep.mubr.f32.mxu0 0.0
    %2050 = vmatmul.mubr.f32.gmra.mrb[0].mxu0 %v1980
    %v2051 = vpop.f32.mrb[0].mxu0
    %v2052 = vadd.f32 0.0, %v2051
    %v2053 = vpop.f32.mrb[0].mxu0
    %2054 = vmatprep.mubr.f32.mxu0 0.0
    %2055 = vmatmul.mubr.f32.gmra.mrb[0].mxu0 %v1983
    %v2056 = vpop.f32.mrb[0].mxu0
    %v2057 = vadd.f32 0.0, %v2056
    %v2058 = vpop.f32.mrb[0].mxu0
    %2059 = vdwg.mxu0
    %v2060 = vadd.f32 %v1977, %v2052
    %v2061 = vadd.f32 %v1978, %v2057
    %v2063 = vsel %vm157, %v1613, 0
    %v2066 = vsel %vm157, %v1618, 0
    %2068 = vmatprep.subr.mxu0 0.0
    %2069 = vmatpush1.msra.mxu0 %v1135
    %2070 = vmatprep.subr.mxu0 0.0
    %2071 = vmatpush1.msra.mxu0 %v1136
    %2072 = vmatprep.subr.mxu0 0.0
    %2073 = vmatpush1.msra.mxu0 %v1137
    %2074 = vmatprep.subr.mxu0 0.0
    %2075 = vmatpush1.msra.mxu0 %v1138
    %2076 = vmatprep.subr.mxu0 0.0
    %2077 = vmatpush1.msra.mxu0 0.0
    %2078 = vmatprep.subr.mxu0 0.0
    %2079 = vmatpush1.msra.mxu0 0.0
    %2080 = vmatprep.subr.mxu0 0.0
    %2081 = vmatpush1.msra.mxu0 0.0
    %2082 = vmatprep.subr.mxu0 0.0
    %2083 = vmatpush1.msra.mxu0 0.0
    %2084 = vmatprep.subr.mxu0 0.0
    %2085 = vmatpush1.msra.mxu0 0.0
    %2086 = vmatprep.subr.mxu0 0.0
    %2087 = vmatpush1.msra.mxu0 0.0
    %2088 = vmatprep.subr.mxu0 0.0
    %2089 = vmatpush1.msra.mxu0 0.0
    %2090 = vmatprep.subr.mxu0 0.0
    %2091 = vmatpush1.msra.mxu0 0.0
    %2092 = vmatprep.subr.mxu0 0.0
    %2093 = vmatpush1.msra.mxu0 0.0
    %2094 = vmatprep.subr.mxu0 0.0
    %2095 = vmatpush1.msra.mxu0 0.0
    %2096 = vmatprep.subr.mxu0 0.0
    %2097 = vmatpush1.msra.mxu0 0.0
    %2098 = vmatprep.subr.mxu0 0.0
    %2099 = vmatpush1.msra.mxu0 0.0
    %2100 = vmatprep.subr.mxu0 0.0
    %2101 = vmatpush1.msra.mxu0 0.0
    %2102 = vmatprep.subr.mxu0 0.0
    %2103 = vmatpush1.msra.mxu0 0.0
    %2104 = vmatprep.subr.mxu0 0.0
    %2105 = vmatpush1.msra.mxu0 0.0
    %2106 = vmatprep.subr.mxu0 0.0
    %2107 = vmatpush1.msra.mxu0 0.0
    %2108 = vmatprep.subr.mxu0 0.0
    %2109 = vmatpush1.msra.mxu0 0.0
    %2110 = vmatprep.subr.mxu0 0.0
    %2111 = vmatpush1.msra.mxu0 0.0
    %2112 = vmatprep.subr.mxu0 0.0
    %2113 = vmatpush1.msra.mxu0 0.0
    %2114 = vmatprep.subr.mxu0 0.0
    %2115 = vmatpush1.msra.mxu0 0.0
    %2116 = vmatprep.subr.mxu0 0.0
    %2117 = vmatpush1.msra.mxu0 0.0
    %2118 = vmatprep.subr.mxu0 0.0
    %2119 = vmatpush1.msra.mxu0 0.0
    %2120 = vmatprep.subr.mxu0 0.0
    %2121 = vmatpush1.msra.mxu0 0.0
    %2122 = vmatprep.subr.mxu0 0.0
    %2123 = vmatpush1.msra.mxu0 0.0
    %2124 = vmatprep.subr.mxu0 0.0
    %2125 = vmatpush1.msra.mxu0 0.0
    %2126 = vmatprep.subr.mxu0 0.0
    %2127 = vmatpush1.msra.mxu0 0.0
    %2128 = vmatprep.subr.mxu0 0.0
    %2129 = vmatpush1.msra.mxu0 0.0
    %2130 = vmatprep.subr.mxu0 0.0
    %2131 = vmatpush1.msra.mxu0 0.0
    %2132 = vmatprep.mubr.f32.mxu0 0.0
    %2133 = vmatmul.mubr.f32.gmra.mrb[0].mxu0 %v2063
    %v2134 = vpop.f32.mrb[0].mxu0
    %v2135 = vadd.f32 0.0, %v2134
    %v2136 = vpop.f32.mrb[0].mxu0
    %2137 = vmatprep.mubr.f32.mxu0 0.0
    %2138 = vmatmul.mubr.f32.gmra.mrb[0].mxu0 %v2066
    %v2139 = vpop.f32.mrb[0].mxu0
    %v2140 = vadd.f32 0.0, %v2139
    %v2141 = vpop.f32.mrb[0].mxu0
    %2142 = vdwg.mxu0
    %v2143 = vadd.f32 %v2060, %v2135
    %v2144 = vadd.f32 %v2061, %v2140
    %v2146 = vsel %vm157, %v1623, 0
    %v2149 = vsel %vm157, %v1628, 0
    %2151 = vmatprep.subr.mxu0 0.0
    %2152 = vmatpush1.msra.mxu0 %v1223
    %2153 = vmatprep.subr.mxu0 0.0
    %2154 = vmatpush1.msra.mxu0 %v1224
    %2155 = vmatprep.subr.mxu0 0.0
    %2156 = vmatpush1.msra.mxu0 %v1225
    %2157 = vmatprep.subr.mxu0 0.0
    %2158 = vmatpush1.msra.mxu0 %v1226
    %2159 = vmatprep.subr.mxu0 0.0
    %2160 = vmatpush1.msra.mxu0 0.0
    %2161 = vmatprep.subr.mxu0 0.0
    %2162 = vmatpush1.msra.mxu0 0.0
    %2163 = vmatprep.subr.mxu0 0.0
    %2164 = vmatpush1.msra.mxu0 0.0
    %2165 = vmatprep.subr.mxu0 0.0
    %2166 = vmatpush1.msra.mxu0 0.0
    %2167 = vmatprep.subr.mxu0 0.0
    %2168 = vmatpush1.msra.mxu0 0.0
    %2169 = vmatprep.subr.mxu0 0.0
    %2170 = vmatpush1.msra.mxu0 0.0
    %2171 = vmatprep.subr.mxu0 0.0
    %2172 = vmatpush1.msra.mxu0 0.0
    %2173 = vmatprep.subr.mxu0 0.0
    %2174 = vmatpush1.msra.mxu0 0.0
    %2175 = vmatprep.subr.mxu0 0.0
    %2176 = vmatpush1.msra.mxu0 0.0
    %2177 = vmatprep.subr.mxu0 0.0
    %2178 = vmatpush1.msra.mxu0 0.0
    %2179 = vmatprep.subr.mxu0 0.0
    %2180 = vmatpush1.msra.mxu0 0.0
    %2181 = vmatprep.subr.mxu0 0.0
    %2182 = vmatpush1.msra.mxu0 0.0
    %2183 = vmatprep.subr.mxu0 0.0
    %2184 = vmatpush1.msra.mxu0 0.0
    %2185 = vmatprep.subr.mxu0 0.0
    %2186 = vmatpush1.msra.mxu0 0.0
    %2187 = vmatprep.subr.mxu0 0.0
    %2188 = vmatpush1.msra.mxu0 0.0
    %2189 = vmatprep.subr.mxu0 0.0
    %2190 = vmatpush1.msra.mxu0 0.0
    %2191 = vmatprep.subr.mxu0 0.0
    %2192 = vmatpush1.msra.mxu0 0.0
    %2193 = vmatprep.subr.mxu0 0.0
    %2194 = vmatpush1.msra.mxu0 0.0
    %2195 = vmatprep.subr.mxu0 0.0
    %2196 = vmatpush1.msra.mxu0 0.0
    %2197 = vmatprep.subr.mxu0 0.0
    %2198 = vmatpush1.msra.mxu0 0.0
    %2199 = vmatprep.subr.mxu0 0.0
    %2200 = vmatpush1.msra.mxu0 0.0
    %2201 = vmatprep.subr.mxu0 0.0
    %2202 = vmatpush1.msra.mxu0 0.0
    %2203 = vmatprep.subr.mxu0 0.0
    %2204 = vmatpush1.msra.mxu0 0.0
    %2205 = vmatprep.subr.mxu0 0.0
    %2206 = vmatpush1.msra.mxu0 0.0
    %2207 = vmatprep.subr.mxu0 0.0
    %2208 = vmatpush1.msra.mxu0 0.0
    %2209 = vmatprep.subr.mxu0 0.0
    %2210 = vmatpush1.msra.mxu0 0.0
    %2211 = vmatprep.subr.mxu0 0.0
    %2212 = vmatpush1.msra.mxu0 0.0
    %2213 = vmatprep.subr.mxu0 0.0
    %2214 = vmatpush1.msra.mxu0 0.0
    %2215 = vmatprep.mubr.f32.mxu0 0.0
    %2216 = vmatmul.mubr.f32.gmra.mrb[0].mxu0 %v2146
    %v2217 = vpop.f32.mrb[0].mxu0
    %v2218 = vadd.f32 0.0, %v2217
    %v2219 = vpop.f32.mrb[0].mxu0
    %2220 = vmatprep.mubr.f32.mxu0 0.0
    %2221 = vmatmul.mubr.f32.gmra.mrb[0].mxu0 %v2149
    %v2222 = vpop.f32.mrb[0].mxu0
    %v2223 = vadd.f32 0.0, %v2222
    %v2224 = vpop.f32.mrb[0].mxu0
    %2225 = vdwg.mxu0
    %v2226 = vadd.f32 %v2143, %v2218
    %v2227 = vadd.f32 %v2144, %v2223
    %v2229 = vsel %vm157, %v1633, 0
    %v2232 = vsel %vm157, %v1638, 0
    %2234 = vmatprep.subr.mxu0 0.0
    %2235 = vmatpush1.msra.mxu0 %v1311
    %2236 = vmatprep.subr.mxu0 0.0
    %2237 = vmatpush1.msra.mxu0 %v1312
    %2238 = vmatprep.subr.mxu0 0.0
    %2239 = vmatpush1.msra.mxu0 %v1313
    %2240 = vmatprep.subr.mxu0 0.0
    %2241 = vmatpush1.msra.mxu0 %v1314
    %2242 = vmatprep.subr.mxu0 0.0
    %2243 = vmatpush1.msra.mxu0 0.0
    %2244 = vmatprep.subr.mxu0 0.0
    %2245 = vmatpush1.msra.mxu0 0.0
    %2246 = vmatprep.subr.mxu0 0.0
    %2247 = vmatpush1.msra.mxu0 0.0
    %2248 = vmatprep.subr.mxu0 0.0
    %2249 = vmatpush1.msra.mxu0 0.0
    %2250 = vmatprep.subr.mxu0 0.0
    %2251 = vmatpush1.msra.mxu0 0.0
    %2252 = vmatprep.subr.mxu0 0.0
    %2253 = vmatpush1.msra.mxu0 0.0
    %2254 = vmatprep.subr.mxu0 0.0
    %2255 = vmatpush1.msra.mxu0 0.0
    %2256 = vmatprep.subr.mxu0 0.0
    %2257 = vmatpush1.msra.mxu0 0.0
    %2258 = vmatprep.subr.mxu0 0.0
    %2259 = vmatpush1.msra.mxu0 0.0
    %2260 = vmatprep.subr.mxu0 0.0
    %2261 = vmatpush1.msra.mxu0 0.0
    %2262 = vmatprep.subr.mxu0 0.0
    %2263 = vmatpush1.msra.mxu0 0.0
    %2264 = vmatprep.subr.mxu0 0.0
    %2265 = vmatpush1.msra.mxu0 0.0
    %2266 = vmatprep.subr.mxu0 0.0
    %2267 = vmatpush1.msra.mxu0 0.0
    %2268 = vmatprep.subr.mxu0 0.0
    %2269 = vmatpush1.msra.mxu0 0.0
    %2270 = vmatprep.subr.mxu0 0.0
    %2271 = vmatpush1.msra.mxu0 0.0
    %2272 = vmatprep.subr.mxu0 0.0
    %2273 = vmatpush1.msra.mxu0 0.0
    %2274 = vmatprep.subr.mxu0 0.0
    %2275 = vmatpush1.msra.mxu0 0.0
    %2276 = vmatprep.subr.mxu0 0.0
    %2277 = vmatpush1.msra.mxu0 0.0
    %2278 = vmatprep.subr.mxu0 0.0
    %2279 = vmatpush1.msra.mxu0 0.0
    %2280 = vmatprep.subr.mxu0 0.0
    %2281 = vmatpush1.msra.mxu0 0.0
    %2282 = vmatprep.subr.mxu0 0.0
    %2283 = vmatpush1.msra.mxu0 0.0
    %2284 = vmatprep.subr.mxu0 0.0
    %2285 = vmatpush1.msra.mxu0 0.0
    %2286 = vmatprep.subr.mxu0 0.0
    %2287 = vmatpush1.msra.mxu0 0.0
    %2288 = vmatprep.subr.mxu0 0.0
    %2289 = vmatpush1.msra.mxu0 0.0
    %2290 = vmatprep.subr.mxu0 0.0
    %2291 = vmatpush1.msra.mxu0 0.0
    %2292 = vmatprep.subr.mxu0 0.0
    %2293 = vmatpush1.msra.mxu0 0.0
    %2294 = vmatprep.subr.mxu0 0.0
    %2295 = vmatpush1.msra.mxu0 0.0
    %2296 = vmatprep.subr.mxu0 0.0
    %2297 = vmatpush1.msra.mxu0 0.0
    %2298 = vmatprep.mubr.f32.mxu0 0.0
    %2299 = vmatmul.mubr.f32.gmra.mrb[0].mxu0 %v2229
    %v2300 = vpop.f32.mrb[0].mxu0
    %v2301 = vadd.f32 0.0, %v2300
    %v2302 = vpop.f32.mrb[0].mxu0
    %2303 = vmatprep.mubr.f32.mxu0 0.0
    %2304 = vmatmul.mubr.f32.gmra.mrb[0].mxu0 %v2232
    %v2305 = vpop.f32.mrb[0].mxu0
    %v2306 = vadd.f32 0.0, %v2305
    %v2307 = vpop.f32.mrb[0].mxu0
    %2308 = vdwg.mxu0
    %v2309 = vadd.f32 %v2226, %v2301
    %v2310 = vadd.f32 %v2227, %v2306
    %v2312 = vsel %vm157, %v1643, 0
    %v2315 = vsel %vm157, %v1648, 0
    %2317 = vmatprep.subr.mxu0 0.0
    %2318 = vmatpush1.msra.mxu0 %v1399
    %2319 = vmatprep.subr.mxu0 0.0
    %2320 = vmatpush1.msra.mxu0 %v1400
    %2321 = vmatprep.subr.mxu0 0.0
    %2322 = vmatpush1.msra.mxu0 %v1401
    %2323 = vmatprep.subr.mxu0 0.0
    %2324 = vmatpush1.msra.mxu0 %v1402
    %2325 = vmatprep.subr.mxu0 0.0
    %2326 = vmatpush1.msra.mxu0 0.0
    %2327 = vmatprep.subr.mxu0 0.0
    %2328 = vmatpush1.msra.mxu0 0.0
    %2329 = vmatprep.subr.mxu0 0.0
    %2330 = vmatpush1.msra.mxu0 0.0
    %2331 = vmatprep.subr.mxu0 0.0
    %2332 = vmatpush1.msra.mxu0 0.0
    %2333 = vmatprep.subr.mxu0 0.0
    %2334 = vmatpush1.msra.mxu0 0.0
    %2335 = vmatprep.subr.mxu0 0.0
    %2336 = vmatpush1.msra.mxu0 0.0
    %2337 = vmatprep.subr.mxu0 0.0
    %2338 = vmatpush1.msra.mxu0 0.0
    %2339 = vmatprep.subr.mxu0 0.0
    %2340 = vmatpush1.msra.mxu0 0.0
    %2341 = vmatprep.subr.mxu0 0.0
    %2342 = vmatpush1.msra.mxu0 0.0
    %2343 = vmatprep.subr.mxu0 0.0
    %2344 = vmatpush1.msra.mxu0 0.0
    %2345 = vmatprep.subr.mxu0 0.0
    %2346 = vmatpush1.msra.mxu0 0.0
    %2347 = vmatprep.subr.mxu0 0.0
    %2348 = vmatpush1.msra.mxu0 0.0
    %2349 = vmatprep.subr.mxu0 0.0
    %2350 = vmatpush1.msra.mxu0 0.0
    %2351 = vmatprep.subr.mxu0 0.0
    %2352 = vmatpush1.msra.mxu0 0.0
    %2353 = vmatprep.subr.mxu0 0.0
    %2354 = vmatpush1.msra.mxu0 0.0
    %2355 = vmatprep.subr.mxu0 0.0
    %2356 = vmatpush1.msra.mxu0 0.0
    %2357 = vmatprep.subr.mxu0 0.0
    %2358 = vmatpush1.msra.mxu0 0.0
    %2359 = vmatprep.subr.mxu0 0.0
    %2360 = vmatpush1.msra.mxu0 0.0
    %2361 = vmatprep.subr.mxu0 0.0
    %2362 = vmatpush1.msra.mxu0 0.0
    %2363 = vmatprep.subr.mxu0 0.0
    %2364 = vmatpush1.msra.mxu0 0.0
    %2365 = vmatprep.subr.mxu0 0.0
    %2366 = vmatpush1.msra.mxu0 0.0
    %2367 = vmatprep.subr.mxu0 0.0
    %2368 = vmatpush1.msra.mxu0 0.0
    %2369 = vmatprep.subr.mxu0 0.0
    %2370 = vmatpush1.msra.mxu0 0.0
    %2371 = vmatprep.subr.mxu0 0.0
    %2372 = vmatpush1.msra.mxu0 0.0
    %2373 = vmatprep.subr.mxu0 0.0
    %2374 = vmatpush1.msra.mxu0 0.0
    %2375 = vmatprep.subr.mxu0 0.0
    %2376 = vmatpush1.msra.mxu0 0.0
    %2377 = vmatprep.subr.mxu0 0.0
    %2378 = vmatpush1.msra.mxu0 0.0
    %2379 = vmatprep.subr.mxu0 0.0
    %2380 = vmatpush1.msra.mxu0 0.0
    %2381 = vmatprep.mubr.f32.mxu0 0.0
    %2382 = vmatmul.mubr.f32.gmra.mrb[0].mxu0 %v2312
    %v2383 = vpop.f32.mrb[0].mxu0
    %v2384 = vadd.f32 0.0, %v2383
    %v2385 = vpop.f32.mrb[0].mxu0
    %2386 = vmatprep.mubr.f32.mxu0 0.0
    %2387 = vmatmul.mubr.f32.gmra.mrb[0].mxu0 %v2315
    %v2388 = vpop.f32.mrb[0].mxu0
    %v2389 = vadd.f32 0.0, %v2388
    %v2390 = vpop.f32.mrb[0].mxu0
    %2391 = vdwg.mxu0
    %v2392 = vadd.f32 %v2309, %v2384
    %v2393 = vadd.f32 %v2310, %v2389
    %v2394 = vadd.f32 %v2392, %v1490
    %v2395 = vadd.f32 %v2393, %v1490
    %v2396 = vmax.f32 %v2394, 0.0
    %v2397 = vmax.f32 %v2395, 0.0
    %v2399 = vrot.slane %v2396, 7
    %v2401 = vsel %vm305, %v1494, %v2399
    %v2402 = vld [vmem:[%s11] sm:$0xff]
    %v2403 = vld [vmem:[%s11 + $0x8] sm:$0xff]
    %v2404 = vld [vmem:[%s11 + $0x10] sm:$0xff]
    %v2405 = vld [vmem:[%s11 + $0x18] sm:$0xff]
    %v2406 = vld [vmem:[%s11 + $0x20] sm:$0xff]
    %v2407 = vld [vmem:[%s11 + $0x28] sm:$0xff]
    %v2408 = vld [vmem:[%s11 + $0x30] sm:$0xff]
    %v2409 = vld [vmem:[%s11 + $0x38] sm:$0xff]
    %v2411 = vrot.slane %v1494, 1
    %v2413 = vsel %vm305, %v2411, %v2396
    %s2414 = scalar_lea.vmem %s11, 64
    %v2415 = vld [vmem:[%s2414] sm:$0xff]
    %v2416 = vld [vmem:[%s2414 + $0x8] sm:$0xff]
    %v2417 = vld [vmem:[%s2414 + $0x10] sm:$0xff]
    %v2418 = vld [vmem:[%s2414 + $0x18] sm:$0xff]
    %v2419 = vld [vmem:[%s2414 + $0x20] sm:$0xff]
    %v2420 = vld [vmem:[%s2414 + $0x28] sm:$0xff]
    %v2421 = vld [vmem:[%s2414 + $0x30] sm:$0xff]
    %v2422 = vld [vmem:[%s2414 + $0x38] sm:$0xff]
    %v2424 = vsel %vm489, %v2413, 0
    %2426 = vmatprep.subr.mxu0 0.0
    %2427 = vmatpush1.msra.mxu0 %v2415
    %2428 = vmatprep.subr.mxu0 0.0
    %2429 = vmatpush1.msra.mxu0 %v2416
    %2430 = vmatprep.subr.mxu0 0.0
    %2431 = vmatpush1.msra.mxu0 %v2417
    %2432 = vmatprep.subr.mxu0 0.0
    %2433 = vmatpush1.msra.mxu0 %v2418
    %2434 = vmatprep.subr.mxu0 0.0
    %2435 = vmatpush1.msra.mxu0 %v2419
    %2436 = vmatprep.subr.mxu0 0.0
    %2437 = vmatpush1.msra.mxu0 %v2420
    %2438 = vmatprep.subr.mxu0 0.0
    %2439 = vmatpush1.msra.mxu0 %v2421
    %2440 = vmatprep.subr.mxu0 0.0
    %2441 = vmatpush1.msra.mxu0 %v2422
    %2442 = vmatprep.subr.mxu0 0.0
    %2443 = vmatpush1.msra.mxu0 0.0
    %2444 = vmatprep.subr.mxu0 0.0
    %2445 = vmatpush1.msra.mxu0 0.0
    %2446 = vmatprep.subr.mxu0 0.0
    %2447 = vmatpush1.msra.mxu0 0.0
    %2448 = vmatprep.subr.mxu0 0.0
    %2449 = vmatpush1.msra.mxu0 0.0
    %2450 = vmatprep.subr.mxu0 0.0
    %2451 = vmatpush1.msra.mxu0 0.0
    %2452 = vmatprep.subr.mxu0 0.0
    %2453 = vmatpush1.msra.mxu0 0.0
    %2454 = vmatprep.subr.mxu0 0.0
    %2455 = vmatpush1.msra.mxu0 0.0
    %2456 = vmatprep.subr.mxu0 0.0
    %2457 = vmatpush1.msra.mxu0 0.0
    %2458 = vmatprep.subr.mxu0 0.0
    %2459 = vmatpush1.msra.mxu0 0.0
    %2460 = vmatprep.subr.mxu0 0.0
    %2461 = vmatpush1.msra.mxu0 0.0
    %2462 = vmatprep.subr.mxu0 0.0
    %2463 = vmatpush1.msra.mxu0 0.0
    %2464 = vmatprep.subr.mxu0 0.0
    %2465 = vmatpush1.msra.mxu0 0.0
    %2466 = vmatprep.subr.mxu0 0.0
    %2467 = vmatpush1.msra.mxu0 0.0
    %2468 = vmatprep.subr.mxu0 0.0
    %2469 = vmatpush1.msra.mxu0 0.0
    %2470 = vmatprep.subr.mxu0 0.0
    %2471 = vmatpush1.msra.mxu0 0.0
    %2472 = vmatprep.subr.mxu0 0.0
    %2473 = vmatpush1.msra.mxu0 0.0
    %2474 = vmatprep.subr.mxu0 0.0
    %2475 = vmatpush1.msra.mxu0 0.0
    %2476 = vmatprep.subr.mxu0 0.0
    %2477 = vmatpush1.msra.mxu0 0.0
    %2478 = vmatprep.subr.mxu0 0.0
    %2479 = vmatpush1.msra.mxu0 0.0
    %2480 = vmatprep.subr.mxu0 0.0
    %2481 = vmatpush1.msra.mxu0 0.0
    %2482 = vmatprep.subr.mxu0 0.0
    %2483 = vmatpush1.msra.mxu0 0.0
    %2484 = vmatprep.subr.mxu0 0.0
    %2485 = vmatpush1.msra.mxu0 0.0
    %2486 = vmatprep.subr.mxu0 0.0
    %2487 = vmatpush1.msra.mxu0 0.0
    %2488 = vmatprep.subr.mxu0 0.0
    %2489 = vmatpush1.msra.mxu0 0.0
    %2490 = vmatprep.mubr.f32.mxu0 0.0
    %2491 = vmatmul.mubr.f32.gmra.mrb[0].mxu0 %v2424
    %v2492 = vpop.f32.mrb[0].mxu0
    %v2493 = vadd.f32 0.0, %v2492
    %v2494 = vpop.f32.mrb[0].mxu0
    %2495 = vdwg.mxu0
    %v2497 = vsel %vm489, %v2401, 0
    %2499 = vmatprep.subr.mxu0 0.0
    %2500 = vmatpush1.msra.mxu0 %v2402
    %2501 = vmatprep.subr.mxu0 0.0
    %2502 = vmatpush1.msra.mxu0 %v2403
    %2503 = vmatprep.subr.mxu0 0.0
    %2504 = vmatpush1.msra.mxu0 %v2404
    %2505 = vmatprep.subr.mxu0 0.0
    %2506 = vmatpush1.msra.mxu0 %v2405
    %2507 = vmatprep.subr.mxu0 0.0
    %2508 = vmatpush1.msra.mxu0 %v2406
    %2509 = vmatprep.subr.mxu0 0.0
    %2510 = vmatpush1.msra.mxu0 %v2407
    %2511 = vmatprep.subr.mxu0 0.0
    %2512 = vmatpush1.msra.mxu0 %v2408
    %2513 = vmatprep.subr.mxu0 0.0
    %2514 = vmatpush1.msra.mxu0 %v2409
    %2515 = vmatprep.subr.mxu0 0.0
    %2516 = vmatpush1.msra.mxu0 0.0
    %2517 = vmatprep.subr.mxu0 0.0
    %2518 = vmatpush1.msra.mxu0 0.0
    %2519 = vmatprep.subr.mxu0 0.0
    %2520 = vmatpush1.msra.mxu0 0.0
    %2521 = vmatprep.subr.mxu0 0.0
    %2522 = vmatpush1.msra.mxu0 0.0
    %2523 = vmatprep.subr.mxu0 0.0
    %2524 = vmatpush1.msra.mxu0 0.0
    %2525 = vmatprep.subr.mxu0 0.0
    %2526 = vmatpush1.msra.mxu0 0.0
    %2527 = vmatprep.subr.mxu0 0.0
    %2528 = vmatpush1.msra.mxu0 0.0
    %2529 = vmatprep.subr.mxu0 0.0
    %2530 = vmatpush1.msra.mxu0 0.0
    %2531 = vmatprep.subr.mxu0 0.0
    %2532 = vmatpush1.msra.mxu0 0.0
    %2533 = vmatprep.subr.mxu0 0.0
    %2534 = vmatpush1.msra.mxu0 0.0
    %2535 = vmatprep.subr.mxu0 0.0
    %2536 = vmatpush1.msra.mxu0 0.0
    %2537 = vmatprep.subr.mxu0 0.0
    %2538 = vmatpush1.msra.mxu0 0.0
    %2539 = vmatprep.subr.mxu0 0.0
    %2540 = vmatpush1.msra.mxu0 0.0
    %2541 = vmatprep.subr.mxu0 0.0
    %2542 = vmatpush1.msra.mxu0 0.0
    %2543 = vmatprep.subr.mxu0 0.0
    %2544 = vmatpush1.msra.mxu0 0.0
    %2545 = vmatprep.subr.mxu0 0.0
    %2546 = vmatpush1.msra.mxu0 0.0
    %2547 = vmatprep.subr.mxu0 0.0
    %2548 = vmatpush1.msra.mxu0 0.0
    %2549 = vmatprep.subr.mxu0 0.0
    %2550 = vmatpush1.msra.mxu0 0.0
    %2551 = vmatprep.subr.mxu0 0.0
    %2552 = vmatpush1.msra.mxu0 0.0
    %2553 = vmatprep.subr.mxu0 0.0
    %2554 = vmatpush1.msra.mxu0 0.0
    %2555 = vmatprep.subr.mxu0 0.0
    %2556 = vmatpush1.msra.mxu0 0.0
    %2557 = vmatprep.subr.mxu0 0.0
    %2558 = vmatpush1.msra.mxu0 0.0
    %2559 = vmatprep.subr.mxu0 0.0
    %2560 = vmatpush1.msra.mxu0 0.0
    %2561 = vmatprep.subr.mxu0 0.0
    %2562 = vmatpush1.msra.mxu0 0.0
    %2563 = vmatprep.mubr.f32.mxu0 0.0
    %2564 = vmatmul.mubr.f32.gmra.mrb[0].mxu0 %v2497
    %v2565 = vpop.f32.mrb[0].mxu0
    %v2566 = vadd.f32 %v2493, %v2565
    %v2567 = vpop.f32.mrb[0].mxu0
    %2568 = vdwg.mxu0
    %v2569 = vrot.slane %v1494, 2
    %v2571 = vrot.slane %v2396, 1
    %v2573 = vsel %vm305, %v2569, %v2571
    %s2574 = scalar_lea.vmem %s11, 128
    %v2575 = vld [vmem:[%s2574] sm:$0xff]
    %v2576 = vld [vmem:[%s2574 + $0x8] sm:$0xff]
    %v2577 = vld [vmem:[%s2574 + $0x10] sm:$0xff]
    %v2578 = vld [vmem:[%s2574 + $0x18] sm:$0xff]
    %v2579 = vld [vmem:[%s2574 + $0x20] sm:$0xff]
    %v2580 = vld [vmem:[%s2574 + $0x28] sm:$0xff]
    %v2581 = vld [vmem:[%s2574 + $0x30] sm:$0xff]
    %v2582 = vld [vmem:[%s2574 + $0x38] sm:$0xff]
    %v2584 = vsel %vm489, %v2573, 0
    %2586 = vmatprep.subr.mxu0 0.0
    %2587 = vmatpush1.msra.mxu0 %v2575
    %2588 = vmatprep.subr.mxu0 0.0
    %2589 = vmatpush1.msra.mxu0 %v2576
    %2590 = vmatprep.subr.mxu0 0.0
    %2591 = vmatpush1.msra.mxu0 %v2577
    %2592 = vmatprep.subr.mxu0 0.0
    %2593 = vmatpush1.msra.mxu0 %v2578
    %2594 = vmatprep.subr.mxu0 0.0
    %2595 = vmatpush1.msra.mxu0 %v2579
    %2596 = vmatprep.subr.mxu0 0.0
    %2597 = vmatpush1.msra.mxu0 %v2580
    %2598 = vmatprep.subr.mxu0 0.0
    %2599 = vmatpush1.msra.mxu0 %v2581
    %2600 = vmatprep.subr.mxu0 0.0
    %2601 = vmatpush1.msra.mxu0 %v2582
    %2602 = vmatprep.subr.mxu0 0.0
    %2603 = vmatpush1.msra.mxu0 0.0
    %2604 = vmatprep.subr.mxu0 0.0
    %2605 = vmatpush1.msra.mxu0 0.0
    %2606 = vmatprep.subr.mxu0 0.0
    %2607 = vmatpush1.msra.mxu0 0.0
    %2608 = vmatprep.subr.mxu0 0.0
    %2609 = vmatpush1.msra.mxu0 0.0
    %2610 = vmatprep.subr.mxu0 0.0
    %2611 = vmatpush1.msra.mxu0 0.0
    %2612 = vmatprep.subr.mxu0 0.0
    %2613 = vmatpush1.msra.mxu0 0.0
    %2614 = vmatprep.subr.mxu0 0.0
    %2615 = vmatpush1.msra.mxu0 0.0
    %2616 = vmatprep.subr.mxu0 0.0
    %2617 = vmatpush1.msra.mxu0 0.0
    %2618 = vmatprep.subr.mxu0 0.0
    %2619 = vmatpush1.msra.mxu0 0.0
    %2620 = vmatprep.subr.mxu0 0.0
    %2621 = vmatpush1.msra.mxu0 0.0
    %2622 = vmatprep.subr.mxu0 0.0
    %2623 = vmatpush1.msra.mxu0 0.0
    %2624 = vmatprep.subr.mxu0 0.0
    %2625 = vmatpush1.msra.mxu0 0.0
    %2626 = vmatprep.subr.mxu0 0.0
    %2627 = vmatpush1.msra.mxu0 0.0
    %2628 = vmatprep.subr.mxu0 0.0
    %2629 = vmatpush1.msra.mxu0 0.0
    %2630 = vmatprep.subr.mxu0 0.0
    %2631 = vmatpush1.msra.mxu0 0.0
    %2632 = vmatprep.subr.mxu0 0.0
    %2633 = vmatpush1.msra.mxu0 0.0
    %2634 = vmatprep.subr.mxu0 0.0
    %2635 = vmatpush1.msra.mxu0 0.0
    %2636 = vmatprep.subr.mxu0 0.0
    %2637 = vmatpush1.msra.mxu0 0.0
    %2638 = vmatprep.subr.mxu0 0.0
    %2639 = vmatpush1.msra.mxu0 0.0
    %2640 = vmatprep.subr.mxu0 0.0
    %2641 = vmatpush1.msra.mxu0 0.0
    %2642 = vmatprep.subr.mxu0 0.0
    %2643 = vmatpush1.msra.mxu0 0.0
    %2644 = vmatprep.subr.mxu0 0.0
    %2645 = vmatpush1.msra.mxu0 0.0
    %2646 = vmatprep.subr.mxu0 0.0
    %2647 = vmatpush1.msra.mxu0 0.0
    %2648 = vmatprep.subr.mxu0 0.0
    %2649 = vmatpush1.msra.mxu0 0.0
    %2650 = vmatprep.mubr.f32.mxu0 0.0
    %2651 = vmatmul.mubr.f32.gmra.mrb[0].mxu0 %v2584
    %v2652 = vpop.f32.mrb[0].mxu0
    %v2653 = vadd.f32 0.0, %v2652
    %v2654 = vpop.f32.mrb[0].mxu0
    %2655 = vdwg.mxu0
    %v2656 = vadd.f32 %v2566, %v2653
    %v2657 = vrot.slane %v1494, 3
    %v2659 = vrot.slane %v2396, 2
    %v2661 = vsel %vm305, %v2657, %v2659
    %s2662 = scalar_lea.vmem %s11, 192
    %v2663 = vld [vmem:[%s2662] sm:$0xff]
    %v2664 = vld [vmem:[%s2662 + $0x8] sm:$0xff]
    %v2665 = vld [vmem:[%s2662 + $0x10] sm:$0xff]
    %v2666 = vld [vmem:[%s2662 + $0x18] sm:$0xff]
    %v2667 = vld [vmem:[%s2662 + $0x20] sm:$0xff]
    %v2668 = vld [vmem:[%s2662 + $0x28] sm:$0xff]
    %v2669 = vld [vmem:[%s2662 + $0x30] sm:$0xff]
    %v2670 = vld [vmem:[%s2662 + $0x38] sm:$0xff]
    %v2672 = vsel %vm489, %v2661, 0
    %2674 = vmatprep.subr.mxu0 0.0
    %2675 = vmatpush1.msra.mxu0 %v2663
    %2676 = vmatprep.subr.mxu0 0.0
    %2677 = vmatpush1.msra.mxu0 %v2664
    %2678 = vmatprep.subr.mxu0 0.0
    %2679 = vmatpush1.msra.mxu0 %v2665
    %2680 = vmatprep.subr.mxu0 0.0
    %2681 = vmatpush1.msra.mxu0 %v2666
    %2682 = vmatprep.subr.mxu0 0.0
    %2683 = vmatpush1.msra.mxu0 %v2667
    %2684 = vmatprep.subr.mxu0 0.0
    %2685 = vmatpush1.msra.mxu0 %v2668
    %2686 = vmatprep.subr.mxu0 0.0
    %2687 = vmatpush1.msra.mxu0 %v2669
    %2688 = vmatprep.subr.mxu0 0.0
    %2689 = vmatpush1.msra.mxu0 %v2670
    %2690 = vmatprep.subr.mxu0 0.0
    %2691 = vmatpush1.msra.mxu0 0.0
    %2692 = vmatprep.subr.mxu0 0.0
    %2693 = vmatpush1.msra.mxu0 0.0
    %2694 = vmatprep.subr.mxu0 0.0
    %2695 = vmatpush1.msra.mxu0 0.0
    %2696 = vmatprep.subr.mxu0 0.0
    %2697 = vmatpush1.msra.mxu0 0.0
    %2698 = vmatprep.subr.mxu0 0.0
    %2699 = vmatpush1.msra.mxu0 0.0
    %2700 = vmatprep.subr.mxu0 0.0
    %2701 = vmatpush1.msra.mxu0 0.0
    %2702 = vmatprep.subr.mxu0 0.0
    %2703 = vmatpush1.msra.mxu0 0.0
    %2704 = vmatprep.subr.mxu0 0.0
    %2705 = vmatpush1.msra.mxu0 0.0
    %2706 = vmatprep.subr.mxu0 0.0
    %2707 = vmatpush1.msra.mxu0 0.0
    %2708 = vmatprep.subr.mxu0 0.0
    %2709 = vmatpush1.msra.mxu0 0.0
    %2710 = vmatprep.subr.mxu0 0.0
    %2711 = vmatpush1.msra.mxu0 0.0
    %2712 = vmatprep.subr.mxu0 0.0
    %2713 = vmatpush1.msra.mxu0 0.0
    %2714 = vmatprep.subr.mxu0 0.0
    %2715 = vmatpush1.msra.mxu0 0.0
    %2716 = vmatprep.subr.mxu0 0.0
    %2717 = vmatpush1.msra.mxu0 0.0
    %2718 = vmatprep.subr.mxu0 0.0
    %2719 = vmatpush1.msra.mxu0 0.0
    %2720 = vmatprep.subr.mxu0 0.0
    %2721 = vmatpush1.msra.mxu0 0.0
    %2722 = vmatprep.subr.mxu0 0.0
    %2723 = vmatpush1.msra.mxu0 0.0
    %2724 = vmatprep.subr.mxu0 0.0
    %2725 = vmatpush1.msra.mxu0 0.0
    %2726 = vmatprep.subr.mxu0 0.0
    %2727 = vmatpush1.msra.mxu0 0.0
    %2728 = vmatprep.subr.mxu0 0.0
    %2729 = vmatpush1.msra.mxu0 0.0
    %2730 = vmatprep.subr.mxu0 0.0
    %2731 = vmatpush1.msra.mxu0 0.0
    %2732 = vmatprep.subr.mxu0 0.0
    %2733 = vmatpush1.msra.mxu0 0.0
    %2734 = vmatprep.subr.mxu0 0.0
    %2735 = vmatpush1.msra.mxu0 0.0
    %2736 = vmatprep.subr.mxu0 0.0
    %2737 = vmatpush1.msra.mxu0 0.0
    %2738 = vmatprep.mubr.f32.mxu0 0.0
    %2739 = vmatmul.mubr.f32.gmra.mrb[0].mxu0 %v2672
    %v2740 = vpop.f32.mrb[0].mxu0
    %v2741 = vadd.f32 0.0, %v2740
    %v2742 = vpop.f32.mrb[0].mxu0
    %2743 = vdwg.mxu0
    %v2744 = vadd.f32 %v2656, %v2741
    %v2745 = vrot.slane %v1494, 4
    %v2747 = vrot.slane %v2396, 3
    %v2749 = vsel %vm305, %v2745, %v2747
    %s2750 = scalar_lea.vmem %s11, 256
    %v2751 = vld [vmem:[%s2750] sm:$0xff]
    %v2752 = vld [vmem:[%s2750 + $0x8] sm:$0xff]
    %v2753 = vld [vmem:[%s2750 + $0x10] sm:$0xff]
    %v2754 = vld [vmem:[%s2750 + $0x18] sm:$0xff]
    %v2755 = vld [vmem:[%s2750 + $0x20] sm:$0xff]
    %v2756 = vld [vmem:[%s2750 + $0x28] sm:$0xff]
    %v2757 = vld [vmem:[%s2750 + $0x30] sm:$0xff]
    %v2758 = vld [vmem:[%s2750 + $0x38] sm:$0xff]
    %v2760 = vsel %vm489, %v2749, 0
    %2762 = vmatprep.subr.mxu0 0.0
    %2763 = vmatpush1.msra.mxu0 %v2751
    %2764 = vmatprep.subr.mxu0 0.0
    %2765 = vmatpush1.msra.mxu0 %v2752
    %2766 = vmatprep.subr.mxu0 0.0
    %2767 = vmatpush1.msra.mxu0 %v2753
    %2768 = vmatprep.subr.mxu0 0.0
    %2769 = vmatpush1.msra.mxu0 %v2754
    %2770 = vmatprep.subr.mxu0 0.0
    %2771 = vmatpush1.msra.mxu0 %v2755
    %2772 = vmatprep.subr.mxu0 0.0
    %2773 = vmatpush1.msra.mxu0 %v2756
    %2774 = vmatprep.subr.mxu0 0.0
    %2775 = vmatpush1.msra.mxu0 %v2757
    %2776 = vmatprep.subr.mxu0 0.0
    %2777 = vmatpush1.msra.mxu0 %v2758
    %2778 = vmatprep.subr.mxu0 0.0
    %2779 = vmatpush1.msra.mxu0 0.0
    %2780 = vmatprep.subr.mxu0 0.0
    %2781 = vmatpush1.msra.mxu0 0.0
    %2782 = vmatprep.subr.mxu0 0.0
    %2783 = vmatpush1.msra.mxu0 0.0
    %2784 = vmatprep.subr.mxu0 0.0
    %2785 = vmatpush1.msra.mxu0 0.0
    %2786 = vmatprep.subr.mxu0 0.0
    %2787 = vmatpush1.msra.mxu0 0.0
    %2788 = vmatprep.subr.mxu0 0.0
    %2789 = vmatpush1.msra.mxu0 0.0
    %2790 = vmatprep.subr.mxu0 0.0
    %2791 = vmatpush1.msra.mxu0 0.0
    %2792 = vmatprep.subr.mxu0 0.0
    %2793 = vmatpush1.msra.mxu0 0.0
    %2794 = vmatprep.subr.mxu0 0.0
    %2795 = vmatpush1.msra.mxu0 0.0
    %2796 = vmatprep.subr.mxu0 0.0
    %2797 = vmatpush1.msra.mxu0 0.0
    %2798 = vmatprep.subr.mxu0 0.0
    %2799 = vmatpush1.msra.mxu0 0.0
    %2800 = vmatprep.subr.mxu0 0.0
    %2801 = vmatpush1.msra.mxu0 0.0
    %2802 = vmatprep.subr.mxu0 0.0
    %2803 = vmatpush1.msra.mxu0 0.0
    %2804 = vmatprep.subr.mxu0 0.0
    %2805 = vmatpush1.msra.mxu0 0.0
    %2806 = vmatprep.subr.mxu0 0.0
    %2807 = vmatpush1.msra.mxu0 0.0
    %2808 = vmatprep.subr.mxu0 0.0
    %2809 = vmatpush1.msra.mxu0 0.0
    %2810 = vmatprep.subr.mxu0 0.0
    %2811 = vmatpush1.msra.mxu0 0.0
    %2812 = vmatprep.subr.mxu0 0.0
    %2813 = vmatpush1.msra.mxu0 0.0
    %2814 = vmatprep.subr.mxu0 0.0
    %2815 = vmatpush1.msra.mxu0 0.0
    %2816 = vmatprep.subr.mxu0 0.0
    %2817 = vmatpush1.msra.mxu0 0.0
    %2818 = vmatprep.subr.mxu0 0.0
    %2819 = vmatpush1.msra.mxu0 0.0
    %2820 = vmatprep.subr.mxu0 0.0
    %2821 = vmatpush1.msra.mxu0 0.0
    %2822 = vmatprep.subr.mxu0 0.0
    %2823 = vmatpush1.msra.mxu0 0.0
    %2824 = vmatprep.subr.mxu0 0.0
    %2825 = vmatpush1.msra.mxu0 0.0
    %2826 = vmatprep.mubr.f32.mxu0 0.0
    %2827 = vmatmul.mubr.f32.gmra.mrb[0].mxu0 %v2760
    %v2828 = vpop.f32.mrb[0].mxu0
    %v2829 = vadd.f32 0.0, %v2828
    %v2830 = vpop.f32.mrb[0].mxu0
    %2831 = vdwg.mxu0
    %v2832 = vadd.f32 %v2744, %v2829
    %v2833 = vrot.slane %v1494, 5
    %v2835 = vrot.slane %v2396, 4
    %v2837 = vsel %vm305, %v2833, %v2835
    %s2838 = scalar_lea.vmem %s11, 320
    %v2839 = vld [vmem:[%s2838] sm:$0xff]
    %v2840 = vld [vmem:[%s2838 + $0x8] sm:$0xff]
    %v2841 = vld [vmem:[%s2838 + $0x10] sm:$0xff]
    %v2842 = vld [vmem:[%s2838 + $0x18] sm:$0xff]
    %v2843 = vld [vmem:[%s2838 + $0x20] sm:$0xff]
    %v2844 = vld [vmem:[%s2838 + $0x28] sm:$0xff]
    %v2845 = vld [vmem:[%s2838 + $0x30] sm:$0xff]
    %v2846 = vld [vmem:[%s2838 + $0x38] sm:$0xff]
    %v2848 = vsel %vm489, %v2837, 0
    %2850 = vmatprep.subr.mxu0 0.0
    %2851 = vmatpush1.msra.mxu0 %v2839
    %2852 = vmatprep.subr.mxu0 0.0
    %2853 = vmatpush1.msra.mxu0 %v2840
    %2854 = vmatprep.subr.mxu0 0.0
    %2855 = vmatpush1.msra.mxu0 %v2841
    %2856 = vmatprep.subr.mxu0 0.0
    %2857 = vmatpush1.msra.mxu0 %v2842
    %2858 = vmatprep.subr.mxu0 0.0
    %2859 = vmatpush1.msra.mxu0 %v2843
    %2860 = vmatprep.subr.mxu0 0.0
    %2861 = vmatpush1.msra.mxu0 %v2844
    %2862 = vmatprep.subr.mxu0 0.0
    %2863 = vmatpush1.msra.mxu0 %v2845
    %2864 = vmatprep.subr.mxu0 0.0
    %2865 = vmatpush1.msra.mxu0 %v2846
    %2866 = vmatprep.subr.mxu0 0.0
    %2867 = vmatpush1.msra.mxu0 0.0
    %2868 = vmatprep.subr.mxu0 0.0
    %2869 = vmatpush1.msra.mxu0 0.0
    %2870 = vmatprep.subr.mxu0 0.0
    %2871 = vmatpush1.msra.mxu0 0.0
    %2872 = vmatprep.subr.mxu0 0.0
    %2873 = vmatpush1.msra.mxu0 0.0
    %2874 = vmatprep.subr.mxu0 0.0
    %2875 = vmatpush1.msra.mxu0 0.0
    %2876 = vmatprep.subr.mxu0 0.0
    %2877 = vmatpush1.msra.mxu0 0.0
    %2878 = vmatprep.subr.mxu0 0.0
    %2879 = vmatpush1.msra.mxu0 0.0
    %2880 = vmatprep.subr.mxu0 0.0
    %2881 = vmatpush1.msra.mxu0 0.0
    %2882 = vmatprep.subr.mxu0 0.0
    %2883 = vmatpush1.msra.mxu0 0.0
    %2884 = vmatprep.subr.mxu0 0.0
    %2885 = vmatpush1.msra.mxu0 0.0
    %2886 = vmatprep.subr.mxu0 0.0
    %2887 = vmatpush1.msra.mxu0 0.0
    %2888 = vmatprep.subr.mxu0 0.0
    %2889 = vmatpush1.msra.mxu0 0.0
    %2890 = vmatprep.subr.mxu0 0.0
    %2891 = vmatpush1.msra.mxu0 0.0
    %2892 = vmatprep.subr.mxu0 0.0
    %2893 = vmatpush1.msra.mxu0 0.0
    %2894 = vmatprep.subr.mxu0 0.0
    %2895 = vmatpush1.msra.mxu0 0.0
    %2896 = vmatprep.subr.mxu0 0.0
    %2897 = vmatpush1.msra.mxu0 0.0
    %2898 = vmatprep.subr.mxu0 0.0
    %2899 = vmatpush1.msra.mxu0 0.0
    %2900 = vmatprep.subr.mxu0 0.0
    %2901 = vmatpush1.msra.mxu0 0.0
    %2902 = vmatprep.subr.mxu0 0.0
    %2903 = vmatpush1.msra.mxu0 0.0
    %2904 = vmatprep.subr.mxu0 0.0
    %2905 = vmatpush1.msra.mxu0 0.0
    %2906 = vmatprep.subr.mxu0 0.0
    %2907 = vmatpush1.msra.mxu0 0.0
    %2908 = vmatprep.subr.mxu0 0.0
    %2909 = vmatpush1.msra.mxu0 0.0
    %2910 = vmatprep.subr.mxu0 0.0
    %2911 = vmatpush1.msra.mxu0 0.0
    %2912 = vmatprep.subr.mxu0 0.0
    %2913 = vmatpush1.msra.mxu0 0.0
    %2914 = vmatprep.mubr.f32.mxu0 0.0
    %2915 = vmatmul.mubr.f32.gmra.mrb[0].mxu0 %v2848
    %v2916 = vpop.f32.mrb[0].mxu0
    %v2917 = vadd.f32 0.0, %v2916
    %v2918 = vpop.f32.mrb[0].mxu0
    %2919 = vdwg.mxu0
    %v2920 = vadd.f32 %v2832, %v2917
    %v2921 = vrot.slane %v1494, 6
    %v2923 = vrot.slane %v2396, 5
    %v2925 = vsel %vm305, %v2921, %v2923
    %s2926 = scalar_lea.vmem %s11, 384
    %v2927 = vld [vmem:[%s2926] sm:$0xff]
    %v2928 = vld [vmem:[%s2926 + $0x8] sm:$0xff]
    %v2929 = vld [vmem:[%s2926 + $0x10] sm:$0xff]
    %v2930 = vld [vmem:[%s2926 + $0x18] sm:$0xff]
    %v2931 = vld [vmem:[%s2926 + $0x20] sm:$0xff]
    %v2932 = vld [vmem:[%s2926 + $0x28] sm:$0xff]
    %v2933 = vld [vmem:[%s2926 + $0x30] sm:$0xff]
    %v2934 = vld [vmem:[%s2926 + $0x38] sm:$0xff]
    %v2936 = vsel %vm489, %v2925, 0
    %2938 = vmatprep.subr.mxu0 0.0
    %2939 = vmatpush1.msra.mxu0 %v2927
    %2940 = vmatprep.subr.mxu0 0.0
    %2941 = vmatpush1.msra.mxu0 %v2928
    %2942 = vmatprep.subr.mxu0 0.0
    %2943 = vmatpush1.msra.mxu0 %v2929
    %2944 = vmatprep.subr.mxu0 0.0
    %2945 = vmatpush1.msra.mxu0 %v2930
    %2946 = vmatprep.subr.mxu0 0.0
    %2947 = vmatpush1.msra.mxu0 %v2931
    %2948 = vmatprep.subr.mxu0 0.0
    %2949 = vmatpush1.msra.mxu0 %v2932
    %2950 = vmatprep.subr.mxu0 0.0
    %2951 = vmatpush1.msra.mxu0 %v2933
    %2952 = vmatprep.subr.mxu0 0.0
    %2953 = vmatpush1.msra.mxu0 %v2934
    %2954 = vmatprep.subr.mxu0 0.0
    %2955 = vmatpush1.msra.mxu0 0.0
    %2956 = vmatprep.subr.mxu0 0.0
    %2957 = vmatpush1.msra.mxu0 0.0
    %2958 = vmatprep.subr.mxu0 0.0
    %2959 = vmatpush1.msra.mxu0 0.0
    %2960 = vmatprep.subr.mxu0 0.0
    %2961 = vmatpush1.msra.mxu0 0.0
    %2962 = vmatprep.subr.mxu0 0.0
    %2963 = vmatpush1.msra.mxu0 0.0
    %2964 = vmatprep.subr.mxu0 0.0
    %2965 = vmatpush1.msra.mxu0 0.0
    %2966 = vmatprep.subr.mxu0 0.0
    %2967 = vmatpush1.msra.mxu0 0.0
    %2968 = vmatprep.subr.mxu0 0.0
    %2969 = vmatpush1.msra.mxu0 0.0
    %2970 = vmatprep.subr.mxu0 0.0
    %2971 = vmatpush1.msra.mxu0 0.0
    %2972 = vmatprep.subr.mxu0 0.0
    %2973 = vmatpush1.msra.mxu0 0.0
    %2974 = vmatprep.subr.mxu0 0.0
    %2975 = vmatpush1.msra.mxu0 0.0
    %2976 = vmatprep.subr.mxu0 0.0
    %2977 = vmatpush1.msra.mxu0 0.0
    %2978 = vmatprep.subr.mxu0 0.0
    %2979 = vmatpush1.msra.mxu0 0.0
    %2980 = vmatprep.subr.mxu0 0.0
    %2981 = vmatpush1.msra.mxu0 0.0
    %2982 = vmatprep.subr.mxu0 0.0
    %2983 = vmatpush1.msra.mxu0 0.0
    %2984 = vmatprep.subr.mxu0 0.0
    %2985 = vmatpush1.msra.mxu0 0.0
    %2986 = vmatprep.subr.mxu0 0.0
    %2987 = vmatpush1.msra.mxu0 0.0
    %2988 = vmatprep.subr.mxu0 0.0
    %2989 = vmatpush1.msra.mxu0 0.0
    %2990 = vmatprep.subr.mxu0 0.0
    %2991 = vmatpush1.msra.mxu0 0.0
    %2992 = vmatprep.subr.mxu0 0.0
    %2993 = vmatpush1.msra.mxu0 0.0
    %2994 = vmatprep.subr.mxu0 0.0
    %2995 = vmatpush1.msra.mxu0 0.0
    %2996 = vmatprep.subr.mxu0 0.0
    %2997 = vmatpush1.msra.mxu0 0.0
    %2998 = vmatprep.subr.mxu0 0.0
    %2999 = vmatpush1.msra.mxu0 0.0
    %3000 = vmatprep.subr.mxu0 0.0
    %3001 = vmatpush1.msra.mxu0 0.0
    %3002 = vmatprep.mubr.f32.mxu0 0.0
    %3003 = vmatmul.mubr.f32.gmra.mrb[0].mxu0 %v2936
    %v3004 = vpop.f32.mrb[0].mxu0
    %v3005 = vadd.f32 0.0, %v3004
    %v3006 = vpop.f32.mrb[0].mxu0
    %3007 = vdwg.mxu0
    %v3008 = vadd.f32 %v2920, %v3005
    %v3009 = vrot.slane %v1494, 7
    %v3011 = vrot.slane %v2396, 6
    %v3013 = vsel %vm305, %v3009, %v3011
    %s3014 = scalar_lea.vmem %s11, 448
    %v3015 = vld [vmem:[%s3014] sm:$0xff]
    %v3016 = vld [vmem:[%s3014 + $0x8] sm:$0xff]
    %v3017 = vld [vmem:[%s3014 + $0x10] sm:$0xff]
    %v3018 = vld [vmem:[%s3014 + $0x18] sm:$0xff]
    %v3019 = vld [vmem:[%s3014 + $0x20] sm:$0xff]
    %v3020 = vld [vmem:[%s3014 + $0x28] sm:$0xff]
    %v3021 = vld [vmem:[%s3014 + $0x30] sm:$0xff]
    %v3022 = vld [vmem:[%s3014 + $0x38] sm:$0xff]
    %v3024 = vsel %vm489, %v3013, 0
    %3026 = vmatprep.subr.mxu0 0.0
    %3027 = vmatpush1.msra.mxu0 %v3015
    %3028 = vmatprep.subr.mxu0 0.0
    %3029 = vmatpush1.msra.mxu0 %v3016
    %3030 = vmatprep.subr.mxu0 0.0
    %3031 = vmatpush1.msra.mxu0 %v3017
    %3032 = vmatprep.subr.mxu0 0.0
    %3033 = vmatpush1.msra.mxu0 %v3018
    %3034 = vmatprep.subr.mxu0 0.0
    %3035 = vmatpush1.msra.mxu0 %v3019
    %3036 = vmatprep.subr.mxu0 0.0
    %3037 = vmatpush1.msra.mxu0 %v3020
    %3038 = vmatprep.subr.mxu0 0.0
    %3039 = vmatpush1.msra.mxu0 %v3021
    %3040 = vmatprep.subr.mxu0 0.0
    %3041 = vmatpush1.msra.mxu0 %v3022
    %3042 = vmatprep.subr.mxu0 0.0
    %3043 = vmatpush1.msra.mxu0 0.0
    %3044 = vmatprep.subr.mxu0 0.0
    %3045 = vmatpush1.msra.mxu0 0.0
    %3046 = vmatprep.subr.mxu0 0.0
    %3047 = vmatpush1.msra.mxu0 0.0
    %3048 = vmatprep.subr.mxu0 0.0
    %3049 = vmatpush1.msra.mxu0 0.0
    %3050 = vmatprep.subr.mxu0 0.0
    %3051 = vmatpush1.msra.mxu0 0.0
    %3052 = vmatprep.subr.mxu0 0.0
    %3053 = vmatpush1.msra.mxu0 0.0
    %3054 = vmatprep.subr.mxu0 0.0
    %3055 = vmatpush1.msra.mxu0 0.0
    %3056 = vmatprep.subr.mxu0 0.0
    %3057 = vmatpush1.msra.mxu0 0.0
    %3058 = vmatprep.subr.mxu0 0.0
    %3059 = vmatpush1.msra.mxu0 0.0
    %3060 = vmatprep.subr.mxu0 0.0
    %3061 = vmatpush1.msra.mxu0 0.0
    %3062 = vmatprep.subr.mxu0 0.0
    %3063 = vmatpush1.msra.mxu0 0.0
    %3064 = vmatprep.subr.mxu0 0.0
    %3065 = vmatpush1.msra.mxu0 0.0
    %3066 = vmatprep.subr.mxu0 0.0
    %3067 = vmatpush1.msra.mxu0 0.0
    %3068 = vmatprep.subr.mxu0 0.0
    %3069 = vmatpush1.msra.mxu0 0.0
    %3070 = vmatprep.subr.mxu0 0.0
    %3071 = vmatpush1.msra.mxu0 0.0
    %3072 = vmatprep.subr.mxu0 0.0
    %3073 = vmatpush1.msra.mxu0 0.0
    %3074 = vmatprep.subr.mxu0 0.0
    %3075 = vmatpush1.msra.mxu0 0.0
    %3076 = vmatprep.subr.mxu0 0.0
    %3077 = vmatpush1.msra.mxu0 0.0
    %3078 = vmatprep.subr.mxu0 0.0
    %3079 = vmatpush1.msra.mxu0 0.0
    %3080 = vmatprep.subr.mxu0 0.0
    %3081 = vmatpush1.msra.mxu0 0.0
    %3082 = vmatprep.subr.mxu0 0.0
    %3083 = vmatpush1.msra.mxu0 0.0
    %3084 = vmatprep.subr.mxu0 0.0
    %3085 = vmatpush1.msra.mxu0 0.0
    %3086 = vmatprep.subr.mxu0 0.0
    %3087 = vmatpush1.msra.mxu0 0.0
    %3088 = vmatprep.subr.mxu0 0.0
    %3089 = vmatpush1.msra.mxu0 0.0
    %3090 = vmatprep.mubr.f32.mxu0 0.0
    %3091 = vmatmul.mubr.f32.gmra.mrb[0].mxu0 %v3024
    %v3092 = vpop.f32.mrb[0].mxu0
    %v3093 = vadd.f32 0.0, %v3092
    %v3094 = vpop.f32.mrb[0].mxu0
    %3095 = vdwg.mxu0
    %v3096 = vadd.f32 %v3008, %v3093
    %v3098 = vrot.slane %v2397, 7
    %v3100 = vsel %vm305, %v1495, %v3098
    %s3101 = scalar_lea.vmem %s11, 512
    %v3102 = vld [vmem:[%s3101] sm:$0xff]
    %v3103 = vld [vmem:[%s3101 + $0x8] sm:$0xff]
    %v3104 = vld [vmem:[%s3101 + $0x10] sm:$0xff]
    %v3105 = vld [vmem:[%s3101 + $0x18] sm:$0xff]
    %v3106 = vld [vmem:[%s3101 + $0x20] sm:$0xff]
    %v3107 = vld [vmem:[%s3101 + $0x28] sm:$0xff]
    %v3108 = vld [vmem:[%s3101 + $0x30] sm:$0xff]
    %v3109 = vld [vmem:[%s3101 + $0x38] sm:$0xff]
    %v3111 = vsel %vm489, %v3100, 0
    %3113 = vmatprep.subr.mxu0 0.0
    %3114 = vmatpush1.msra.mxu0 %v3102
    %3115 = vmatprep.subr.mxu0 0.0
    %3116 = vmatpush1.msra.mxu0 %v3103
    %3117 = vmatprep.subr.mxu0 0.0
    %3118 = vmatpush1.msra.mxu0 %v3104
    %3119 = vmatprep.subr.mxu0 0.0
    %3120 = vmatpush1.msra.mxu0 %v3105
    %3121 = vmatprep.subr.mxu0 0.0
    %3122 = vmatpush1.msra.mxu0 %v3106
    %3123 = vmatprep.subr.mxu0 0.0
    %3124 = vmatpush1.msra.mxu0 %v3107
    %3125 = vmatprep.subr.mxu0 0.0
    %3126 = vmatpush1.msra.mxu0 %v3108
    %3127 = vmatprep.subr.mxu0 0.0
    %3128 = vmatpush1.msra.mxu0 %v3109
    %3129 = vmatprep.subr.mxu0 0.0
    %3130 = vmatpush1.msra.mxu0 0.0
    %3131 = vmatprep.subr.mxu0 0.0
    %3132 = vmatpush1.msra.mxu0 0.0
    %3133 = vmatprep.subr.mxu0 0.0
    %3134 = vmatpush1.msra.mxu0 0.0
    %3135 = vmatprep.subr.mxu0 0.0
    %3136 = vmatpush1.msra.mxu0 0.0
    %3137 = vmatprep.subr.mxu0 0.0
    %3138 = vmatpush1.msra.mxu0 0.0
    %3139 = vmatprep.subr.mxu0 0.0
    %3140 = vmatpush1.msra.mxu0 0.0
    %3141 = vmatprep.subr.mxu0 0.0
    %3142 = vmatpush1.msra.mxu0 0.0
    %3143 = vmatprep.subr.mxu0 0.0
    %3144 = vmatpush1.msra.mxu0 0.0
    %3145 = vmatprep.subr.mxu0 0.0
    %3146 = vmatpush1.msra.mxu0 0.0
    %3147 = vmatprep.subr.mxu0 0.0
    %3148 = vmatpush1.msra.mxu0 0.0
    %3149 = vmatprep.subr.mxu0 0.0
    %3150 = vmatpush1.msra.mxu0 0.0
    %3151 = vmatprep.subr.mxu0 0.0
    %3152 = vmatpush1.msra.mxu0 0.0
    %3153 = vmatprep.subr.mxu0 0.0
    %3154 = vmatpush1.msra.mxu0 0.0
    %3155 = vmatprep.subr.mxu0 0.0
    %3156 = vmatpush1.msra.mxu0 0.0
    %3157 = vmatprep.subr.mxu0 0.0
    %3158 = vmatpush1.msra.mxu0 0.0
    %3159 = vmatprep.subr.mxu0 0.0
    %3160 = vmatpush1.msra.mxu0 0.0
    %3161 = vmatprep.subr.mxu0 0.0
    %3162 = vmatpush1.msra.mxu0 0.0
    %3163 = vmatprep.subr.mxu0 0.0
    %3164 = vmatpush1.msra.mxu0 0.0
    %3165 = vmatprep.subr.mxu0 0.0
    %3166 = vmatpush1.msra.mxu0 0.0
    %3167 = vmatprep.subr.mxu0 0.0
    %3168 = vmatpush1.msra.mxu0 0.0
    %3169 = vmatprep.subr.mxu0 0.0
    %3170 = vmatpush1.msra.mxu0 0.0
    %3171 = vmatprep.subr.mxu0 0.0
    %3172 = vmatpush1.msra.mxu0 0.0
    %3173 = vmatprep.subr.mxu0 0.0
    %3174 = vmatpush1.msra.mxu0 0.0
    %3175 = vmatprep.subr.mxu0 0.0
    %3176 = vmatpush1.msra.mxu0 0.0
    %3177 = vmatprep.mubr.f32.mxu0 0.0
    %3178 = vmatmul.mubr.f32.gmra.mrb[0].mxu0 %v3111
    %v3179 = vpop.f32.mrb[0].mxu0
    %v3180 = vadd.f32 0.0, %v3179
    %v3181 = vpop.f32.mrb[0].mxu0
    %3182 = vdwg.mxu0
    %v3183 = vadd.f32 %v3096, %v3180
    %v3185 = vrot.slane %v1495, 1
    %v3187 = vsel %vm305, %v3185, %v2397
    %s3188 = scalar_lea.vmem %s11, 576
    %v3189 = vld [vmem:[%s3188] sm:$0xff]
    %v3190 = vld [vmem:[%s3188 + $0x8] sm:$0xff]
    %v3191 = vld [vmem:[%s3188 + $0x10] sm:$0xff]
    %v3192 = vld [vmem:[%s3188 + $0x18] sm:$0xff]
    %v3193 = vld [vmem:[%s3188 + $0x20] sm:$0xff]
    %v3194 = vld [vmem:[%s3188 + $0x28] sm:$0xff]
    %v3195 = vld [vmem:[%s3188 + $0x30] sm:$0xff]
    %v3196 = vld [vmem:[%s3188 + $0x38] sm:$0xff]
    %v3198 = vsel %vm489, %v3187, 0
    %3200 = vmatprep.subr.mxu0 0.0
    %3201 = vmatpush1.msra.mxu0 %v3189
    %3202 = vmatprep.subr.mxu0 0.0
    %3203 = vmatpush1.msra.mxu0 %v3190
    %3204 = vmatprep.subr.mxu0 0.0
    %3205 = vmatpush1.msra.mxu0 %v3191
    %3206 = vmatprep.subr.mxu0 0.0
    %3207 = vmatpush1.msra.mxu0 %v3192
    %3208 = vmatprep.subr.mxu0 0.0
    %3209 = vmatpush1.msra.mxu0 %v3193
    %3210 = vmatprep.subr.mxu0 0.0
    %3211 = vmatpush1.msra.mxu0 %v3194
    %3212 = vmatprep.subr.mxu0 0.0
    %3213 = vmatpush1.msra.mxu0 %v3195
    %3214 = vmatprep.subr.mxu0 0.0
    %3215 = vmatpush1.msra.mxu0 %v3196
    %3216 = vmatprep.subr.mxu0 0.0
    %3217 = vmatpush1.msra.mxu0 0.0
    %3218 = vmatprep.subr.mxu0 0.0
    %3219 = vmatpush1.msra.mxu0 0.0
    %3220 = vmatprep.subr.mxu0 0.0
    %3221 = vmatpush1.msra.mxu0 0.0
    %3222 = vmatprep.subr.mxu0 0.0
    %3223 = vmatpush1.msra.mxu0 0.0
    %3224 = vmatprep.subr.mxu0 0.0
    %3225 = vmatpush1.msra.mxu0 0.0
    %3226 = vmatprep.subr.mxu0 0.0
    %3227 = vmatpush1.msra.mxu0 0.0
    %3228 = vmatprep.subr.mxu0 0.0
    %3229 = vmatpush1.msra.mxu0 0.0
    %3230 = vmatprep.subr.mxu0 0.0
    %3231 = vmatpush1.msra.mxu0 0.0
    %3232 = vmatprep.subr.mxu0 0.0
    %3233 = vmatpush1.msra.mxu0 0.0
    %3234 = vmatprep.subr.mxu0 0.0
    %3235 = vmatpush1.msra.mxu0 0.0
    %3236 = vmatprep.subr.mxu0 0.0
    %3237 = vmatpush1.msra.mxu0 0.0
    %3238 = vmatprep.subr.mxu0 0.0
    %3239 = vmatpush1.msra.mxu0 0.0
    %3240 = vmatprep.subr.mxu0 0.0
    %3241 = vmatpush1.msra.mxu0 0.0
    %3242 = vmatprep.subr.mxu0 0.0
    %3243 = vmatpush1.msra.mxu0 0.0
    %3244 = vmatprep.subr.mxu0 0.0
    %3245 = vmatpush1.msra.mxu0 0.0
    %3246 = vmatprep.subr.mxu0 0.0
    %3247 = vmatpush1.msra.mxu0 0.0
    %3248 = vmatprep.subr.mxu0 0.0
    %3249 = vmatpush1.msra.mxu0 0.0
    %3250 = vmatprep.subr.mxu0 0.0
    %3251 = vmatpush1.msra.mxu0 0.0
    %3252 = vmatprep.subr.mxu0 0.0
    %3253 = vmatpush1.msra.mxu0 0.0
    %3254 = vmatprep.subr.mxu0 0.0
    %3255 = vmatpush1.msra.mxu0 0.0
    %3256 = vmatprep.subr.mxu0 0.0
    %3257 = vmatpush1.msra.mxu0 0.0
    %3258 = vmatprep.subr.mxu0 0.0
    %3259 = vmatpush1.msra.mxu0 0.0
    %3260 = vmatprep.subr.mxu0 0.0
    %3261 = vmatpush1.msra.mxu0 0.0
    %3262 = vmatprep.subr.mxu0 0.0
    %3263 = vmatpush1.msra.mxu0 0.0
    %3264 = vmatprep.mubr.f32.mxu0 0.0
    %3265 = vmatmul.mubr.f32.gmra.mrb[0].mxu0 %v3198
    %v3266 = vpop.f32.mrb[0].mxu0
    %v3267 = vadd.f32 0.0, %v3266
    %v3268 = vpop.f32.mrb[0].mxu0
    %3269 = vdwg.mxu0
    %v3270 = vadd.f32 %v3183, %v3267
    %v3271 = vrot.slane %v1495, 2
    %v3273 = vrot.slane %v2397, 1
    %v3275 = vsel %vm305, %v3271, %v3273
    %s3276 = scalar_lea.vmem %s11, 640
    %v3277 = vld [vmem:[%s3276] sm:$0xff]
    %v3278 = vld [vmem:[%s3276 + $0x8] sm:$0xff]
    %v3279 = vld [vmem:[%s3276 + $0x10] sm:$0xff]
    %v3280 = vld [vmem:[%s3276 + $0x18] sm:$0xff]
    %v3281 = vld [vmem:[%s3276 + $0x20] sm:$0xff]
    %v3282 = vld [vmem:[%s3276 + $0x28] sm:$0xff]
    %v3283 = vld [vmem:[%s3276 + $0x30] sm:$0xff]
    %v3284 = vld [vmem:[%s3276 + $0x38] sm:$0xff]
    %v3286 = vsel %vm489, %v3275, 0
    %3288 = vmatprep.subr.mxu0 0.0
    %3289 = vmatpush1.msra.mxu0 %v3277
    %3290 = vmatprep.subr.mxu0 0.0
    %3291 = vmatpush1.msra.mxu0 %v3278
    %3292 = vmatprep.subr.mxu0 0.0
    %3293 = vmatpush1.msra.mxu0 %v3279
    %3294 = vmatprep.subr.mxu0 0.0
    %3295 = vmatpush1.msra.mxu0 %v3280
    %3296 = vmatprep.subr.mxu0 0.0
    %3297 = vmatpush1.msra.mxu0 %v3281
    %3298 = vmatprep.subr.mxu0 0.0
    %3299 = vmatpush1.msra.mxu0 %v3282
    %3300 = vmatprep.subr.mxu0 0.0
    %3301 = vmatpush1.msra.mxu0 %v3283
    %3302 = vmatprep.subr.mxu0 0.0
    %3303 = vmatpush1.msra.mxu0 %v3284
    %3304 = vmatprep.subr.mxu0 0.0
    %3305 = vmatpush1.msra.mxu0 0.0
    %3306 = vmatprep.subr.mxu0 0.0
    %3307 = vmatpush1.msra.mxu0 0.0
    %3308 = vmatprep.subr.mxu0 0.0
    %3309 = vmatpush1.msra.mxu0 0.0
    %3310 = vmatprep.subr.mxu0 0.0
    %3311 = vmatpush1.msra.mxu0 0.0
    %3312 = vmatprep.subr.mxu0 0.0
    %3313 = vmatpush1.msra.mxu0 0.0
    %3314 = vmatprep.subr.mxu0 0.0
    %3315 = vmatpush1.msra.mxu0 0.0
    %3316 = vmatprep.subr.mxu0 0.0
    %3317 = vmatpush1.msra.mxu0 0.0
    %3318 = vmatprep.subr.mxu0 0.0
    %3319 = vmatpush1.msra.mxu0 0.0
    %3320 = vmatprep.subr.mxu0 0.0
    %3321 = vmatpush1.msra.mxu0 0.0
    %3322 = vmatprep.subr.mxu0 0.0
    %3323 = vmatpush1.msra.mxu0 0.0
    %3324 = vmatprep.subr.mxu0 0.0
    %3325 = vmatpush1.msra.mxu0 0.0
    %3326 = vmatprep.subr.mxu0 0.0
    %3327 = vmatpush1.msra.mxu0 0.0
    %3328 = vmatprep.subr.mxu0 0.0
    %3329 = vmatpush1.msra.mxu0 0.0
    %3330 = vmatprep.subr.mxu0 0.0
    %3331 = vmatpush1.msra.mxu0 0.0
    %3332 = vmatprep.subr.mxu0 0.0
    %3333 = vmatpush1.msra.mxu0 0.0
    %3334 = vmatprep.subr.mxu0 0.0
    %3335 = vmatpush1.msra.mxu0 0.0
    %3336 = vmatprep.subr.mxu0 0.0
    %3337 = vmatpush1.msra.mxu0 0.0
    %3338 = vmatprep.subr.mxu0 0.0
    %3339 = vmatpush1.msra.mxu0 0.0
    %3340 = vmatprep.subr.mxu0 0.0
    %3341 = vmatpush1.msra.mxu0 0.0
    %3342 = vmatprep.subr.mxu0 0.0
    %3343 = vmatpush1.msra.mxu0 0.0
    %3344 = vmatprep.subr.mxu0 0.0
    %3345 = vmatpush1.msra.mxu0 0.0
    %3346 = vmatprep.subr.mxu0 0.0
    %3347 = vmatpush1.msra.mxu0 0.0
    %3348 = vmatprep.subr.mxu0 0.0
    %3349 = vmatpush1.msra.mxu0 0.0
    %3350 = vmatprep.subr.mxu0 0.0
    %3351 = vmatpush1.msra.mxu0 0.0
    %3352 = vmatprep.mubr.f32.mxu0 0.0
    %3353 = vmatmul.mubr.f32.gmra.mrb[0].mxu0 %v3286
    %v3354 = vpop.f32.mrb[0].mxu0
    %v3355 = vadd.f32 0.0, %v3354
    %v3356 = vpop.f32.mrb[0].mxu0
    %3357 = vdwg.mxu0
    %v3358 = vadd.f32 %v3270, %v3355
    %v3359 = vrot.slane %v1495, 3
    %v3361 = vrot.slane %v2397, 2
    %v3363 = vsel %vm305, %v3359, %v3361
    %s3364 = scalar_lea.vmem %s11, 704
    %v3365 = vld [vmem:[%s3364] sm:$0xff]
    %v3366 = vld [vmem:[%s3364 + $0x8] sm:$0xff]
    %v3367 = vld [vmem:[%s3364 + $0x10] sm:$0xff]
    %v3368 = vld [vmem:[%s3364 + $0x18] sm:$0xff]
    %v3369 = vld [vmem:[%s3364 + $0x20] sm:$0xff]
    %v3370 = vld [vmem:[%s3364 + $0x28] sm:$0xff]
    %v3371 = vld [vmem:[%s3364 + $0x30] sm:$0xff]
    %v3372 = vld [vmem:[%s3364 + $0x38] sm:$0xff]
    %v3374 = vsel %vm489, %v3363, 0
    %3376 = vmatprep.subr.mxu0 0.0
    %3377 = vmatpush1.msra.mxu0 %v3365
    %3378 = vmatprep.subr.mxu0 0.0
    %3379 = vmatpush1.msra.mxu0 %v3366
    %3380 = vmatprep.subr.mxu0 0.0
    %3381 = vmatpush1.msra.mxu0 %v3367
    %3382 = vmatprep.subr.mxu0 0.0
    %3383 = vmatpush1.msra.mxu0 %v3368
    %3384 = vmatprep.subr.mxu0 0.0
    %3385 = vmatpush1.msra.mxu0 %v3369
    %3386 = vmatprep.subr.mxu0 0.0
    %3387 = vmatpush1.msra.mxu0 %v3370
    %3388 = vmatprep.subr.mxu0 0.0
    %3389 = vmatpush1.msra.mxu0 %v3371
    %3390 = vmatprep.subr.mxu0 0.0
    %3391 = vmatpush1.msra.mxu0 %v3372
    %3392 = vmatprep.subr.mxu0 0.0
    %3393 = vmatpush1.msra.mxu0 0.0
    %3394 = vmatprep.subr.mxu0 0.0
    %3395 = vmatpush1.msra.mxu0 0.0
    %3396 = vmatprep.subr.mxu0 0.0
    %3397 = vmatpush1.msra.mxu0 0.0
    %3398 = vmatprep.subr.mxu0 0.0
    %3399 = vmatpush1.msra.mxu0 0.0
    %3400 = vmatprep.subr.mxu0 0.0
    %3401 = vmatpush1.msra.mxu0 0.0
    %3402 = vmatprep.subr.mxu0 0.0
    %3403 = vmatpush1.msra.mxu0 0.0
    %3404 = vmatprep.subr.mxu0 0.0
    %3405 = vmatpush1.msra.mxu0 0.0
    %3406 = vmatprep.subr.mxu0 0.0
    %3407 = vmatpush1.msra.mxu0 0.0
    %3408 = vmatprep.subr.mxu0 0.0
    %3409 = vmatpush1.msra.mxu0 0.0
    %3410 = vmatprep.subr.mxu0 0.0
    %3411 = vmatpush1.msra.mxu0 0.0
    %3412 = vmatprep.subr.mxu0 0.0
    %3413 = vmatpush1.msra.mxu0 0.0
    %3414 = vmatprep.subr.mxu0 0.0
    %3415 = vmatpush1.msra.mxu0 0.0
    %3416 = vmatprep.subr.mxu0 0.0
    %3417 = vmatpush1.msra.mxu0 0.0
    %3418 = vmatprep.subr.mxu0 0.0
    %3419 = vmatpush1.msra.mxu0 0.0
    %3420 = vmatprep.subr.mxu0 0.0
    %3421 = vmatpush1.msra.mxu0 0.0
    %3422 = vmatprep.subr.mxu0 0.0
    %3423 = vmatpush1.msra.mxu0 0.0
    %3424 = vmatprep.subr.mxu0 0.0
    %3425 = vmatpush1.msra.mxu0 0.0
    %3426 = vmatprep.subr.mxu0 0.0
    %3427 = vmatpush1.msra.mxu0 0.0
    %3428 = vmatprep.subr.mxu0 0.0
    %3429 = vmatpush1.msra.mxu0 0.0
    %3430 = vmatprep.subr.mxu0 0.0
    %3431 = vmatpush1.msra.mxu0 0.0
    %3432 = vmatprep.subr.mxu0 0.0
    %3433 = vmatpush1.msra.mxu0 0.0
    %3434 = vmatprep.subr.mxu0 0.0
    %3435 = vmatpush1.msra.mxu0 0.0
    %3436 = vmatprep.subr.mxu0 0.0
    %3437 = vmatpush1.msra.mxu0 0.0
    %3438 = vmatprep.subr.mxu0 0.0
    %3439 = vmatpush1.msra.mxu0 0.0
    %3440 = vmatprep.mubr.f32.mxu0 0.0
    %3441 = vmatmul.mubr.f32.gmra.mrb[0].mxu0 %v3374
    %v3442 = vpop.f32.mrb[0].mxu0
    %v3443 = vadd.f32 0.0, %v3442
    %v3444 = vpop.f32.mrb[0].mxu0
    %3445 = vdwg.mxu0
    %v3446 = vadd.f32 %v3358, %v3443
    %v3447 = vrot.slane %v1495, 4
    %v3449 = vrot.slane %v2397, 3
    %v3451 = vsel %vm305, %v3447, %v3449
    %s3452 = scalar_lea.vmem %s11, 768
    %v3453 = vld [vmem:[%s3452] sm:$0xff]
    %v3454 = vld [vmem:[%s3452 + $0x8] sm:$0xff]
    %v3455 = vld [vmem:[%s3452 + $0x10] sm:$0xff]
    %v3456 = vld [vmem:[%s3452 + $0x18] sm:$0xff]
    %v3457 = vld [vmem:[%s3452 + $0x20] sm:$0xff]
    %v3458 = vld [vmem:[%s3452 + $0x28] sm:$0xff]
    %v3459 = vld [vmem:[%s3452 + $0x30] sm:$0xff]
    %v3460 = vld [vmem:[%s3452 + $0x38] sm:$0xff]
    %v3462 = vsel %vm489, %v3451, 0
    %3464 = vmatprep.subr.mxu0 0.0
    %3465 = vmatpush1.msra.mxu0 %v3453
    %3466 = vmatprep.subr.mxu0 0.0
    %3467 = vmatpush1.msra.mxu0 %v3454
    %3468 = vmatprep.subr.mxu0 0.0
    %3469 = vmatpush1.msra.mxu0 %v3455
    %3470 = vmatprep.subr.mxu0 0.0
    %3471 = vmatpush1.msra.mxu0 %v3456
    %3472 = vmatprep.subr.mxu0 0.0
    %3473 = vmatpush1.msra.mxu0 %v3457
    %3474 = vmatprep.subr.mxu0 0.0
    %3475 = vmatpush1.msra.mxu0 %v3458
    %3476 = vmatprep.subr.mxu0 0.0
    %3477 = vmatpush1.msra.mxu0 %v3459
    %3478 = vmatprep.subr.mxu0 0.0
    %3479 = vmatpush1.msra.mxu0 %v3460
    %3480 = vmatprep.subr.mxu0 0.0
    %3481 = vmatpush1.msra.mxu0 0.0
    %3482 = vmatprep.subr.mxu0 0.0
    %3483 = vmatpush1.msra.mxu0 0.0
    %3484 = vmatprep.subr.mxu0 0.0
    %3485 = vmatpush1.msra.mxu0 0.0
    %3486 = vmatprep.subr.mxu0 0.0
    %3487 = vmatpush1.msra.mxu0 0.0
    %3488 = vmatprep.subr.mxu0 0.0
    %3489 = vmatpush1.msra.mxu0 0.0
    %3490 = vmatprep.subr.mxu0 0.0
    %3491 = vmatpush1.msra.mxu0 0.0
    %3492 = vmatprep.subr.mxu0 0.0
    %3493 = vmatpush1.msra.mxu0 0.0
    %3494 = vmatprep.subr.mxu0 0.0
    %3495 = vmatpush1.msra.mxu0 0.0
    %3496 = vmatprep.subr.mxu0 0.0
    %3497 = vmatpush1.msra.mxu0 0.0
    %3498 = vmatprep.subr.mxu0 0.0
    %3499 = vmatpush1.msra.mxu0 0.0
    %3500 = vmatprep.subr.mxu0 0.0
    %3501 = vmatpush1.msra.mxu0 0.0
    %3502 = vmatprep.subr.mxu0 0.0
    %3503 = vmatpush1.msra.mxu0 0.0
    %3504 = vmatprep.subr.mxu0 0.0
    %3505 = vmatpush1.msra.mxu0 0.0
    %3506 = vmatprep.subr.mxu0 0.0
    %3507 = vmatpush1.msra.mxu0 0.0
    %3508 = vmatprep.subr.mxu0 0.0
    %3509 = vmatpush1.msra.mxu0 0.0
    %3510 = vmatprep.subr.mxu0 0.0
    %3511 = vmatpush1.msra.mxu0 0.0
    %3512 = vmatprep.subr.mxu0 0.0
    %3513 = vmatpush1.msra.mxu0 0.0
    %3514 = vmatprep.subr.mxu0 0.0
    %3515 = vmatpush1.msra.mxu0 0.0
    %3516 = vmatprep.subr.mxu0 0.0
    %3517 = vmatpush1.msra.mxu0 0.0
    %3518 = vmatprep.subr.mxu0 0.0
    %3519 = vmatpush1.msra.mxu0 0.0
    %3520 = vmatprep.subr.mxu0 0.0
    %3521 = vmatpush1.msra.mxu0 0.0
    %3522 = vmatprep.subr.mxu0 0.0
    %3523 = vmatpush1.msra.mxu0 0.0
    %3524 = vmatprep.subr.mxu0 0.0
    %3525 = vmatpush1.msra.mxu0 0.0
    %3526 = vmatprep.subr.mxu0 0.0
    %3527 = vmatpush1.msra.mxu0 0.0
    %3528 = vmatprep.mubr.f32.mxu0 0.0
    %3529 = vmatmul.mubr.f32.gmra.mrb[0].mxu0 %v3462
    %v3530 = vpop.f32.mrb[0].mxu0
    %v3531 = vadd.f32 0.0, %v3530
    %v3532 = vpop.f32.mrb[0].mxu0
    %3533 = vdwg.mxu0
    %v3534 = vadd.f32 %v3446, %v3531
    %v3535 = vrot.slane %v1495, 5
    %v3537 = vrot.slane %v2397, 4
    %v3539 = vsel %vm305, %v3535, %v3537
    %s3540 = scalar_lea.vmem %s11, 832
    %v3541 = vld [vmem:[%s3540] sm:$0xff]
    %v3542 = vld [vmem:[%s3540 + $0x8] sm:$0xff]
    %v3543 = vld [vmem:[%s3540 + $0x10] sm:$0xff]
    %v3544 = vld [vmem:[%s3540 + $0x18] sm:$0xff]
    %v3545 = vld [vmem:[%s3540 + $0x20] sm:$0xff]
    %v3546 = vld [vmem:[%s3540 + $0x28] sm:$0xff]
    %v3547 = vld [vmem:[%s3540 + $0x30] sm:$0xff]
    %v3548 = vld [vmem:[%s3540 + $0x38] sm:$0xff]
    %v3550 = vsel %vm489, %v3539, 0
    %3552 = vmatprep.subr.mxu0 0.0
    %3553 = vmatpush1.msra.mxu0 %v3541
    %3554 = vmatprep.subr.mxu0 0.0
    %3555 = vmatpush1.msra.mxu0 %v3542
    %3556 = vmatprep.subr.mxu0 0.0
    %3557 = vmatpush1.msra.mxu0 %v3543
    %3558 = vmatprep.subr.mxu0 0.0
    %3559 = vmatpush1.msra.mxu0 %v3544
    %3560 = vmatprep.subr.mxu0 0.0
    %3561 = vmatpush1.msra.mxu0 %v3545
    %3562 = vmatprep.subr.mxu0 0.0
    %3563 = vmatpush1.msra.mxu0 %v3546
    %3564 = vmatprep.subr.mxu0 0.0
    %3565 = vmatpush1.msra.mxu0 %v3547
    %3566 = vmatprep.subr.mxu0 0.0
    %3567 = vmatpush1.msra.mxu0 %v3548
    %3568 = vmatprep.subr.mxu0 0.0
    %3569 = vmatpush1.msra.mxu0 0.0
    %3570 = vmatprep.subr.mxu0 0.0
    %3571 = vmatpush1.msra.mxu0 0.0
    %3572 = vmatprep.subr.mxu0 0.0
    %3573 = vmatpush1.msra.mxu0 0.0
    %3574 = vmatprep.subr.mxu0 0.0
    %3575 = vmatpush1.msra.mxu0 0.0
    %3576 = vmatprep.subr.mxu0 0.0
    %3577 = vmatpush1.msra.mxu0 0.0
    %3578 = vmatprep.subr.mxu0 0.0
    %3579 = vmatpush1.msra.mxu0 0.0
    %3580 = vmatprep.subr.mxu0 0.0
    %3581 = vmatpush1.msra.mxu0 0.0
    %3582 = vmatprep.subr.mxu0 0.0
    %3583 = vmatpush1.msra.mxu0 0.0
    %3584 = vmatprep.subr.mxu0 0.0
    %3585 = vmatpush1.msra.mxu0 0.0
    %3586 = vmatprep.subr.mxu0 0.0
    %3587 = vmatpush1.msra.mxu0 0.0
    %3588 = vmatprep.subr.mxu0 0.0
    %3589 = vmatpush1.msra.mxu0 0.0
    %3590 = vmatprep.subr.mxu0 0.0
    %3591 = vmatpush1.msra.mxu0 0.0
    %3592 = vmatprep.subr.mxu0 0.0
    %3593 = vmatpush1.msra.mxu0 0.0
    %3594 = vmatprep.subr.mxu0 0.0
    %3595 = vmatpush1.msra.mxu0 0.0
    %3596 = vmatprep.subr.mxu0 0.0
    %3597 = vmatpush1.msra.mxu0 0.0
    %3598 = vmatprep.subr.mxu0 0.0
    %3599 = vmatpush1.msra.mxu0 0.0
    %3600 = vmatprep.subr.mxu0 0.0
    %3601 = vmatpush1.msra.mxu0 0.0
    %3602 = vmatprep.subr.mxu0 0.0
    %3603 = vmatpush1.msra.mxu0 0.0
    %3604 = vmatprep.subr.mxu0 0.0
    %3605 = vmatpush1.msra.mxu0 0.0
    %3606 = vmatprep.subr.mxu0 0.0
    %3607 = vmatpush1.msra.mxu0 0.0
    %3608 = vmatprep.subr.mxu0 0.0
    %3609 = vmatpush1.msra.mxu0 0.0
    %3610 = vmatprep.subr.mxu0 0.0
    %3611 = vmatpush1.msra.mxu0 0.0
    %3612 = vmatprep.subr.mxu0 0.0
    %3613 = vmatpush1.msra.mxu0 0.0
    %3614 = vmatprep.subr.mxu0 0.0
    %3615 = vmatpush1.msra.mxu0 0.0
    %3616 = vmatprep.mubr.f32.mxu0 0.0
    %3617 = vmatmul.mubr.f32.gmra.mrb[0].mxu0 %v3550
    %v3618 = vpop.f32.mrb[0].mxu0
    %v3619 = vadd.f32 0.0, %v3618
    %v3620 = vpop.f32.mrb[0].mxu0
    %3621 = vdwg.mxu0
    %v3622 = vadd.f32 %v3534, %v3619
    %v3623 = vrot.slane %v1495, 6
    %v3625 = vrot.slane %v2397, 5
    %v3627 = vsel %vm305, %v3623, %v3625
    %s3628 = scalar_lea.vmem %s11, 896
    %v3629 = vld [vmem:[%s3628] sm:$0xff]
    %v3630 = vld [vmem:[%s3628 + $0x8] sm:$0xff]
    %v3631 = vld [vmem:[%s3628 + $0x10] sm:$0xff]
    %v3632 = vld [vmem:[%s3628 + $0x18] sm:$0xff]
    %v3633 = vld [vmem:[%s3628 + $0x20] sm:$0xff]
    %v3634 = vld [vmem:[%s3628 + $0x28] sm:$0xff]
    %v3635 = vld [vmem:[%s3628 + $0x30] sm:$0xff]
    %v3636 = vld [vmem:[%s3628 + $0x38] sm:$0xff]
    %v3638 = vsel %vm489, %v3627, 0
    %3640 = vmatprep.subr.mxu0 0.0
    %3641 = vmatpush1.msra.mxu0 %v3629
    %3642 = vmatprep.subr.mxu0 0.0
    %3643 = vmatpush1.msra.mxu0 %v3630
    %3644 = vmatprep.subr.mxu0 0.0
    %3645 = vmatpush1.msra.mxu0 %v3631
    %3646 = vmatprep.subr.mxu0 0.0
    %3647 = vmatpush1.msra.mxu0 %v3632
    %3648 = vmatprep.subr.mxu0 0.0
    %3649 = vmatpush1.msra.mxu0 %v3633
    %3650 = vmatprep.subr.mxu0 0.0
    %3651 = vmatpush1.msra.mxu0 %v3634
    %3652 = vmatprep.subr.mxu0 0.0
    %3653 = vmatpush1.msra.mxu0 %v3635
    %3654 = vmatprep.subr.mxu0 0.0
    %3655 = vmatpush1.msra.mxu0 %v3636
    %3656 = vmatprep.subr.mxu0 0.0
    %3657 = vmatpush1.msra.mxu0 0.0
    %3658 = vmatprep.subr.mxu0 0.0
    %3659 = vmatpush1.msra.mxu0 0.0
    %3660 = vmatprep.subr.mxu0 0.0
    %3661 = vmatpush1.msra.mxu0 0.0
    %3662 = vmatprep.subr.mxu0 0.0
    %3663 = vmatpush1.msra.mxu0 0.0
    %3664 = vmatprep.subr.mxu0 0.0
    %3665 = vmatpush1.msra.mxu0 0.0
    %3666 = vmatprep.subr.mxu0 0.0
    %3667 = vmatpush1.msra.mxu0 0.0
    %3668 = vmatprep.subr.mxu0 0.0
    %3669 = vmatpush1.msra.mxu0 0.0
    %3670 = vmatprep.subr.mxu0 0.0
    %3671 = vmatpush1.msra.mxu0 0.0
    %3672 = vmatprep.subr.mxu0 0.0
    %3673 = vmatpush1.msra.mxu0 0.0
    %3674 = vmatprep.subr.mxu0 0.0
    %3675 = vmatpush1.msra.mxu0 0.0
    %3676 = vmatprep.subr.mxu0 0.0
    %3677 = vmatpush1.msra.mxu0 0.0
    %3678 = vmatprep.subr.mxu0 0.0
    %3679 = vmatpush1.msra.mxu0 0.0
    %3680 = vmatprep.subr.mxu0 0.0
    %3681 = vmatpush1.msra.mxu0 0.0
    %3682 = vmatprep.subr.mxu0 0.0
    %3683 = vmatpush1.msra.mxu0 0.0
    %3684 = vmatprep.subr.mxu0 0.0
    %3685 = vmatpush1.msra.mxu0 0.0
    %3686 = vmatprep.subr.mxu0 0.0
    %3687 = vmatpush1.msra.mxu0 0.0
    %3688 = vmatprep.subr.mxu0 0.0
    %3689 = vmatpush1.msra.mxu0 0.0
    %3690 = vmatprep.subr.mxu0 0.0
    %3691 = vmatpush1.msra.mxu0 0.0
    %3692 = vmatprep.subr.mxu0 0.0
    %3693 = vmatpush1.msra.mxu0 0.0
    %3694 = vmatprep.subr.mxu0 0.0
    %3695 = vmatpush1.msra.mxu0 0.0
    %3696 = vmatprep.subr.mxu0 0.0
    %3697 = vmatpush1.msra.mxu0 0.0
    %3698 = vmatprep.subr.mxu0 0.0
    %3699 = vmatpush1.msra.mxu0 0.0
    %3700 = vmatprep.subr.mxu0 0.0
    %3701 = vmatpush1.msra.mxu0 0.0
    %3702 = vmatprep.subr.mxu0 0.0
    %3703 = vmatpush1.msra.mxu0 0.0
    %3704 = vmatprep.mubr.f32.mxu0 0.0
    %3705 = vmatmul.mubr.f32.gmra.mrb[0].mxu0 %v3638
    %v3706 = vpop.f32.mrb[0].mxu0
    %v3707 = vadd.f32 0.0, %v3706
    %v3708 = vpop.f32.mrb[0].mxu0
    %3709 = vdwg.mxu0
    %v3710 = vadd.f32 %v3622, %v3707
    %v3711 = vrot.slane %v1495, 7
    %v3713 = vrot.slane %v2397, 6
    %v3715 = vsel %vm305, %v3711, %v3713
    %s3716 = scalar_lea.vmem %s11, 960
    %v3717 = vld [vmem:[%s3716] sm:$0xff]
    %v3718 = vld [vmem:[%s3716 + $0x8] sm:$0xff]
    %v3719 = vld [vmem:[%s3716 + $0x10] sm:$0xff]
    %v3720 = vld [vmem:[%s3716 + $0x18] sm:$0xff]
    %v3721 = vld [vmem:[%s3716 + $0x20] sm:$0xff]
    %v3722 = vld [vmem:[%s3716 + $0x28] sm:$0xff]
    %v3723 = vld [vmem:[%s3716 + $0x30] sm:$0xff]
    %v3724 = vld [vmem:[%s3716 + $0x38] sm:$0xff]
    %v3726 = vsel %vm489, %v3715, 0
    %3728 = vmatprep.subr.mxu0 0.0
    %3729 = vmatpush1.msra.mxu0 %v3717
    %3730 = vmatprep.subr.mxu0 0.0
    %3731 = vmatpush1.msra.mxu0 %v3718
    %3732 = vmatprep.subr.mxu0 0.0
    %3733 = vmatpush1.msra.mxu0 %v3719
    %3734 = vmatprep.subr.mxu0 0.0
    %3735 = vmatpush1.msra.mxu0 %v3720
    %3736 = vmatprep.subr.mxu0 0.0
    %3737 = vmatpush1.msra.mxu0 %v3721
    %3738 = vmatprep.subr.mxu0 0.0
    %3739 = vmatpush1.msra.mxu0 %v3722
    %3740 = vmatprep.subr.mxu0 0.0
    %3741 = vmatpush1.msra.mxu0 %v3723
    %3742 = vmatprep.subr.mxu0 0.0
    %3743 = vmatpush1.msra.mxu0 %v3724
    %3744 = vmatprep.subr.mxu0 0.0
    %3745 = vmatpush1.msra.mxu0 0.0
    %3746 = vmatprep.subr.mxu0 0.0
    %3747 = vmatpush1.msra.mxu0 0.0
    %3748 = vmatprep.subr.mxu0 0.0
    %3749 = vmatpush1.msra.mxu0 0.0
    %3750 = vmatprep.subr.mxu0 0.0
    %3751 = vmatpush1.msra.mxu0 0.0
    %3752 = vmatprep.subr.mxu0 0.0
    %3753 = vmatpush1.msra.mxu0 0.0
    %3754 = vmatprep.subr.mxu0 0.0
    %3755 = vmatpush1.msra.mxu0 0.0
    %3756 = vmatprep.subr.mxu0 0.0
    %3757 = vmatpush1.msra.mxu0 0.0
    %3758 = vmatprep.subr.mxu0 0.0
    %3759 = vmatpush1.msra.mxu0 0.0
    %3760 = vmatprep.subr.mxu0 0.0
    %3761 = vmatpush1.msra.mxu0 0.0
    %3762 = vmatprep.subr.mxu0 0.0
    %3763 = vmatpush1.msra.mxu0 0.0
    %3764 = vmatprep.subr.mxu0 0.0
    %3765 = vmatpush1.msra.mxu0 0.0
    %3766 = vmatprep.subr.mxu0 0.0
    %3767 = vmatpush1.msra.mxu0 0.0
    %3768 = vmatprep.subr.mxu0 0.0
    %3769 = vmatpush1.msra.mxu0 0.0
    %3770 = vmatprep.subr.mxu0 0.0
    %3771 = vmatpush1.msra.mxu0 0.0
    %3772 = vmatprep.subr.mxu0 0.0
    %3773 = vmatpush1.msra.mxu0 0.0
    %3774 = vmatprep.subr.mxu0 0.0
    %3775 = vmatpush1.msra.mxu0 0.0
    %3776 = vmatprep.subr.mxu0 0.0
    %3777 = vmatpush1.msra.mxu0 0.0
    %3778 = vmatprep.subr.mxu0 0.0
    %3779 = vmatpush1.msra.mxu0 0.0
    %3780 = vmatprep.subr.mxu0 0.0
    %3781 = vmatpush1.msra.mxu0 0.0
    %3782 = vmatprep.subr.mxu0 0.0
    %3783 = vmatpush1.msra.mxu0 0.0
    %3784 = vmatprep.subr.mxu0 0.0
    %3785 = vmatpush1.msra.mxu0 0.0
    %3786 = vmatprep.subr.mxu0 0.0
    %3787 = vmatpush1.msra.mxu0 0.0
    %3788 = vmatprep.subr.mxu0 0.0
    %3789 = vmatpush1.msra.mxu0 0.0
    %3790 = vmatprep.subr.mxu0 0.0
    %3791 = vmatpush1.msra.mxu0 0.0
    %3792 = vmatprep.mubr.f32.mxu0 0.0
    %3793 = vmatmul.mubr.f32.gmra.mrb[0].mxu0 %v3726
    %v3794 = vpop.f32.mrb[0].mxu0
    %v3795 = vadd.f32 0.0, %v3794
    %v3796 = vpop.f32.mrb[0].mxu0
    %3797 = vdwg.mxu0
    %v3798 = vadd.f32 %v3710, %v3795
    %v3799 = vld [vmem:[%s12] sm:$0x1]
    %v3801 = vlaneseq
    %v3802 = vshrl.u32 %v3801, 7
    %v3803 = vsub.s32 0, %v3802
    %v3804 = vrot.slane %v3799, %v3803
    %v3806 = vadd.f32 %v3798, %v3804
    %v3807 = vmax.f32 %v3806, 0.0
    %v3808 = vld [vmem:[%s13] sm:$0xff]
    %v3809 = vld [vmem:[%s13 + $0x8] sm:$0xff]
    %v3810 = vld [vmem:[%s13 + $0x10] sm:$0xff]
    %v3811 = vld [vmem:[%s13 + $0x18] sm:$0xff]
    %v3812 = vld [vmem:[%s14] sm:$0xff]
    %v3813 = vld [vmem:[%s14 + $0x8] sm:$0xff]
    %v3814 = vld [vmem:[%s14 + $0x10] sm:$0xff]
    %v3815 = vld [vmem:[%s14 + $0x18] sm:$0xff]
    %v3817 = vsel %vm157, %v3807, 0
    %3819 = vmatprep.subr.mxu0 0.0
    %3820 = vmatpush1.msra.mxu0 %v3812
    %3821 = vmatprep.subr.mxu0 0.0
    %3822 = vmatpush1.msra.mxu0 %v3813
    %3823 = vmatprep.subr.mxu0 0.0
    %3824 = vmatpush1.msra.mxu0 %v3814
    %3825 = vmatprep.subr.mxu0 0.0
    %3826 = vmatpush1.msra.mxu0 %v3815
    %3827 = vmatprep.subr.mxu0 0.0
    %3828 = vmatpush1.msra.mxu0 0.0
    %3829 = vmatprep.subr.mxu0 0.0
    %3830 = vmatpush1.msra.mxu0 0.0
    %3831 = vmatprep.subr.mxu0 0.0
    %3832 = vmatpush1.msra.mxu0 0.0
    %3833 = vmatprep.subr.mxu0 0.0
    %3834 = vmatpush1.msra.mxu0 0.0
    %3835 = vmatprep.subr.mxu0 0.0
    %3836 = vmatpush1.msra.mxu0 0.0
    %3837 = vmatprep.subr.mxu0 0.0
    %3838 = vmatpush1.msra.mxu0 0.0
    %3839 = vmatprep.subr.mxu0 0.0
    %3840 = vmatpush1.msra.mxu0 0.0
    %3841 = vmatprep.subr.mxu0 0.0
    %3842 = vmatpush1.msra.mxu0 0.0
    %3843 = vmatprep.subr.mxu0 0.0
    %3844 = vmatpush1.msra.mxu0 0.0
    %3845 = vmatprep.subr.mxu0 0.0
    %3846 = vmatpush1.msra.mxu0 0.0
    %3847 = vmatprep.subr.mxu0 0.0
    %3848 = vmatpush1.msra.mxu0 0.0
    %3849 = vmatprep.subr.mxu0 0.0
    %3850 = vmatpush1.msra.mxu0 0.0
    %3851 = vmatprep.subr.mxu0 0.0
    %3852 = vmatpush1.msra.mxu0 0.0
    %3853 = vmatprep.subr.mxu0 0.0
    %3854 = vmatpush1.msra.mxu0 0.0
    %3855 = vmatprep.subr.mxu0 0.0
    %3856 = vmatpush1.msra.mxu0 0.0
    %3857 = vmatprep.subr.mxu0 0.0
    %3858 = vmatpush1.msra.mxu0 0.0
    %3859 = vmatprep.subr.mxu0 0.0
    %3860 = vmatpush1.msra.mxu0 0.0
    %3861 = vmatprep.subr.mxu0 0.0
    %3862 = vmatpush1.msra.mxu0 0.0
    %3863 = vmatprep.subr.mxu0 0.0
    %3864 = vmatpush1.msra.mxu0 0.0
    %3865 = vmatprep.subr.mxu0 0.0
    %3866 = vmatpush1.msra.mxu0 0.0
    %3867 = vmatprep.subr.mxu0 0.0
    %3868 = vmatpush1.msra.mxu0 0.0
    %3869 = vmatprep.subr.mxu0 0.0
    %3870 = vmatpush1.msra.mxu0 0.0
    %3871 = vmatprep.subr.mxu0 0.0
    %3872 = vmatpush1.msra.mxu0 0.0
    %3873 = vmatprep.subr.mxu0 0.0
    %3874 = vmatpush1.msra.mxu0 0.0
    %3875 = vmatprep.subr.mxu0 0.0
    %3876 = vmatpush1.msra.mxu0 0.0
    %3877 = vmatprep.subr.mxu0 0.0
    %3878 = vmatpush1.msra.mxu0 0.0
    %3879 = vmatprep.subr.mxu0 0.0
    %3880 = vmatpush1.msra.mxu0 0.0
    %3881 = vmatprep.subr.mxu0 0.0
    %3882 = vmatpush1.msra.mxu0 0.0
    %3883 = vmatprep.mubr.f32.mxu0 0.0
    %3884 = vmatmul.mubr.f32.gmra.mrb[0].mxu0 %v3817
    %v3885 = vpop.f32.mrb[0].mxu0
    %v3886 = vadd.f32 0.0, %v3885
    %v3887 = vpop.f32.mrb[0].mxu0
    %3888 = vdwg.mxu0
    %v3890 = vsel %vm157, %v228, 0
    %3892 = vmatprep.subr.mxu0 0.0
    %3893 = vmatpush1.msra.mxu0 %v3808
    %3894 = vmatprep.subr.mxu0 0.0
    %3895 = vmatpush1.msra.mxu0 %v3809
    %3896 = vmatprep.subr.mxu0 0.0
    %3897 = vmatpush1.msra.mxu0 %v3810
    %3898 = vmatprep.subr.mxu0 0.0
    %3899 = vmatpush1.msra.mxu0 %v3811
    %3900 = vmatprep.subr.mxu0 0.0
    %3901 = vmatpush1.msra.mxu0 0.0
    %3902 = vmatprep.subr.mxu0 0.0
    %3903 = vmatpush1.msra.mxu0 0.0
    %3904 = vmatprep.subr.mxu0 0.0
    %3905 = vmatpush1.msra.mxu0 0.0
    %3906 = vmatprep.subr.mxu0 0.0
    %3907 = vmatpush1.msra.mxu0 0.0
    %3908 = vmatprep.subr.mxu0 0.0
    %3909 = vmatpush1.msra.mxu0 0.0
    %3910 = vmatprep.subr.mxu0 0.0
    %3911 = vmatpush1.msra.mxu0 0.0
    %3912 = vmatprep.subr.mxu0 0.0
    %3913 = vmatpush1.msra.mxu0 0.0
    %3914 = vmatprep.subr.mxu0 0.0
    %3915 = vmatpush1.msra.mxu0 0.0
    %3916 = vmatprep.subr.mxu0 0.0
    %3917 = vmatpush1.msra.mxu0 0.0
    %3918 = vmatprep.subr.mxu0 0.0
    %3919 = vmatpush1.msra.mxu0 0.0
    %3920 = vmatprep.subr.mxu0 0.0
    %3921 = vmatpush1.msra.mxu0 0.0
    %3922 = vmatprep.subr.mxu0 0.0
    %3923 = vmatpush1.msra.mxu0 0.0
    %3924 = vmatprep.subr.mxu0 0.0
    %3925 = vmatpush1.msra.mxu0 0.0
    %3926 = vmatprep.subr.mxu0 0.0
    %3927 = vmatpush1.msra.mxu0 0.0
    %3928 = vmatprep.subr.mxu0 0.0
    %3929 = vmatpush1.msra.mxu0 0.0
    %3930 = vmatprep.subr.mxu0 0.0
    %3931 = vmatpush1.msra.mxu0 0.0
    %3932 = vmatprep.subr.mxu0 0.0
    %3933 = vmatpush1.msra.mxu0 0.0
    %3934 = vmatprep.subr.mxu0 0.0
    %3935 = vmatpush1.msra.mxu0 0.0
    %3936 = vmatprep.subr.mxu0 0.0
    %3937 = vmatpush1.msra.mxu0 0.0
    %3938 = vmatprep.subr.mxu0 0.0
    %3939 = vmatpush1.msra.mxu0 0.0
    %3940 = vmatprep.subr.mxu0 0.0
    %3941 = vmatpush1.msra.mxu0 0.0
    %3942 = vmatprep.subr.mxu0 0.0
    %3943 = vmatpush1.msra.mxu0 0.0
    %3944 = vmatprep.subr.mxu0 0.0
    %3945 = vmatpush1.msra.mxu0 0.0
    %3946 = vmatprep.subr.mxu0 0.0
    %3947 = vmatpush1.msra.mxu0 0.0
    %3948 = vmatprep.subr.mxu0 0.0
    %3949 = vmatpush1.msra.mxu0 0.0
    %3950 = vmatprep.subr.mxu0 0.0
    %3951 = vmatpush1.msra.mxu0 0.0
    %3952 = vmatprep.subr.mxu0 0.0
    %3953 = vmatpush1.msra.mxu0 0.0
    %3954 = vmatprep.subr.mxu0 0.0
    %3955 = vmatpush1.msra.mxu0 0.0
    %3956 = vmatprep.mubr.f32.mxu0 0.0
    %3957 = vmatmul.mubr.f32.gmra.mrb[0].mxu0 %v3890
    %v3958 = vpop.f32.mrb[0].mxu0
    %v3959 = vadd.f32 %v3886, %v3958
    %v3960 = vpop.f32.mrb[0].mxu0
    %3961 = vdwg.mxu0
    %v3962 = vld [vmem:[%s15] sm:$0x1]
    %v3964 = vlaneseq
    %v3965 = vshrl.u32 %v3964, 7
    %v3966 = vsub.s32 0, %v3965
    %v3967 = vrot.slane %v3962, %v3966
    %v3969 = vadd.f32 %v3959, %v3967
    %v3970 = vmax.f32 %v3969, 0.0
    %vm3971 = vcmask 254976
    %3972 = vst.msk [vmem:[#allocation2] sm:$0x3] %vm3971, %v3970
    // Predicated region
    $region66: #{multimodal_forward.1} parent=1 // pred_check
      _
    $region67: #{multimodal_forward.1} parent=1 // pred_check_branch
      %3974 = sbr.rel (0) target = $region69
    $region68: #{multimodal_forward.1} parent=1 // pred_region
      %s3976 = ssub.s32 32, 32
      %3977 = vsyncadd [#allocation3], %s3976
      %s3979 = sshll.u32 [#allocation2], 4
      %s3980 = int_to_ptr.vmem [resolvable:$true] %s3979
      %3982 = dma.vmem_to_hbm [thread:$0]  %s3980, 32, %s16, [#allocation3]
    $region69: #{multimodal_forward.1} parent=1 // pred_fallthru
      _
    // Predicated region
    $region70: #{multimodal_forward.1} parent=1 // pred_check
      _
    $region71: #{multimodal_forward.1} parent=1 // pred_check_branch
      %3984 = sbr.rel (0) target = $region73
    $region72: #{multimodal_forward.1} parent=1 // pred_region
      %3985 = dma.done [#allocation3], 32
    $region73: #{multimodal_forward.1} parent=1 // pred_fallthru
      _
    %3986 = vsyncpa [#allocation3], 1

</llo_original>
